<compile_context>
chip_gen: v7x
topology: tpu7x:2x2x1
jax: 0.10.0
libtpu: 0.0.40
codegen_flags: <defaults>
</compile_context>

<pallas_src>
import jax
import jax.numpy as jnp
from jax.experimental import pallas as pl
from jax.experimental.pallas import tpu as pltpu

# Small, module-consistent sizes.
B = 8          # batch
LATENT = 32    # latent_size
HID = 1024     # fc1 output / deconv1 input channels
C1, C2, C3 = 128, 64, 32
IMG_C = 4      # img_channels
L_OUT = 4      # final spatial length (1 -> 2 -> 3 -> 4)
PAD_L2 = 4     # deconv2 output padded from 3 -> 4 position blocks (192 -> 256 lanes)


def decoder_kernel(x_ref, wfc_ref, bfc_ref, w1_ref, b1_ref, w2_ref, b2_ref,
                   w3_ref, b3_ref, w4_ref, b4_ref, out_ref):
    f32 = jnp.float32
    bf16 = jnp.bfloat16

    def layer(act_bf16, w_ref, b_ref, relu=True):
        v = jnp.dot(act_bf16, w_ref[...], preferred_element_type=f32) + b_ref[...]
        return jnp.maximum(v, 0.0) if relu else v

    h = layer(x_ref[...], wfc_ref, bfc_ref).astype(bf16)      # (TB, 1024) fc1 + relu
    a = layer(h, w1_ref, b1_ref).astype(bf16)                 # (TB, 256)  deconv1
    y = layer(a, w2_ref, b2_ref).astype(bf16)                 # (TB, 256)  deconv2 (last 64 lanes zero)
    z = layer(y, w3_ref, b3_ref).astype(bf16)                 # (TB, 128)  deconv3
    out_ref[...] = layer(z, w4_ref, b4_ref, relu=False)       # (TB, 16)   deconv4, channel-major


def decoder_forward(x, kernel_params, *, block_b=None):
    (wfc, bfc, w1, b1, w2, b2, w3, b3, w4, b4) = kernel_params
    Bn, latent = x.shape

    if block_b is None:
        if Bn >= 16 and Bn % 16 == 0:
            # Two grid steps so dimension_semantics=("parallel",) can shard the
            # batch across v7x's two TensorCores; tile stays a multiple of 8.
            block_b = Bn // 2
        else:
            # Single resident tile: no per-step pipeline overhead, full MXU row fill.
            block_b = Bn
    assert Bn % block_b == 0, "batch must be a multiple of the batch tile"
    grid = (Bn // block_b,)

    n_lanes = w4.shape[1]          # IMG_C * L_OUT = 16
    img_c = n_lanes // L_OUT

    # Halve input DMA / vreg pressure; weights are already bf16.
    x_bf16 = x.astype(jnp.bfloat16)

    flops = 2 * Bn * sum(w.shape[0] * w.shape[1] for w in (wfc, w1, w2, w3, w4))
    bytes_accessed = (x_bf16.size * x_bf16.dtype.itemsize
                      + sum(p.size * p.dtype.itemsize for p in kernel_params)
                      + Bn * n_lanes * 4)

    def run(single_buffer_weights):
        if single_buffer_weights:
            # Constant block index -> double-buffering is pure waste; keep one buffer.
            def const(shape):
                return pl.BlockSpec(shape, lambda i: (0, 0),
                                    pipeline_mode=pl.Buffered(1))
        else:
            def const(shape):
                return pl.BlockSpec(shape, lambda i: (0, 0))

        return pl.pallas_call(
            decoder_kernel,
            out_shape=jax.ShapeDtypeStruct((Bn, n_lanes), jnp.float32),
            grid=grid,
            in_specs=[pl.BlockSpec((block_b, latent), lambda i: (i, 0))]
                     + [const(p.shape) for p in kernel_params],
            out_specs=pl.BlockSpec((block_b, n_lanes), lambda i: (i, 0)),
            compiler_params=pltpu.CompilerParams(
                dimension_semantics=("parallel",)),
            cost_estimate=pl.CostEstimate(flops=flops, transcendentals=0,
                                          bytes_accessed=bytes_accessed),
        )(x_bf16, *kernel_params)

    try:
        out = run(True)
    except Exception:
        # Fallback if this jax version rejects Buffered(1) on constant blocks.
        out = run(False)

    # Output lanes are already channel-major ([c*L_OUT + l]) -> plain reshape,
    # no transpose needed to match PyTorch's (B, C_img, L) ConvTranspose1d layout.
    return out.reshape(Bn, img_c, L_OUT)


def _block_deconv_weight(w_t, l_in):
    """(Cin, Cout, K) torch ConvTranspose1d weight -> block-banded matmul weight.

    Returns the (l_in*Cin, l_out*Cout) f32 matrix so that a lane-layout
    (B, l_in*Cin) activation times this matrix gives the (B, l_out*Cout)
    stride-1, pad-0 transposed-conv output (before bias)."""
    cin, cout, k = w_t.shape
    l_out = l_in + k - 1
    wb = jnp.zeros((l_in * cin, l_out * cout), jnp.float32)
    for t in range(l_in):
        for kk in range(k):
            j = t + kk
            wb = wb.at[t * cin:(t + 1) * cin, j * cout:(j + 1) * cout].set(
                w_t[:, :, kk])
    return wb


def init_params(key):
    """Deterministic init. Returns (torch-shaped params, kernel-shaped params)."""
    ks = jax.random.split(key, 10)

    def u(k, shape, fan_in):
        bound = 1.0 / float(fan_in) ** 0.5
        return jax.random.uniform(k, shape, jnp.float32, -bound, bound)

    # PyTorch-shaped parameters.
    wfc_t = u(ks[0], (HID, LATENT), LATENT)        # Linear weight (out, in)
    bfc = u(ks[1], (HID,), LATENT)
    w1_t = u(ks[2], (HID, C1, 2), HID * 2)         # ConvTranspose1d (in, out, K)
    b1 = u(ks[3], (C1,), HID * 2)
    w2_t = u(ks[4], (C1, C2, 2), C1 * 2)
    b2 = u(ks[5], (C2,), C1 * 2)
    w3_t = u(ks[6], (C2, C3, 2), C2 * 2)
    b3 = u(ks[7], (C3,), C2 * 2)
    w4_t = u(ks[8], (C3, IMG_C, 1), C3)
    b4 = u(ks[9], (IMG_C,), C3)

    # Round matmul weights to bf16 once; reference and kernel share these values
    # (the kernel additionally runs bf16 activations with f32 accumulation).
    rnd = lambda w: w.astype(jnp.bfloat16).astype(jnp.float32)
    wfc_t, w1_t, w2_t, w3_t, w4_t = map(rnd, (wfc_t, w1_t, w2_t, w3_t, w4_t))

    torch_params = (wfc_t, bfc, w1_t, b1, w2_t, b2, w3_t, b3, w4_t, b4)

    bf16 = jnp.bfloat16

    # deconv2: pad the 192-lane output to 256 lanes (zero weight cols, zero bias)
    # so every activation lane width is a multiple of 128.
    w2_blk = _block_deconv_weight(w2_t, 2)                       # (256, 192)
    w2_k = jnp.pad(w2_blk, ((0, 0), (0, PAD_L2 * C2 - w2_blk.shape[1])))   # (256, 256)
    b2_k = jnp.pad(jnp.tile(b2, 3), (0, PAD_L2 * C2 - 3 * C2))   # (256,)

    # deconv3: its kernel-side input is the 256-lane padded y -> pad rows with zeros.
    w3_blk = _block_deconv_weight(w3_t, 3)                       # (192, 128)
    w3_k = jnp.pad(w3_blk, ((0, PAD_L2 * C2 - w3_blk.shape[0]), (0, 0)))   # (256, 128)

    # deconv4: bake the output permutation into the columns (channel-major
    # [c*L_OUT + l]) so the kernel output reshapes directly to (B, C_img, L_OUT).
    w4_blk = _block_deconv_weight(w4_t, 4)                       # (128, 16) position-major
    perm = jnp.arange(L_OUT * IMG_C).reshape(L_OUT, IMG_C).T.reshape(-1)
    w4_k = w4_blk[:, perm]
    b4_k = jnp.tile(b4, L_OUT)[perm]                             # == repeat(b4, L_OUT)

    kernel_params = (
        wfc_t.T.astype(bf16),                          # (32, 1024)
        bfc.reshape(1, HID),
        _block_deconv_weight(w1_t, 1).astype(bf16),    # (1024, 256)
        jnp.tile(b1, 2).reshape(1, 2 * C1),
        w2_k.astype(bf16),                             # (256, 256)
        b2_k.reshape(1, PAD_L2 * C2),
        w3_k.astype(bf16),                             # (256, 128)
        jnp.tile(b3, 4).reshape(1, 4 * C3),
        w4_k.astype(bf16),                             # (128, 16) channel-major cols
        b4_k.reshape(1, L_OUT * IMG_C),
    )
    return torch_params, kernel_params


# ----- pure-JAX reference (definition of stride-1, pad-0 ConvTranspose1d) -----
def conv_transpose1d_ref(x, w, b):
    # x: (B, Cin, L), w: (Cin, Cout, K), b: (Cout,)
    Bn, Cin, L = x.shape
    _, Cout, K = w.shape
    out = jnp.broadcast_to(b[None, :, None], (Bn, Cout, L + K - 1)).astype(jnp.float32)
    for t in range(L):
        for k in range(K):
            out = out.at[:, :, t + k].add(
                jnp.einsum("bi,io->bo", x[:, :, t], w[:, :, k]))
    return out


def decoder_ref(x, torch_params):
    wfc, bfc, w1, b1, w2, b2, w3, b3, w4, b4 = torch_params
    h = jax.nn.relu(x @ wfc.T + bfc)          # fc1
    h = h[:, :, None]                         # unsqueeze(-1): (B, 1024, 1)
    h = jax.nn.relu(conv_transpose1d_ref(h, w1, b1))
    h = jax.nn.relu(conv_transpose1d_ref(h, w2, b2))
    h = jax.nn.relu(conv_transpose1d_ref(h, w3, b3))
    return conv_transpose1d_ref(h, w4, b4)    # no activation ('1d' branch)


if __name__ == "__main__":
    key = jax.random.PRNGKey(0)
    kx, kp, kx2 = jax.random.split(key, 3)
    torch_params, kernel_params = init_params(kp)

    # Primary small-shape check (single resident batch tile, grid=(1,)).
    x = jax.random.normal(kx, (B, LATENT), jnp.float32)
    out = jax.block_until_ready(decoder_forward(x, kernel_params))
    ref = decoder_ref(x, torch_params)
    assert out.shape == (B, IMG_C, L_OUT), out.shape
    # bf16 activations in the kernel (vs f32 reference activations) -> loosened tol.
    assert jnp.allclose(out, ref, atol=1e-2, rtol=1e-2), \
        float(jnp.max(jnp.abs(out - ref)))

    # Larger-batch check exercising the 2-tile "parallel" grid (v7x megacore path).
    x2 = jax.random.normal(kx2, (32, LATENT), jnp.float32)
    out2 = jax.block_until_ready(decoder_forward(x2, kernel_params))
    ref2 = decoder_ref(x2, torch_params)
    assert out2.shape == (32, IMG_C, L_OUT), out2.shape
    assert jnp.allclose(out2, ref2, atol=1e-2, rtol=1e-2), \
        float(jnp.max(jnp.abs(out2 - ref2)))

    print("KERNEL_OK")
</pallas_src>

<mosaic_0001>
module attributes {stable_mosaic.version = 11 : i64} {
  func.func @decoder_kernel(%arg0: i32, %arg1: memref<8x32xbf16, #tpu.memory_space<vmem>>, %arg2: memref<32x1024xbf16, #tpu.memory_space<vmem>>, %arg3: memref<1x1024xf32, #tpu.memory_space<vmem>>, %arg4: memref<1024x256xbf16, #tpu.memory_space<vmem>>, %arg5: memref<1x256xf32, #tpu.memory_space<vmem>>, %arg6: memref<256x256xbf16, #tpu.memory_space<vmem>>, %arg7: memref<1x256xf32, #tpu.memory_space<vmem>>, %arg8: memref<256x128xbf16, #tpu.memory_space<vmem>>, %arg9: memref<1x128xf32, #tpu.memory_space<vmem>>, %arg10: memref<128x16xbf16, #tpu.memory_space<vmem>>, %arg11: memref<1x16xf32, #tpu.memory_space<vmem>>, %arg12: memref<8x16xf32, #tpu.memory_space<vmem>>) attributes {dimension_semantics = [#tpu.dimension_semantics<parallel>], iteration_bounds = array<i64: 1>, scalar_prefetch = 0 : i64, scratch_operands = 0 : i64, tpu.core_type = #tpu.core_type<tc>, window_params = [{transform_indices = @transform_0, window_bounds = array<i64: 8, 32>}, {pipeline_mode = #tpu.pipeline_mode<synchronous>, transform_indices = @transform_1, window_bounds = array<i64: 32, 1024>}, {pipeline_mode = #tpu.pipeline_mode<synchronous>, transform_indices = @transform_2, window_bounds = array<i64: 1, 1024>}, {pipeline_mode = #tpu.pipeline_mode<synchronous>, transform_indices = @transform_3, window_bounds = array<i64: 1024, 256>}, {pipeline_mode = #tpu.pipeline_mode<synchronous>, transform_indices = @transform_4, window_bounds = array<i64: 1, 256>}, {pipeline_mode = #tpu.pipeline_mode<synchronous>, transform_indices = @transform_5, window_bounds = array<i64: 256, 256>}, {pipeline_mode = #tpu.pipeline_mode<synchronous>, transform_indices = @transform_6, window_bounds = array<i64: 1, 256>}, {pipeline_mode = #tpu.pipeline_mode<synchronous>, transform_indices = @transform_7, window_bounds = array<i64: 256, 128>}, {pipeline_mode = #tpu.pipeline_mode<synchronous>, transform_indices = @transform_8, window_bounds = array<i64: 1, 128>}, {pipeline_mode = #tpu.pipeline_mode<synchronous>, transform_indices = @transform_9, window_bounds = array<i64: 128, 16>}, {pipeline_mode = #tpu.pipeline_mode<synchronous>, transform_indices = @transform_10, window_bounds = array<i64: 1, 16>}, {transform_indices = @transform_11, window_bounds = array<i64: 8, 16>}]} {
    %c0 = arith.constant 0 : index
    %c0_0 = arith.constant 0 : index
    %0 = vector.load %arg1[%c0, %c0_0] : memref<8x32xbf16, #tpu.memory_space<vmem>>, vector<8x32xbf16>
    %c0_1 = arith.constant 0 : index
    %c0_2 = arith.constant 0 : index
    %1 = vector.load %arg2[%c0_1, %c0_2] : memref<32x1024xbf16, #tpu.memory_space<vmem>>, vector<32x1024xbf16>
    %cst = arith.constant dense<0.000000e+00> : vector<8x1024xf32>
    %2 = tpu.matmul %0, %1, %cst {dimension_numbers = #tpu.dot_dimension_numbers<[1], [0], [0], [1], [0, 0, 1, 1], [], []>} : vector<8x32xbf16>, vector<32x1024xbf16>, vector<8x1024xf32> -> vector<8x1024xf32>
    %c0_3 = arith.constant 0 : index
    %c0_4 = arith.constant 0 : index
    %3 = vector.load %arg3[%c0_3, %c0_4] : memref<1x1024xf32, #tpu.memory_space<vmem>>, vector<1x1024xf32>
    %4 = vector.broadcast %3 : vector<1x1024xf32> to vector<8x1024xf32>
    %5 = arith.addf %2, %4 : vector<8x1024xf32>
    %cst_5 = arith.constant 0.000000e+00 : f32
    %6 = vector.broadcast %cst_5 : f32 to vector<8x1024xf32>
    %7 = arith.maximumf %5, %6 : vector<8x1024xf32>
    %8 = arith.truncf %7 : vector<8x1024xf32> to vector<8x1024xbf16>
    %c0_6 = arith.constant 0 : index
    %c0_7 = arith.constant 0 : index
    %9 = vector.load %arg4[%c0_6, %c0_7] : memref<1024x256xbf16, #tpu.memory_space<vmem>>, vector<1024x256xbf16>
    %cst_8 = arith.constant dense<0.000000e+00> : vector<8x256xf32>
    %10 = tpu.matmul %8, %9, %cst_8 {dimension_numbers = #tpu.dot_dimension_numbers<[1], [0], [0], [1], [0, 0, 1, 1], [], []>} : vector<8x1024xbf16>, vector<1024x256xbf16>, vector<8x256xf32> -> vector<8x256xf32>
    %c0_9 = arith.constant 0 : index
    %c0_10 = arith.constant 0 : index
    %11 = vector.load %arg5[%c0_9, %c0_10] : memref<1x256xf32, #tpu.memory_space<vmem>>, vector<1x256xf32>
    %12 = vector.broadcast %11 : vector<1x256xf32> to vector<8x256xf32>
    %13 = arith.addf %10, %12 : vector<8x256xf32>
    %cst_11 = arith.constant 0.000000e+00 : f32
    %14 = vector.broadcast %cst_11 : f32 to vector<8x256xf32>
    %15 = arith.maximumf %13, %14 : vector<8x256xf32>
    %16 = arith.truncf %15 : vector<8x256xf32> to vector<8x256xbf16>
    %c0_12 = arith.constant 0 : index
    %c0_13 = arith.constant 0 : index
    %17 = vector.load %arg6[%c0_12, %c0_13] : memref<256x256xbf16, #tpu.memory_space<vmem>>, vector<256x256xbf16>
    %cst_14 = arith.constant dense<0.000000e+00> : vector<8x256xf32>
    %18 = tpu.matmul %16, %17, %cst_14 {dimension_numbers = #tpu.dot_dimension_numbers<[1], [0], [0], [1], [0, 0, 1, 1], [], []>} : vector<8x256xbf16>, vector<256x256xbf16>, vector<8x256xf32> -> vector<8x256xf32>
    %c0_15 = arith.constant 0 : index
    %c0_16 = arith.constant 0 : index
    %19 = vector.load %arg7[%c0_15, %c0_16] : memref<1x256xf32, #tpu.memory_space<vmem>>, vector<1x256xf32>
    %20 = vector.broadcast %19 : vector<1x256xf32> to vector<8x256xf32>
    %21 = arith.addf %18, %20 : vector<8x256xf32>
    %cst_17 = arith.constant 0.000000e+00 : f32
    %22 = vector.broadcast %cst_17 : f32 to vector<8x256xf32>
    %23 = arith.maximumf %21, %22 : vector<8x256xf32>
    %24 = arith.truncf %23 : vector<8x256xf32> to vector<8x256xbf16>
    %c0_18 = arith.constant 0 : index
    %c0_19 = arith.constant 0 : index
    %25 = vector.load %arg8[%c0_18, %c0_19] : memref<256x128xbf16, #tpu.memory_space<vmem>>, vector<256x128xbf16>
    %cst_20 = arith.constant dense<0.000000e+00> : vector<8x128xf32>
    %26 = tpu.matmul %24, %25, %cst_20 {dimension_numbers = #tpu.dot_dimension_numbers<[1], [0], [0], [1], [0, 0, 1, 1], [], []>} : vector<8x256xbf16>, vector<256x128xbf16>, vector<8x128xf32> -> vector<8x128xf32>
    %c0_21 = arith.constant 0 : index
    %c0_22 = arith.constant 0 : index
    %27 = vector.load %arg9[%c0_21, %c0_22] : memref<1x128xf32, #tpu.memory_space<vmem>>, vector<1x128xf32>
    %28 = vector.broadcast %27 : vector<1x128xf32> to vector<8x128xf32>
    %29 = arith.addf %26, %28 : vector<8x128xf32>
    %cst_23 = arith.constant 0.000000e+00 : f32
    %30 = vector.broadcast %cst_23 : f32 to vector<8x128xf32>
    %31 = arith.maximumf %29, %30 : vector<8x128xf32>
    %32 = arith.truncf %31 : vector<8x128xf32> to vector<8x128xbf16>
    %c0_24 = arith.constant 0 : index
    %c0_25 = arith.constant 0 : index
    %33 = vector.load %arg10[%c0_24, %c0_25] : memref<128x16xbf16, #tpu.memory_space<vmem>>, vector<128x16xbf16>
    %cst_26 = arith.constant dense<0.000000e+00> : vector<8x16xf32>
    %34 = tpu.matmul %32, %33, %cst_26 {dimension_numbers = #tpu.dot_dimension_numbers<[1], [0], [0], [1], [0, 0, 1, 1], [], []>} : vector<8x128xbf16>, vector<128x16xbf16>, vector<8x16xf32> -> vector<8x16xf32>
    %c0_27 = arith.constant 0 : index
    %c0_28 = arith.constant 0 : index
    %35 = vector.load %arg11[%c0_27, %c0_28] : memref<1x16xf32, #tpu.memory_space<vmem>>, vector<1x16xf32>
    %36 = vector.broadcast %35 : vector<1x16xf32> to vector<8x16xf32>
    %37 = arith.addf %34, %36 : vector<8x16xf32>
    %c0_29 = arith.constant 0 : index
    %c0_30 = arith.constant 0 : index
    %38 = vector.load %arg12[%c0_29, %c0_30] : memref<8x16xf32, #tpu.memory_space<vmem>>, vector<8x16xf32>
    tpu.vector_store %arg12[%c0_29, %c0_30], %37 {strides = array<i32>} : memref<8x16xf32, #tpu.memory_space<vmem>>, vector<8x16xf32>,
    return
  }
  func.func @transform_0(%arg0: i32) -> (i32, i32) {
    %c0_i32 = arith.constant 0 : i32
    %c0_i32_0 = arith.constant 0 : i32
    return %arg0, %c0_i32 : i32, i32
  }
  func.func @transform_1(%arg0: i32) -> (i32, i32) {
    %c0_i32 = arith.constant 0 : i32
    %c0_i32_0 = arith.constant 0 : i32
    %c0_i32_1 = arith.constant 0 : i32
    return %c0_i32, %c0_i32_0 : i32, i32
  }
  func.func @transform_2(%arg0: i32) -> (i32, i32) {
    %c0_i32 = arith.constant 0 : i32
    %c0_i32_0 = arith.constant 0 : i32
    %c0_i32_1 = arith.constant 0 : i32
    return %c0_i32, %c0_i32_0 : i32, i32
  }
  func.func @transform_3(%arg0: i32) -> (i32, i32) {
    %c0_i32 = arith.constant 0 : i32
    %c0_i32_0 = arith.constant 0 : i32
    %c0_i32_1 = arith.constant 0 : i32
    return %c0_i32, %c0_i32_0 : i32, i32
  }
  func.func @transform_4(%arg0: i32) -> (i32, i32) {
    %c0_i32 = arith.constant 0 : i32
    %c0_i32_0 = arith.constant 0 : i32
    %c0_i32_1 = arith.constant 0 : i32
    return %c0_i32, %c0_i32_0 : i32, i32
  }
  func.func @transform_5(%arg0: i32) -> (i32, i32) {
    %c0_i32 = arith.constant 0 : i32
    %c0_i32_0 = arith.constant 0 : i32
    %c0_i32_1 = arith.constant 0 : i32
    return %c0_i32, %c0_i32_0 : i32, i32
  }
  func.func @transform_6(%arg0: i32) -> (i32, i32) {
    %c0_i32 = arith.constant 0 : i32
    %c0_i32_0 = arith.constant 0 : i32
    %c0_i32_1 = arith.constant 0 : i32
    return %c0_i32, %c0_i32_0 : i32, i32
  }
  func.func @transform_7(%arg0: i32) -> (i32, i32) {
    %c0_i32 = arith.constant 0 : i32
    %c0_i32_0 = arith.constant 0 : i32
    %c0_i32_1 = arith.constant 0 : i32
    return %c0_i32, %c0_i32_0 : i32, i32
  }
  func.func @transform_8(%arg0: i32) -> (i32, i32) {
    %c0_i32 = arith.constant 0 : i32
    %c0_i32_0 = arith.constant 0 : i32
    %c0_i32_1 = arith.constant 0 : i32
    return %c0_i32, %c0_i32_0 : i32, i32
  }
  func.func @transform_9(%arg0: i32) -> (i32, i32) {
    %c0_i32 = arith.constant 0 : i32
    %c0_i32_0 = arith.constant 0 : i32
    %c0_i32_1 = arith.constant 0 : i32
    return %c0_i32, %c0_i32_0 : i32, i32
  }
  func.func @transform_10(%arg0: i32) -> (i32, i32) {
    %c0_i32 = arith.constant 0 : i32
    %c0_i32_0 = arith.constant 0 : i32
    %c0_i32_1 = arith.constant 0 : i32
    return %c0_i32, %c0_i32_0 : i32, i32
  }
  func.func @transform_11(%arg0: i32) -> (i32, i32) {
    %c0_i32 = arith.constant 0 : i32
    %c0_i32_0 = arith.constant 0 : i32
    return %arg0, %c0_i32 : i32, i32
  }
}

module attributes {stable_mosaic.version = 11 : i64} {
  func.func @decoder_kernel(%arg0: i32, %arg1: memref<8x32xbf16, #tpu.memory_space<vmem>>, %arg2: memref<32x1024xbf16, #tpu.memory_space<vmem>>, %arg3: memref<1x1024xf32, #tpu.memory_space<vmem>>, %arg4: memref<1024x256xbf16, #tpu.memory_space<vmem>>, %arg5: memref<1x256xf32, #tpu.memory_space<vmem>>, %arg6: memref<256x256xbf16, #tpu.memory_space<vmem>>, %arg7: memref<1x256xf32, #tpu.memory_space<vmem>>, %arg8: memref<256x128xbf16, #tpu.memory_space<vmem>>, %arg9: memref<1x128xf32, #tpu.memory_space<vmem>>, %arg10: memref<128x16xbf16, #tpu.memory_space<vmem>>, %arg11: memref<1x16xf32, #tpu.memory_space<vmem>>, %arg12: memref<8x16xf32, #tpu.memory_space<vmem>>) attributes {dimension_semantics = [#tpu.dimension_semantics<parallel>], iteration_bounds = array<i64: 1>, scalar_prefetch = 0 : i64, scratch_operands = 0 : i64, tpu.core_type = #tpu.core_type<tc>, window_params = [{transform_indices = @transform_0, window_bounds = array<i64: 8, 32>}, {pipeline_mode = #tpu.pipeline_mode<synchronous>, transform_indices = @transform_1, window_bounds = array<i64: 32, 1024>}, {pipeline_mode = #tpu.pipeline_mode<synchronous>, transform_indices = @transform_2, window_bounds = array<i64: 1, 1024>}, {pipeline_mode = #tpu.pipeline_mode<synchronous>, transform_indices = @transform_3, window_bounds = array<i64: 1024, 256>}, {pipeline_mode = #tpu.pipeline_mode<synchronous>, transform_indices = @transform_4, window_bounds = array<i64: 1, 256>}, {pipeline_mode = #tpu.pipeline_mode<synchronous>, transform_indices = @transform_5, window_bounds = array<i64: 256, 256>}, {pipeline_mode = #tpu.pipeline_mode<synchronous>, transform_indices = @transform_6, window_bounds = array<i64: 1, 256>}, {pipeline_mode = #tpu.pipeline_mode<synchronous>, transform_indices = @transform_7, window_bounds = array<i64: 256, 128>}, {pipeline_mode = #tpu.pipeline_mode<synchronous>, transform_indices = @transform_8, window_bounds = array<i64: 1, 128>}, {pipeline_mode = #tpu.pipeline_mode<synchronous>, transform_indices = @transform_9, window_bounds = array<i64: 128, 16>}, {pipeline_mode = #tpu.pipeline_mode<synchronous>, transform_indices = @transform_10, window_bounds = array<i64: 1, 16>}, {transform_indices = @transform_11, window_bounds = array<i64: 8, 16>}]} {
    %c0 = arith.constant 0 : index
    %c0_0 = arith.constant 0 : index
    %0 = vector.load %arg1[%c0, %c0_0] : memref<8x32xbf16, #tpu.memory_space<vmem>>, vector<8x32xbf16>
    %c0_1 = arith.constant 0 : index
    %c0_2 = arith.constant 0 : index
    %1 = vector.load %arg2[%c0_1, %c0_2] : memref<32x1024xbf16, #tpu.memory_space<vmem>>, vector<32x1024xbf16>
    %cst = arith.constant dense<0.000000e+00> : vector<8x1024xf32>
    %2 = tpu.matmul %0, %1, %cst {dimension_numbers = #tpu.dot_dimension_numbers<[1], [0], [0], [1], [0, 0, 1, 1], [], []>} : vector<8x32xbf16>, vector<32x1024xbf16>, vector<8x1024xf32> -> vector<8x1024xf32>
    %c0_3 = arith.constant 0 : index
    %c0_4 = arith.constant 0 : index
    %3 = vector.load %arg3[%c0_3, %c0_4] : memref<1x1024xf32, #tpu.memory_space<vmem>>, vector<1x1024xf32>
    %4 = vector.broadcast %3 : vector<1x1024xf32> to vector<8x1024xf32>
    %5 = arith.addf %2, %4 : vector<8x1024xf32>
    %cst_5 = arith.constant 0.000000e+00 : f32
    %6 = vector.broadcast %cst_5 : f32 to vector<8x1024xf32>
    %7 = arith.maximumf %5, %6 : vector<8x1024xf32>
    %8 = arith.truncf %7 : vector<8x1024xf32> to vector<8x1024xbf16>
    %c0_6 = arith.constant 0 : index
    %c0_7 = arith.constant 0 : index
    %9 = vector.load %arg4[%c0_6, %c0_7] : memref<1024x256xbf16, #tpu.memory_space<vmem>>, vector<1024x256xbf16>
    %cst_8 = arith.constant dense<0.000000e+00> : vector<8x256xf32>
    %10 = tpu.matmul %8, %9, %cst_8 {dimension_numbers = #tpu.dot_dimension_numbers<[1], [0], [0], [1], [0, 0, 1, 1], [], []>} : vector<8x1024xbf16>, vector<1024x256xbf16>, vector<8x256xf32> -> vector<8x256xf32>
    %c0_9 = arith.constant 0 : index
    %c0_10 = arith.constant 0 : index
    %11 = vector.load %arg5[%c0_9, %c0_10] : memref<1x256xf32, #tpu.memory_space<vmem>>, vector<1x256xf32>
    %12 = vector.broadcast %11 : vector<1x256xf32> to vector<8x256xf32>
    %13 = arith.addf %10, %12 : vector<8x256xf32>
    %cst_11 = arith.constant 0.000000e+00 : f32
    %14 = vector.broadcast %cst_11 : f32 to vector<8x256xf32>
    %15 = arith.maximumf %13, %14 : vector<8x256xf32>
    %16 = arith.truncf %15 : vector<8x256xf32> to vector<8x256xbf16>
    %c0_12 = arith.constant 0 : index
    %c0_13 = arith.constant 0 : index
    %17 = vector.load %arg6[%c0_12, %c0_13] : memref<256x256xbf16, #tpu.memory_space<vmem>>, vector<256x256xbf16>
    %cst_14 = arith.constant dense<0.000000e+00> : vector<8x256xf32>
    %18 = tpu.matmul %16, %17, %cst_14 {dimension_numbers = #tpu.dot_dimension_numbers<[1], [0], [0], [1], [0, 0, 1, 1], [], []>} : vector<8x256xbf16>, vector<256x256xbf16>, vector<8x256xf32> -> vector<8x256xf32>
    %c0_15 = arith.constant 0 : index
    %c0_16 = arith.constant 0 : index
    %19 = vector.load %arg7[%c0_15, %c0_16] : memref<1x256xf32, #tpu.memory_space<vmem>>, vector<1x256xf32>
    %20 = vector.broadcast %19 : vector<1x256xf32> to vector<8x256xf32>
    %21 = arith.addf %18, %20 : vector<8x256xf32>
    %cst_17 = arith.constant 0.000000e+00 : f32
    %22 = vector.broadcast %cst_17 : f32 to vector<8x256xf32>
    %23 = arith.maximumf %21, %22 : vector<8x256xf32>
    %24 = arith.truncf %23 : vector<8x256xf32> to vector<8x256xbf16>
    %c0_18 = arith.constant 0 : index
    %c0_19 = arith.constant 0 : index
    %25 = vector.load %arg8[%c0_18, %c0_19] : memref<256x128xbf16, #tpu.memory_space<vmem>>, vector<256x128xbf16>
    %cst_20 = arith.constant dense<0.000000e+00> : vector<8x128xf32>
    %26 = tpu.matmul %24, %25, %cst_20 {dimension_numbers = #tpu.dot_dimension_numbers<[1], [0], [0], [1], [0, 0, 1, 1], [], []>} : vector<8x256xbf16>, vector<256x128xbf16>, vector<8x128xf32> -> vector<8x128xf32>
    %c0_21 = arith.constant 0 : index
    %c0_22 = arith.constant 0 : index
    %27 = vector.load %arg9[%c0_21, %c0_22] : memref<1x128xf32, #tpu.memory_space<vmem>>, vector<1x128xf32>
    %28 = vector.broadcast %27 : vector<1x128xf32> to vector<8x128xf32>
    %29 = arith.addf %26, %28 : vector<8x128xf32>
    %cst_23 = arith.constant 0.000000e+00 : f32
    %30 = vector.broadcast %cst_23 : f32 to vector<8x128xf32>
    %31 = arith.maximumf %29, %30 : vector<8x128xf32>
    %32 = arith.truncf %31 : vector<8x128xf32> to vector<8x128xbf16>
    %c0_24 = arith.constant 0 : index
    %c0_25 = arith.constant 0 : index
    %33 = vector.load %arg10[%c0_24, %c0_25] : memref<128x16xbf16, #tpu.memory_space<vmem>>, vector<128x16xbf16>
    %cst_26 = arith.constant dense<0.000000e+00> : vector<8x16xf32>
    %34 = tpu.matmul %32, %33, %cst_26 {dimension_numbers = #tpu.dot_dimension_numbers<[1], [0], [0], [1], [0, 0, 1, 1], [], []>} : vector<8x128xbf16>, vector<128x16xbf16>, vector<8x16xf32> -> vector<8x16xf32>
    %c0_27 = arith.constant 0 : index
    %c0_28 = arith.constant 0 : index
    %35 = vector.load %arg11[%c0_27, %c0_28] : memref<1x16xf32, #tpu.memory_space<vmem>>, vector<1x16xf32>
    %36 = vector.broadcast %35 : vector<1x16xf32> to vector<8x16xf32>
    %37 = arith.addf %34, %36 : vector<8x16xf32>
    %c0_29 = arith.constant 0 : index
    %c0_30 = arith.constant 0 : index
    %38 = vector.load %arg12[%c0_29, %c0_30] : memref<8x16xf32, #tpu.memory_space<vmem>>, vector<8x16xf32>
    tpu.vector_store %arg12[%c0_29, %c0_30], %37 {strides = array<i32>} : memref<8x16xf32, #tpu.memory_space<vmem>>, vector<8x16xf32>,
    return
  }
  func.func @transform_0(%arg0: i32) -> (i32, i32) {
    %c0_i32 = arith.constant 0 : i32
    %c0_i32_0 = arith.constant 0 : i32
    return %arg0, %c0_i32 : i32, i32
  }
  func.func @transform_1(%arg0: i32) -> (i32, i32) {
    %c0_i32 = arith.constant 0 : i32
    %c0_i32_0 = arith.constant 0 : i32
    %c0_i32_1 = arith.constant 0 : i32
    return %c0_i32, %c0_i32_0 : i32, i32
  }
  func.func @transform_2(%arg0: i32) -> (i32, i32) {
    %c0_i32 = arith.constant 0 : i32
    %c0_i32_0 = arith.constant 0 : i32
    %c0_i32_1 = arith.constant 0 : i32
    return %c0_i32, %c0_i32_0 : i32, i32
  }
  func.func @transform_3(%arg0: i32) -> (i32, i32) {
    %c0_i32 = arith.constant 0 : i32
    %c0_i32_0 = arith.constant 0 : i32
    %c0_i32_1 = arith.constant 0 : i32
    return %c0_i32, %c0_i32_0 : i32, i32
  }
  func.func @transform_4(%arg0: i32) -> (i32, i32) {
    %c0_i32 = arith.constant 0 : i32
    %c0_i32_0 = arith.constant 0 : i32
    %c0_i32_1 = arith.constant 0 : i32
    return %c0_i32, %c0_i32_0 : i32, i32
  }
  func.func @transform_5(%arg0: i32) -> (i32, i32) {
    %c0_i32 = arith.constant 0 : i32
    %c0_i32_0 = arith.constant 0 : i32
    %c0_i32_1 = arith.constant 0 : i32
    return %c0_i32, %c0_i32_0 : i32, i32
  }
  func.func @transform_6(%arg0: i32) -> (i32, i32) {
    %c0_i32 = arith.constant 0 : i32
    %c0_i32_0 = arith.constant 0 : i32
    %c0_i32_1 = arith.constant 0 : i32
    return %c0_i32, %c0_i32_0 : i32, i32
  }
  func.func @transform_7(%arg0: i32) -> (i32, i32) {
    %c0_i32 = arith.constant 0 : i32
    %c0_i32_0 = arith.constant 0 : i32
    %c0_i32_1 = arith.constant 0 : i32
    return %c0_i32, %c0_i32_0 : i32, i32
  }
  func.func @transform_8(%arg0: i32) -> (i32, i32) {
    %c0_i32 = arith.constant 0 : i32
    %c0_i32_0 = arith.constant 0 : i32
    %c0_i32_1 = arith.constant 0 : i32
    return %c0_i32, %c0_i32_0 : i32, i32
  }
  func.func @transform_9(%arg0: i32) -> (i32, i32) {
    %c0_i32 = arith.constant 0 : i32
    %c0_i32_0 = arith.constant 0 : i32
    %c0_i32_1 = arith.constant 0 : i32
    return %c0_i32, %c0_i32_0 : i32, i32
  }
  func.func @transform_10(%arg0: i32) -> (i32, i32) {
    %c0_i32 = arith.constant 0 : i32
    %c0_i32_0 = arith.constant 0 : i32
    %c0_i32_1 = arith.constant 0 : i32
    return %c0_i32, %c0_i32_0 : i32, i32
  }
  func.func @transform_11(%arg0: i32) -> (i32, i32) {
    %c0_i32 = arith.constant 0 : i32
    %c0_i32_0 = arith.constant 0 : i32
    return %arg0, %c0_i32 : i32, i32
  }
}

</mosaic_0001>

<llo_original>
// kernel: tpu_custom_call.1
$region0: #{tpu_custom_call.1}
  #allocation0 [shape = 'u32[]', space=smem, size = 0x4, offset = 0x4, fixed_abs, tag = 'smem constant byte address 0x4 - core index']
  #allocation1 [shape = 'u32[144,128]{1,0:T(1,128)}', space=vmem, size = 0x12000, scoped, tag = 'internal scratch']
  %s0 = inlined_call_operand.vmem [shape: bf16[8,32], index: 0, kind: input, shape index: {}]
  %s1 = inlined_call_operand.hbm [shape: bf16[32,1024], index: 1, kind: input, shape index: {}]
  %s2 = inlined_call_operand.vmem [shape: f32[1,1024], index: 2, kind: input, shape index: {}]
  %s3 = inlined_call_operand.hbm [shape: bf16[1024,256], index: 3, kind: input, shape index: {}]
  %s4 = inlined_call_operand.vmem [shape: f32[1,256], index: 4, kind: input, shape index: {}]
  %s5 = inlined_call_operand.hbm [shape: bf16[256,256], index: 5, kind: input, shape index: {}]
  %s6 = inlined_call_operand.vmem [shape: f32[1,256], index: 6, kind: input, shape index: {}]
  %s7 = inlined_call_operand.hbm [shape: bf16[256,128], index: 7, kind: input, shape index: {}]
  %s8 = inlined_call_operand.vmem [shape: f32[1,128], index: 8, kind: input, shape index: {}]
  %s9 = inlined_call_operand.vmem [shape: bf16[128,16], index: 9, kind: input, shape index: {}]
  %s10 = inlined_call_operand.vmem [shape: f32[1,16], index: 10, kind: input, shape index: {}]
  %s11 = inlined_call_operand.hbm [shape: f32[8,16], index: 11, kind: output, shape index: {}]
  %s12 = sld [smem:[#allocation0]]
  $region70: #{tpu_custom_call.1} parent=0
    _
  %s14 = ssub.s32 1, %s12
  %s15 = scalar_select 0, %s14, %s12
  $region1: #{tpu_custom_call.1} parent=0
    #allocation2 [shape = 'u8[65536]{0}', space=vmem, size = 0x10000, scoped, tag = 'input window, operand 1, single buffered']
    #allocation3 [shape = 's32[1]{0}', space=sflag, size = 0x4, scoped, tag = 'scoped memory for tpu_custom_call.1']
    #allocation4 [shape = 's32[1]{0}', space=sflag, size = 0x4, scoped, tag = 'scoped memory for tpu_custom_call.1']
    #allocation5 [shape = 'u8[524288]{0}', space=vmem, size = 0x80000, scoped, tag = 'input window, operand 3, single buffered']
    #allocation6 [shape = 's32[1]{0}', space=sflag, size = 0x4, scoped, tag = 'scoped memory for tpu_custom_call.1']
    #allocation7 [shape = 'u8[131072]{0}', space=vmem, size = 0x20000, scoped, tag = 'input window, operand 5, single buffered']
    #allocation8 [shape = 'u8[65536]{0}', space=vmem, size = 0x10000, scoped, tag = 'input window, operand 7, single buffered']
    #allocation9 [shape = 's32[1]{0}', space=sflag, size = 0x4, scoped, tag = 'scoped memory for tpu_custom_call.1']
    #allocation10 [shape = 'u8[4096]{0}', space=vmem, size = 0x1000, scoped, tag = 'output window, operand 0, single buffered']
    %16 = vsyncpa [#allocation3], 0
    %17 = vsyncpa [#allocation6], 0
    %18 = vsyncpa [#allocation9], 0
    %19 = vsyncpa [#allocation4], 0
    // Predicated region
    $region2: #{tpu_custom_call.1} parent=1 // pred_check
      _
    $region3: #{tpu_custom_call.1} parent=1 // pred_check_branch
      %21 = sbr.rel (0) target = $region5
    $region4: #{tpu_custom_call.1} parent=1 // pred_region
      _
    $region5: #{tpu_custom_call.1} parent=1 // pred_fallthru
      _
    // Predicated region
    $region6: #{tpu_custom_call.1} parent=1 // pred_check
      _
    $region7: #{tpu_custom_call.1} parent=1 // pred_check_branch
      %23 = sbr.rel (0) target = $region9
    $region8: #{tpu_custom_call.1} parent=1 // pred_region
      %s25 = ssub.s32 2048, 2048
      %26 = vsyncadd [#allocation3], %s25
      %s27 = sshll.u32 [#allocation2], 4
      %s28 = int_to_ptr.vmem [resolvable:$true] %s27
      %33 = dma.hbm_to_vmem [thread:$0]  %s1, 2048, %s28, [#allocation3], 512, 512, 32
    $region9: #{tpu_custom_call.1} parent=1 // pred_fallthru
      _
    // Predicated region
    $region10: #{tpu_custom_call.1} parent=1 // pred_check
      _
    $region11: #{tpu_custom_call.1} parent=1 // pred_check_branch
      %35 = sbr.rel (0) target = $region13
    $region12: #{tpu_custom_call.1} parent=1 // pred_region
      _
    $region13: #{tpu_custom_call.1} parent=1 // pred_fallthru
      _
    // Predicated region
    $region14: #{tpu_custom_call.1} parent=1 // pred_check
      _
    $region15: #{tpu_custom_call.1} parent=1 // pred_check_branch
      %37 = sbr.rel (0) target = $region17
    $region16: #{tpu_custom_call.1} parent=1 // pred_region
      %s39 = ssub.s32 16384, 16384
      %40 = vsyncadd [#allocation6], %s39
      %s41 = sshll.u32 [#allocation5], 4
      %s42 = int_to_ptr.vmem [resolvable:$true] %s41
      %47 = dma.hbm_to_vmem [thread:$0]  %s3, 16384, %s42, [#allocation6], 128, 128, 8
    $region17: #{tpu_custom_call.1} parent=1 // pred_fallthru
      _
    // Predicated region
    $region18: #{tpu_custom_call.1} parent=1 // pred_check
      _
    $region19: #{tpu_custom_call.1} parent=1 // pred_check_branch
      %49 = sbr.rel (0) target = $region21
    $region20: #{tpu_custom_call.1} parent=1 // pred_region
      _
    $region21: #{tpu_custom_call.1} parent=1 // pred_fallthru
      _
    // Predicated region
    $region22: #{tpu_custom_call.1} parent=1 // pred_check
      _
    $region23: #{tpu_custom_call.1} parent=1 // pred_check_branch
      %51 = sbr.rel (0) target = $region25
    $region24: #{tpu_custom_call.1} parent=1 // pred_region
      %s53 = ssub.s32 4096, 4096
      %54 = vsyncadd [#allocation6], %s53
      %s55 = sshll.u32 [#allocation7], 4
      %s56 = int_to_ptr.vmem [resolvable:$true] %s55
      %61 = dma.hbm_to_vmem [thread:$0]  %s5, 4096, %s56, [#allocation6], 128, 128, 8
    $region25: #{tpu_custom_call.1} parent=1 // pred_fallthru
      _
    // Predicated region
    $region26: #{tpu_custom_call.1} parent=1 // pred_check
      _
    $region27: #{tpu_custom_call.1} parent=1 // pred_check_branch
      %63 = sbr.rel (0) target = $region29
    $region28: #{tpu_custom_call.1} parent=1 // pred_region
      _
    $region29: #{tpu_custom_call.1} parent=1 // pred_fallthru
      _
    // Predicated region
    $region30: #{tpu_custom_call.1} parent=1 // pred_check
      _
    $region31: #{tpu_custom_call.1} parent=1 // pred_check_branch
      %65 = sbr.rel (0) target = $region33
    $region32: #{tpu_custom_call.1} parent=1 // pred_region
      %s67 = ssub.s32 2048, 2048
      %68 = vsyncadd [#allocation9], %s67
      %s69 = sshll.u32 [#allocation8], 4
      %s70 = int_to_ptr.vmem [resolvable:$true] %s69
      %75 = dma.hbm_to_vmem [thread:$0]  %s7, 2048, %s70, [#allocation9], 64, 64, 4
    $region33: #{tpu_custom_call.1} parent=1 // pred_fallthru
      _
    // Predicated region
    $region34: #{tpu_custom_call.1} parent=1 // pred_check
      _
    $region35: #{tpu_custom_call.1} parent=1 // pred_check_branch
      %77 = sbr.rel (0) target = $region37
    $region36: #{tpu_custom_call.1} parent=1 // pred_region
      _
    $region37: #{tpu_custom_call.1} parent=1 // pred_fallthru
      _
    // Predicated region
    $region38: #{tpu_custom_call.1} parent=1 // pred_check
      _
    $region39: #{tpu_custom_call.1} parent=1 // pred_check_branch
      %79 = sbr.rel (0) target = $region41
    $region40: #{tpu_custom_call.1} parent=1 // pred_region
      _
    $region41: #{tpu_custom_call.1} parent=1 // pred_fallthru
      _
    // Predicated region
    $region42: #{tpu_custom_call.1} parent=1 // pred_check
      _
    $region43: #{tpu_custom_call.1} parent=1 // pred_check_branch
      %81 = sbr.rel (0) target = $region45
    $region44: #{tpu_custom_call.1} parent=1 // pred_region
      _
    $region45: #{tpu_custom_call.1} parent=1 // pred_fallthru
      _
    // Predicated region
    $region46: #{tpu_custom_call.1} parent=1 // pred_check
      _
    $region47: #{tpu_custom_call.1} parent=1 // pred_check_branch
      %83 = sbr.rel (0) target = $region49
    $region48: #{tpu_custom_call.1} parent=1 // pred_region
      %84 = dma.done [#allocation3], 2048
    $region49: #{tpu_custom_call.1} parent=1 // pred_fallthru
      _
    // Predicated region
    $region50: #{tpu_custom_call.1} parent=1 // pred_check
      _
    $region51: #{tpu_custom_call.1} parent=1 // pred_check_branch
      %86 = sbr.rel (0) target = $region53
    $region52: #{tpu_custom_call.1} parent=1 // pred_region
      %87 = dma.done [#allocation6], 16384
    $region53: #{tpu_custom_call.1} parent=1 // pred_fallthru
      _
    // Predicated region
    $region54: #{tpu_custom_call.1} parent=1 // pred_check
      _
    $region55: #{tpu_custom_call.1} parent=1 // pred_check_branch
      %89 = sbr.rel (0) target = $region57
    $region56: #{tpu_custom_call.1} parent=1 // pred_region
      %90 = dma.done [#allocation6], 4096
    $region57: #{tpu_custom_call.1} parent=1 // pred_fallthru
      _
    // Predicated region
    $region58: #{tpu_custom_call.1} parent=1 // pred_check
      _
    $region59: #{tpu_custom_call.1} parent=1 // pred_check_branch
      %92 = sbr.rel (0) target = $region61
    $region60: #{tpu_custom_call.1} parent=1 // pred_region
      %93 = dma.done [#allocation9], 2048
    $region61: #{tpu_custom_call.1} parent=1 // pred_fallthru
      _
    %v95 = vld [vmem:[%s0] sm:$0xf]
    %v96 = vld [vmem:[#allocation2] sm:$0xff]
    %v97 = vld [vmem:[#allocation2 + $0x8] sm:$0xff]
    %v98 = vld [vmem:[#allocation2 + $0x10] sm:$0xff]
    %v99 = vld [vmem:[#allocation2 + $0x18] sm:$0xff]
    %v100 = vld [vmem:[#allocation2 + $0x20] sm:$0xff]
    %v101 = vld [vmem:[#allocation2 + $0x28] sm:$0xff]
    %v102 = vld [vmem:[#allocation2 + $0x30] sm:$0xff]
    %v103 = vld [vmem:[#allocation2 + $0x38] sm:$0xff]
    %v104 = vld [vmem:[#allocation2 + $0x40] sm:$0xff]
    %v105 = vld [vmem:[#allocation2 + $0x48] sm:$0xff]
    %v106 = vld [vmem:[#allocation2 + $0x50] sm:$0xff]
    %v107 = vld [vmem:[#allocation2 + $0x58] sm:$0xff]
    %v108 = vld [vmem:[#allocation2 + $0x60] sm:$0xff]
    %v109 = vld [vmem:[#allocation2 + $0x68] sm:$0xff]
    %v110 = vld [vmem:[#allocation2 + $0x70] sm:$0xff]
    %v111 = vld [vmem:[#allocation2 + $0x78] sm:$0xff]
    %v112 = vld [vmem:[%s2] sm:$0xff]
    %v114 = vlaneseq
    %v115 = vshrl.u32 %v114, 7
    %v116 = vsub.s32 0, %v115
    %v117 = vrot.slane %v112, %v116
    %v118 = vlaneseq
    %v119 = vshrl.u32 %v118, 7
    %v120 = vsub.s32 1, %v119
    %v121 = vrot.slane %v112, %v120
    %v122 = vlaneseq
    %v123 = vshrl.u32 %v122, 7
    %v124 = vsub.s32 2, %v123
    %v125 = vrot.slane %v112, %v124
    %v126 = vlaneseq
    %v127 = vshrl.u32 %v126, 7
    %v128 = vsub.s32 3, %v127
    %v129 = vrot.slane %v112, %v128
    %v130 = vlaneseq
    %v131 = vshrl.u32 %v130, 7
    %v132 = vsub.s32 4, %v131
    %v133 = vrot.slane %v112, %v132
    %v134 = vlaneseq
    %v135 = vshrl.u32 %v134, 7
    %v136 = vsub.s32 5, %v135
    %v137 = vrot.slane %v112, %v136
    %v138 = vlaneseq
    %v139 = vshrl.u32 %v138, 7
    %v140 = vsub.s32 6, %v139
    %v141 = vrot.slane %v112, %v140
    %v142 = vlaneseq
    %v143 = vshrl.u32 %v142, 7
    %v144 = vsub.s32 7, %v143
    %v145 = vrot.slane %v112, %v144
    %v170 = vunpack.c.l.b16 %v96
    %v171 = vunpack.c.h.b16 %v96
    %v172 = vunpack.c.l.b16 %v97
    %v173 = vunpack.c.h.b16 %v97
    %v174 = vunpack.c.l.b16 %v98
    %v175 = vunpack.c.h.b16 %v98
    %v176 = vunpack.c.l.b16 %v99
    %v177 = vunpack.c.h.b16 %v99
    %v178 = vunpack.c.l.b16 %v100
    %v179 = vunpack.c.h.b16 %v100
    %v180 = vunpack.c.l.b16 %v101
    %v181 = vunpack.c.h.b16 %v101
    %v182 = vunpack.c.l.b16 %v102
    %v183 = vunpack.c.h.b16 %v102
    %v184 = vunpack.c.l.b16 %v103
    %v185 = vunpack.c.h.b16 %v103
    %v186 = vunpack.c.l.b16 %v104
    %v187 = vunpack.c.h.b16 %v104
    %v188 = vunpack.c.l.b16 %v105
    %v189 = vunpack.c.h.b16 %v105
    %v190 = vunpack.c.l.b16 %v106
    %v191 = vunpack.c.h.b16 %v106
    %v192 = vunpack.c.l.b16 %v107
    %v193 = vunpack.c.h.b16 %v107
    %v194 = vunpack.c.l.b16 %v108
    %v195 = vunpack.c.h.b16 %v108
    %v196 = vunpack.c.l.b16 %v109
    %v197 = vunpack.c.h.b16 %v109
    %v198 = vunpack.c.l.b16 %v110
    %v199 = vunpack.c.h.b16 %v110
    %v200 = vunpack.c.l.b16 %v111
    %v201 = vunpack.c.h.b16 %v111
    %v202 = vpack.c.b16 %v178, %v170
    %v203 = vpack.c.b16 %v179, %v171
    %v204 = vpack.c.b16 %v180, %v172
    %v205 = vpack.c.b16 %v181, %v173
    %v206 = vpack.c.b16 %v182, %v174
    %v207 = vpack.c.b16 %v183, %v175
    %v208 = vpack.c.b16 %v184, %v176
    %v209 = vpack.c.b16 %v185, %v177
    %v210 = vpack.c.b16 %v194, %v186
    %v211 = vpack.c.b16 %v195, %v187
    %v212 = vpack.c.b16 %v196, %v188
    %v213 = vpack.c.b16 %v197, %v189
    %v214 = vpack.c.b16 %v198, %v190
    %v215 = vpack.c.b16 %v199, %v191
    %v216 = vpack.c.b16 %v200, %v192
    %v217 = vpack.c.b16 %v201, %v193
    %vm234 = vcmask 261120
    %v236 = vsel %vm234, %v95, 0
    %238 = vmatprep.subr.bf16.mxu0 %v203
    %239 = vmatpush1.bf16.msra.mxu0 %v202
    %240 = vmatprep.subr.bf16.mxu0 %v211
    %241 = vmatpush1.bf16.msra.mxu0 %v210
    %242 = vmatprep.subr.bf16.mxu0 0
    %243 = vmatpush1.bf16.msra.mxu0 0
    %244 = vmatprep.subr.bf16.mxu0 0
    %245 = vmatpush1.bf16.msra.mxu0 0
    %246 = vmatprep.subr.bf16.mxu0 0
    %247 = vmatpush1.bf16.msra.mxu0 0
    %248 = vmatprep.subr.bf16.mxu0 0
    %249 = vmatpush1.bf16.msra.mxu0 0
    %250 = vmatprep.subr.bf16.mxu0 0
    %251 = vmatpush1.bf16.msra.mxu0 0
    %252 = vmatprep.subr.bf16.mxu0 0
    %253 = vmatpush1.bf16.msra.mxu0 0
    %254 = vmatprep.subr.bf16.mxu0 0
    %255 = vmatpush1.bf16.msra.mxu0 0
    %256 = vmatprep.subr.bf16.mxu0 0
    %257 = vmatpush1.bf16.msra.mxu0 0
    %258 = vmatprep.subr.bf16.mxu0 0
    %259 = vmatpush1.bf16.msra.mxu0 0
    %260 = vmatprep.subr.bf16.mxu0 0
    %261 = vmatpush1.bf16.msra.mxu0 0
    %262 = vmatprep.subr.bf16.mxu0 0
    %263 = vmatpush1.bf16.msra.mxu0 0
    %264 = vmatprep.subr.bf16.mxu0 0
    %265 = vmatpush1.bf16.msra.mxu0 0
    %266 = vmatprep.subr.bf16.mxu0 0
    %267 = vmatpush1.bf16.msra.mxu0 0
    %268 = vmatprep.subr.bf16.mxu0 0
    %269 = vmatpush1.bf16.msra.mxu0 0
    %270 = vmatprep.mubr.bf16.mxu0 0
    %271 = vmatmul.mubr.bf16.gmra.mrb[0].mxu0 %v236
    %v272 = vpop.f32.mrb[0].mxu0
    %v273 = vadd.f32 %v117, %v272
    %v274 = vpop.f32.mrb[0].mxu0
    %v275 = vadd.f32 %v121, %v274
    %v276 = vpop.f32.mrb[0].mxu0
    %v277 = vpop.f32.mrb[0].mxu0
    %278 = vdwg.mxu0
    %279 = vmatprep.subr.bf16.mxu0 %v205
    %280 = vmatpush1.bf16.msra.mxu0 %v204
    %281 = vmatprep.subr.bf16.mxu0 %v213
    %282 = vmatpush1.bf16.msra.mxu0 %v212
    %283 = vmatprep.subr.bf16.mxu0 0
    %284 = vmatpush1.bf16.msra.mxu0 0
    %285 = vmatprep.subr.bf16.mxu0 0
    %286 = vmatpush1.bf16.msra.mxu0 0
    %287 = vmatprep.subr.bf16.mxu0 0
    %288 = vmatpush1.bf16.msra.mxu0 0
    %289 = vmatprep.subr.bf16.mxu0 0
    %290 = vmatpush1.bf16.msra.mxu0 0
    %291 = vmatprep.subr.bf16.mxu0 0
    %292 = vmatpush1.bf16.msra.mxu0 0
    %293 = vmatprep.subr.bf16.mxu0 0
    %294 = vmatpush1.bf16.msra.mxu0 0
    %295 = vmatprep.subr.bf16.mxu0 0
    %296 = vmatpush1.bf16.msra.mxu0 0
    %297 = vmatprep.subr.bf16.mxu0 0
    %298 = vmatpush1.bf16.msra.mxu0 0
    %299 = vmatprep.subr.bf16.mxu0 0
    %300 = vmatpush1.bf16.msra.mxu0 0
    %301 = vmatprep.subr.bf16.mxu0 0
    %302 = vmatpush1.bf16.msra.mxu0 0
    %303 = vmatprep.subr.bf16.mxu0 0
    %304 = vmatpush1.bf16.msra.mxu0 0
    %305 = vmatprep.subr.bf16.mxu0 0
    %306 = vmatpush1.bf16.msra.mxu0 0
    %307 = vmatprep.subr.bf16.mxu0 0
    %308 = vmatpush1.bf16.msra.mxu0 0
    %309 = vmatprep.subr.bf16.mxu0 0
    %310 = vmatpush1.bf16.msra.mxu0 0
    %311 = vmatprep.mubr.bf16.mxu0 0
    %312 = vmatmul.mubr.bf16.gmra.mrb[0].mxu0 %v236
    %v313 = vpop.f32.mrb[0].mxu0
    %v314 = vadd.f32 %v125, %v313
    %v315 = vpop.f32.mrb[0].mxu0
    %v316 = vadd.f32 %v129, %v315
    %v317 = vpop.f32.mrb[0].mxu0
    %v318 = vpop.f32.mrb[0].mxu0
    %319 = vdwg.mxu0
    %320 = vmatprep.subr.bf16.mxu0 %v207
    %321 = vmatpush1.bf16.msra.mxu0 %v206
    %322 = vmatprep.subr.bf16.mxu0 %v215
    %323 = vmatpush1.bf16.msra.mxu0 %v214
    %324 = vmatprep.subr.bf16.mxu0 0
    %325 = vmatpush1.bf16.msra.mxu0 0
    %326 = vmatprep.subr.bf16.mxu0 0
    %327 = vmatpush1.bf16.msra.mxu0 0
    %328 = vmatprep.subr.bf16.mxu0 0
    %329 = vmatpush1.bf16.msra.mxu0 0
    %330 = vmatprep.subr.bf16.mxu0 0
    %331 = vmatpush1.bf16.msra.mxu0 0
    %332 = vmatprep.subr.bf16.mxu0 0
    %333 = vmatpush1.bf16.msra.mxu0 0
    %334 = vmatprep.subr.bf16.mxu0 0
    %335 = vmatpush1.bf16.msra.mxu0 0
    %336 = vmatprep.subr.bf16.mxu0 0
    %337 = vmatpush1.bf16.msra.mxu0 0
    %338 = vmatprep.subr.bf16.mxu0 0
    %339 = vmatpush1.bf16.msra.mxu0 0
    %340 = vmatprep.subr.bf16.mxu0 0
    %341 = vmatpush1.bf16.msra.mxu0 0
    %342 = vmatprep.subr.bf16.mxu0 0
    %343 = vmatpush1.bf16.msra.mxu0 0
    %344 = vmatprep.subr.bf16.mxu0 0
    %345 = vmatpush1.bf16.msra.mxu0 0
    %346 = vmatprep.subr.bf16.mxu0 0
    %347 = vmatpush1.bf16.msra.mxu0 0
    %348 = vmatprep.subr.bf16.mxu0 0
    %349 = vmatpush1.bf16.msra.mxu0 0
    %350 = vmatprep.subr.bf16.mxu0 0
    %351 = vmatpush1.bf16.msra.mxu0 0
    %352 = vmatprep.mubr.bf16.mxu0 0
    %353 = vmatmul.mubr.bf16.gmra.mrb[0].mxu0 %v236
    %v354 = vpop.f32.mrb[0].mxu0
    %v355 = vadd.f32 %v133, %v354
    %v356 = vpop.f32.mrb[0].mxu0
    %v357 = vadd.f32 %v137, %v356
    %v358 = vpop.f32.mrb[0].mxu0
    %v359 = vpop.f32.mrb[0].mxu0
    %360 = vdwg.mxu0
    %361 = vmatprep.subr.bf16.mxu0 %v209
    %362 = vmatpush1.bf16.msra.mxu0 %v208
    %363 = vmatprep.subr.bf16.mxu0 %v217
    %364 = vmatpush1.bf16.msra.mxu0 %v216
    %365 = vmatprep.subr.bf16.mxu0 0
    %366 = vmatpush1.bf16.msra.mxu0 0
    %367 = vmatprep.subr.bf16.mxu0 0
    %368 = vmatpush1.bf16.msra.mxu0 0
    %369 = vmatprep.subr.bf16.mxu0 0
    %370 = vmatpush1.bf16.msra.mxu0 0
    %371 = vmatprep.subr.bf16.mxu0 0
    %372 = vmatpush1.bf16.msra.mxu0 0
    %373 = vmatprep.subr.bf16.mxu0 0
    %374 = vmatpush1.bf16.msra.mxu0 0
    %375 = vmatprep.subr.bf16.mxu0 0
    %376 = vmatpush1.bf16.msra.mxu0 0
    %377 = vmatprep.subr.bf16.mxu0 0
    %378 = vmatpush1.bf16.msra.mxu0 0
    %379 = vmatprep.subr.bf16.mxu0 0
    %380 = vmatpush1.bf16.msra.mxu0 0
    %381 = vmatprep.subr.bf16.mxu0 0
    %382 = vmatpush1.bf16.msra.mxu0 0
    %383 = vmatprep.subr.bf16.mxu0 0
    %384 = vmatpush1.bf16.msra.mxu0 0
    %385 = vmatprep.subr.bf16.mxu0 0
    %386 = vmatpush1.bf16.msra.mxu0 0
    %387 = vmatprep.subr.bf16.mxu0 0
    %388 = vmatpush1.bf16.msra.mxu0 0
    %389 = vmatprep.subr.bf16.mxu0 0
    %390 = vmatpush1.bf16.msra.mxu0 0
    %391 = vmatprep.subr.bf16.mxu0 0
    %392 = vmatpush1.bf16.msra.mxu0 0
    %393 = vmatprep.mubr.bf16.mxu0 0
    %394 = vmatmul.mubr.bf16.gmra.mrb[0].mxu0 %v236
    %v395 = vpop.f32.mrb[0].mxu0
    %v396 = vadd.f32 %v141, %v395
    %v397 = vpop.f32.mrb[0].mxu0
    %v398 = vadd.f32 %v145, %v397
    %v399 = vpop.f32.mrb[0].mxu0
    %v400 = vpop.f32.mrb[0].mxu0
    %401 = vdwg.mxu0
    %v402 = vmax.f32 %v273, 0.0
    %v403 = vmax.f32 %v275, 0.0
    %v404 = vmax.f32 %v314, 0.0
    %v405 = vmax.f32 %v316, 0.0
    %v406 = vmax.f32 %v355, 0.0
    %v407 = vmax.f32 %v357, 0.0
    %v408 = vmax.f32 %v396, 0.0
    %v409 = vmax.f32 %v398, 0.0
    %v410 = vpack.c.bf16 %v402, %v402
    %v411 = vpack.c.bf16 %v403, %v403
    %v412 = vpack.c.bf16 %v404, %v404
    %v413 = vpack.c.bf16 %v405, %v405
    %v414 = vpack.c.bf16 %v406, %v406
    %v415 = vpack.c.bf16 %v407, %v407
    %v416 = vpack.c.bf16 %v408, %v408
    %v417 = vpack.c.bf16 %v409, %v409
    %v418 = vld [vmem:[#allocation5] sm:$0xff]
    %v419 = vld [vmem:[#allocation5 + $0x8] sm:$0xff]
    %v420 = vld [vmem:[#allocation5 + $0x10] sm:$0xff]
    %v421 = vld [vmem:[#allocation5 + $0x18] sm:$0xff]
    %v422 = vld [vmem:[#allocation5 + $0x20] sm:$0xff]
    %v423 = vld [vmem:[#allocation5 + $0x28] sm:$0xff]
    %v424 = vld [vmem:[#allocation5 + $0x30] sm:$0xff]
    %v425 = vld [vmem:[#allocation5 + $0x38] sm:$0xff]
    %v426 = vld [vmem:[#allocation5 + $0x40] sm:$0xff]
    %v427 = vld [vmem:[#allocation5 + $0x48] sm:$0xff]
    %v428 = vld [vmem:[#allocation5 + $0x50] sm:$0xff]
    %v429 = vld [vmem:[#allocation5 + $0x58] sm:$0xff]
    %v430 = vld [vmem:[#allocation5 + $0x60] sm:$0xff]
    %v431 = vld [vmem:[#allocation5 + $0x68] sm:$0xff]
    %v432 = vld [vmem:[#allocation5 + $0x70] sm:$0xff]
    %v433 = vld [vmem:[#allocation5 + $0x78] sm:$0xff]
    %v434 = vld [vmem:[#allocation5 + $0x80] sm:$0xff]
    %v435 = vld [vmem:[#allocation5 + $0x88] sm:$0xff]
    %v436 = vld [vmem:[#allocation5 + $0x90] sm:$0xff]
    %v437 = vld [vmem:[#allocation5 + $0x98] sm:$0xff]
    %v438 = vld [vmem:[#allocation5 + $0xa0] sm:$0xff]
    %v439 = vld [vmem:[#allocation5 + $0xa8] sm:$0xff]
    %v440 = vld [vmem:[#allocation5 + $0xb0] sm:$0xff]
    %v441 = vld [vmem:[#allocation5 + $0xb8] sm:$0xff]
    %v442 = vld [vmem:[#allocation5 + $0xc0] sm:$0xff]
    %v443 = vld [vmem:[#allocation5 + $0xc8] sm:$0xff]
    %v444 = vld [vmem:[#allocation5 + $0xd0] sm:$0xff]
    %v445 = vld [vmem:[#allocation5 + $0xd8] sm:$0xff]
    %v446 = vld [vmem:[#allocation5 + $0xe0] sm:$0xff]
    %v447 = vld [vmem:[#allocation5 + $0xe8] sm:$0xff]
    %v448 = vld [vmem:[#allocation5 + $0xf0] sm:$0xff]
    %v449 = vld [vmem:[#allocation5 + $0xf8] sm:$0xff]
    %v450 = vld [vmem:[#allocation5 + $0x100] sm:$0xff]
    %v451 = vld [vmem:[#allocation5 + $0x108] sm:$0xff]
    %v452 = vld [vmem:[#allocation5 + $0x110] sm:$0xff]
    %v453 = vld [vmem:[#allocation5 + $0x118] sm:$0xff]
    %v454 = vld [vmem:[#allocation5 + $0x120] sm:$0xff]
    %v455 = vld [vmem:[#allocation5 + $0x128] sm:$0xff]
    %v456 = vld [vmem:[#allocation5 + $0x130] sm:$0xff]
    %v457 = vld [vmem:[#allocation5 + $0x138] sm:$0xff]
    %v458 = vld [vmem:[#allocation5 + $0x140] sm:$0xff]
    %v459 = vld [vmem:[#allocation5 + $0x148] sm:$0xff]
    %v460 = vld [vmem:[#allocation5 + $0x150] sm:$0xff]
    %v461 = vld [vmem:[#allocation5 + $0x158] sm:$0xff]
    %v462 = vld [vmem:[#allocation5 + $0x160] sm:$0xff]
    %v463 = vld [vmem:[#allocation5 + $0x168] sm:$0xff]
    %v464 = vld [vmem:[#allocation5 + $0x170] sm:$0xff]
    %v465 = vld [vmem:[#allocation5 + $0x178] sm:$0xff]
    %v466 = vld [vmem:[#allocation5 + $0x180] sm:$0xff]
    %v467 = vld [vmem:[#allocation5 + $0x188] sm:$0xff]
    %v468 = vld [vmem:[#allocation5 + $0x190] sm:$0xff]
    %v469 = vld [vmem:[#allocation5 + $0x198] sm:$0xff]
    %v470 = vld [vmem:[#allocation5 + $0x1a0] sm:$0xff]
    %v471 = vld [vmem:[#allocation5 + $0x1a8] sm:$0xff]
    %v472 = vld [vmem:[#allocation5 + $0x1b0] sm:$0xff]
    %v473 = vld [vmem:[#allocation5 + $0x1b8] sm:$0xff]
    %v474 = vld [vmem:[#allocation5 + $0x1c0] sm:$0xff]
    %v475 = vld [vmem:[#allocation5 + $0x1c8] sm:$0xff]
    %v476 = vld [vmem:[#allocation5 + $0x1d0] sm:$0xff]
    %v477 = vld [vmem:[#allocation5 + $0x1d8] sm:$0xff]
    %v478 = vld [vmem:[#allocation5 + $0x1e0] sm:$0xff]
    %v479 = vld [vmem:[#allocation5 + $0x1e8] sm:$0xff]
    %v480 = vld [vmem:[#allocation5 + $0x1f0] sm:$0xff]
    %v481 = vld [vmem:[#allocation5 + $0x1f8] sm:$0xff]
    %v482 = vld [vmem:[#allocation5 + $0x200] sm:$0xff]
    %v483 = vld [vmem:[#allocation5 + $0x208] sm:$0xff]
    %v484 = vld [vmem:[#allocation5 + $0x210] sm:$0xff]
    %v485 = vld [vmem:[#allocation5 + $0x218] sm:$0xff]
    %v486 = vld [vmem:[#allocation5 + $0x220] sm:$0xff]
    %v487 = vld [vmem:[#allocation5 + $0x228] sm:$0xff]
    %v488 = vld [vmem:[#allocation5 + $0x230] sm:$0xff]
    %v489 = vld [vmem:[#allocation5 + $0x238] sm:$0xff]
    %v490 = vld [vmem:[#allocation5 + $0x240] sm:$0xff]
    %v491 = vld [vmem:[#allocation5 + $0x248] sm:$0xff]
    %v492 = vld [vmem:[#allocation5 + $0x250] sm:$0xff]
    %v493 = vld [vmem:[#allocation5 + $0x258] sm:$0xff]
    %v494 = vld [vmem:[#allocation5 + $0x260] sm:$0xff]
    %v495 = vld [vmem:[#allocation5 + $0x268] sm:$0xff]
    %v496 = vld [vmem:[#allocation5 + $0x270] sm:$0xff]
    %v497 = vld [vmem:[#allocation5 + $0x278] sm:$0xff]
    %v498 = vld [vmem:[#allocation5 + $0x280] sm:$0xff]
    %v499 = vld [vmem:[#allocation5 + $0x288] sm:$0xff]
    %v500 = vld [vmem:[#allocation5 + $0x290] sm:$0xff]
    %v501 = vld [vmem:[#allocation5 + $0x298] sm:$0xff]
    %v502 = vld [vmem:[#allocation5 + $0x2a0] sm:$0xff]
    %v503 = vld [vmem:[#allocation5 + $0x2a8] sm:$0xff]
    %v504 = vld [vmem:[#allocation5 + $0x2b0] sm:$0xff]
    %v505 = vld [vmem:[#allocation5 + $0x2b8] sm:$0xff]
    %v506 = vld [vmem:[#allocation5 + $0x2c0] sm:$0xff]
    %v507 = vld [vmem:[#allocation5 + $0x2c8] sm:$0xff]
    %v508 = vld [vmem:[#allocation5 + $0x2d0] sm:$0xff]
    %v509 = vld [vmem:[#allocation5 + $0x2d8] sm:$0xff]
    %v510 = vld [vmem:[#allocation5 + $0x2e0] sm:$0xff]
    %v511 = vld [vmem:[#allocation5 + $0x2e8] sm:$0xff]
    %v512 = vld [vmem:[#allocation5 + $0x2f0] sm:$0xff]
    %v513 = vld [vmem:[#allocation5 + $0x2f8] sm:$0xff]
    %v514 = vld [vmem:[#allocation5 + $0x300] sm:$0xff]
    %v515 = vld [vmem:[#allocation5 + $0x308] sm:$0xff]
    %v516 = vld [vmem:[#allocation5 + $0x310] sm:$0xff]
    %v517 = vld [vmem:[#allocation5 + $0x318] sm:$0xff]
    %v518 = vld [vmem:[#allocation5 + $0x320] sm:$0xff]
    %v519 = vld [vmem:[#allocation5 + $0x328] sm:$0xff]
    %v520 = vld [vmem:[#allocation5 + $0x330] sm:$0xff]
    %v521 = vld [vmem:[#allocation5 + $0x338] sm:$0xff]
    %v522 = vld [vmem:[#allocation5 + $0x340] sm:$0xff]
    %v523 = vld [vmem:[#allocation5 + $0x348] sm:$0xff]
    %v524 = vld [vmem:[#allocation5 + $0x350] sm:$0xff]
    %v525 = vld [vmem:[#allocation5 + $0x358] sm:$0xff]
    %v526 = vld [vmem:[#allocation5 + $0x360] sm:$0xff]
    %v527 = vld [vmem:[#allocation5 + $0x368] sm:$0xff]
    %v528 = vld [vmem:[#allocation5 + $0x370] sm:$0xff]
    %v529 = vld [vmem:[#allocation5 + $0x378] sm:$0xff]
    %v530 = vld [vmem:[#allocation5 + $0x380] sm:$0xff]
    %v531 = vld [vmem:[#allocation5 + $0x388] sm:$0xff]
    %v532 = vld [vmem:[#allocation5 + $0x390] sm:$0xff]
    %v533 = vld [vmem:[#allocation5 + $0x398] sm:$0xff]
    %v534 = vld [vmem:[#allocation5 + $0x3a0] sm:$0xff]
    %v535 = vld [vmem:[#allocation5 + $0x3a8] sm:$0xff]
    %v536 = vld [vmem:[#allocation5 + $0x3b0] sm:$0xff]
    %v537 = vld [vmem:[#allocation5 + $0x3b8] sm:$0xff]
    %v538 = vld [vmem:[#allocation5 + $0x3c0] sm:$0xff]
    %v539 = vld [vmem:[#allocation5 + $0x3c8] sm:$0xff]
    %v540 = vld [vmem:[#allocation5 + $0x3d0] sm:$0xff]
    %v541 = vld [vmem:[#allocation5 + $0x3d8] sm:$0xff]
    %v542 = vld [vmem:[#allocation5 + $0x3e0] sm:$0xff]
    %v543 = vld [vmem:[#allocation5 + $0x3e8] sm:$0xff]
    %v544 = vld [vmem:[#allocation5 + $0x3f0] sm:$0xff]
    %v545 = vld [vmem:[#allocation5 + $0x3f8] sm:$0xff]
    %v546 = vld [vmem:[%s4] sm:$0x3]
    %v548 = vlaneseq
    %v549 = vshrl.u32 %v548, 7
    %v550 = vsub.s32 0, %v549
    %v551 = vrot.slane %v546, %v550
    %v552 = vlaneseq
    %v553 = vshrl.u32 %v552, 7
    %v554 = vsub.s32 1, %v553
    %v555 = vrot.slane %v546, %v554
    %v686 = vunpack.c.l.b16 %v418
    %v687 = vunpack.c.h.b16 %v418
    %v688 = vunpack.c.l.b16 %v419
    %v689 = vunpack.c.h.b16 %v419
    %v690 = vunpack.c.l.b16 %v420
    %v691 = vunpack.c.h.b16 %v420
    %v692 = vunpack.c.l.b16 %v421
    %v693 = vunpack.c.h.b16 %v421
    %v694 = vunpack.c.l.b16 %v422
    %v695 = vunpack.c.h.b16 %v422
    %v696 = vunpack.c.l.b16 %v423
    %v697 = vunpack.c.h.b16 %v423
    %v698 = vunpack.c.l.b16 %v424
    %v699 = vunpack.c.h.b16 %v424
    %v700 = vunpack.c.l.b16 %v425
    %v701 = vunpack.c.h.b16 %v425
    %v702 = vunpack.c.l.b16 %v426
    %v703 = vunpack.c.h.b16 %v426
    %v704 = vunpack.c.l.b16 %v427
    %v705 = vunpack.c.h.b16 %v427
    %v706 = vunpack.c.l.b16 %v428
    %v707 = vunpack.c.h.b16 %v428
    %v708 = vunpack.c.l.b16 %v429
    %v709 = vunpack.c.h.b16 %v429
    %v710 = vunpack.c.l.b16 %v430
    %v711 = vunpack.c.h.b16 %v430
    %v712 = vunpack.c.l.b16 %v431
    %v713 = vunpack.c.h.b16 %v431
    %v714 = vunpack.c.l.b16 %v432
    %v715 = vunpack.c.h.b16 %v432
    %v716 = vunpack.c.l.b16 %v433
    %v717 = vunpack.c.h.b16 %v433
    %v718 = vunpack.c.l.b16 %v434
    %v719 = vunpack.c.h.b16 %v434
    %v720 = vunpack.c.l.b16 %v435
    %v721 = vunpack.c.h.b16 %v435
    %v722 = vunpack.c.l.b16 %v436
    %v723 = vunpack.c.h.b16 %v436
    %v724 = vunpack.c.l.b16 %v437
    %v725 = vunpack.c.h.b16 %v437
    %v726 = vunpack.c.l.b16 %v438
    %v727 = vunpack.c.h.b16 %v438
    %v728 = vunpack.c.l.b16 %v439
    %v729 = vunpack.c.h.b16 %v439
    %v730 = vunpack.c.l.b16 %v440
    %v731 = vunpack.c.h.b16 %v440
    %v732 = vunpack.c.l.b16 %v441
    %v733 = vunpack.c.h.b16 %v441
    %v734 = vunpack.c.l.b16 %v442
    %v735 = vunpack.c.h.b16 %v442
    %v736 = vunpack.c.l.b16 %v443
    %v737 = vunpack.c.h.b16 %v443
    %v738 = vunpack.c.l.b16 %v444
    %v739 = vunpack.c.h.b16 %v444
    %v740 = vunpack.c.l.b16 %v445
    %v741 = vunpack.c.h.b16 %v445
    %v742 = vunpack.c.l.b16 %v446
    %v743 = vunpack.c.h.b16 %v446
    %v744 = vunpack.c.l.b16 %v447
    %v745 = vunpack.c.h.b16 %v447
    %v746 = vunpack.c.l.b16 %v448
    %v747 = vunpack.c.h.b16 %v448
    %v748 = vunpack.c.l.b16 %v449
    %v749 = vunpack.c.h.b16 %v449
    %v750 = vunpack.c.l.b16 %v450
    %v751 = vunpack.c.h.b16 %v450
    %v752 = vunpack.c.l.b16 %v451
    %v753 = vunpack.c.h.b16 %v451
    %v754 = vunpack.c.l.b16 %v452
    %v755 = vunpack.c.h.b16 %v452
    %v756 = vunpack.c.l.b16 %v453
    %v757 = vunpack.c.h.b16 %v453
    %v758 = vunpack.c.l.b16 %v454
    %v759 = vunpack.c.h.b16 %v454
    %v760 = vunpack.c.l.b16 %v455
    %v761 = vunpack.c.h.b16 %v455
    %v762 = vunpack.c.l.b16 %v456
    %v763 = vunpack.c.h.b16 %v456
    %v764 = vunpack.c.l.b16 %v457
    %v765 = vunpack.c.h.b16 %v457
    %v766 = vunpack.c.l.b16 %v458
    %v767 = vunpack.c.h.b16 %v458
    %v768 = vunpack.c.l.b16 %v459
    %v769 = vunpack.c.h.b16 %v459
    %v770 = vunpack.c.l.b16 %v460
    %v771 = vunpack.c.h.b16 %v460
    %v772 = vunpack.c.l.b16 %v461
    %v773 = vunpack.c.h.b16 %v461
    %v774 = vunpack.c.l.b16 %v462
    %v775 = vunpack.c.h.b16 %v462
    %v776 = vunpack.c.l.b16 %v463
    %v777 = vunpack.c.h.b16 %v463
    %v778 = vunpack.c.l.b16 %v464
    %v779 = vunpack.c.h.b16 %v464
    %v780 = vunpack.c.l.b16 %v465
    %v781 = vunpack.c.h.b16 %v465
    %v782 = vunpack.c.l.b16 %v466
    %v783 = vunpack.c.h.b16 %v466
    %v784 = vunpack.c.l.b16 %v467
    %v785 = vunpack.c.h.b16 %v467
    %v786 = vunpack.c.l.b16 %v468
    %v787 = vunpack.c.h.b16 %v468
    %v788 = vunpack.c.l.b16 %v469
    %v789 = vunpack.c.h.b16 %v469
    %v790 = vunpack.c.l.b16 %v470
    %v791 = vunpack.c.h.b16 %v470
    %v792 = vunpack.c.l.b16 %v471
    %v793 = vunpack.c.h.b16 %v471
    %v794 = vunpack.c.l.b16 %v472
    %v795 = vunpack.c.h.b16 %v472
    %v796 = vunpack.c.l.b16 %v473
    %v797 = vunpack.c.h.b16 %v473
    %v798 = vunpack.c.l.b16 %v474
    %v799 = vunpack.c.h.b16 %v474
    %v800 = vunpack.c.l.b16 %v475
    %v801 = vunpack.c.h.b16 %v475
    %v802 = vunpack.c.l.b16 %v476
    %v803 = vunpack.c.h.b16 %v476
    %v804 = vunpack.c.l.b16 %v477
    %v805 = vunpack.c.h.b16 %v477
    %v806 = vunpack.c.l.b16 %v478
    %v807 = vunpack.c.h.b16 %v478
    %v808 = vunpack.c.l.b16 %v479
    %v809 = vunpack.c.h.b16 %v479
    %v810 = vunpack.c.l.b16 %v480
    %v811 = vunpack.c.h.b16 %v480
    %v812 = vunpack.c.l.b16 %v481
    %v813 = vunpack.c.h.b16 %v481
    %v814 = vunpack.c.l.b16 %v482
    %v815 = vunpack.c.h.b16 %v482
    %v816 = vunpack.c.l.b16 %v483
    %v817 = vunpack.c.h.b16 %v483
    %v818 = vunpack.c.l.b16 %v484
    %v819 = vunpack.c.h.b16 %v484
    %v820 = vunpack.c.l.b16 %v485
    %v821 = vunpack.c.h.b16 %v485
    %v822 = vunpack.c.l.b16 %v486
    %v823 = vunpack.c.h.b16 %v486
    %v824 = vunpack.c.l.b16 %v487
    %v825 = vunpack.c.h.b16 %v487
    %v826 = vunpack.c.l.b16 %v488
    %v827 = vunpack.c.h.b16 %v488
    %v828 = vunpack.c.l.b16 %v489
    %v829 = vunpack.c.h.b16 %v489
    %v830 = vunpack.c.l.b16 %v490
    %v831 = vunpack.c.h.b16 %v490
    %v832 = vunpack.c.l.b16 %v491
    %v833 = vunpack.c.h.b16 %v491
    %v834 = vunpack.c.l.b16 %v492
    %v835 = vunpack.c.h.b16 %v492
    %v836 = vunpack.c.l.b16 %v493
    %v837 = vunpack.c.h.b16 %v493
    %v838 = vunpack.c.l.b16 %v494
    %v839 = vunpack.c.h.b16 %v494
    %v840 = vunpack.c.l.b16 %v495
    %v841 = vunpack.c.h.b16 %v495
    %v842 = vunpack.c.l.b16 %v496
    %v843 = vunpack.c.h.b16 %v496
    %v844 = vunpack.c.l.b16 %v497
    %v845 = vunpack.c.h.b16 %v497
    %v846 = vunpack.c.l.b16 %v498
    %v847 = vunpack.c.h.b16 %v498
    %v848 = vunpack.c.l.b16 %v499
    %v849 = vunpack.c.h.b16 %v499
    %v850 = vunpack.c.l.b16 %v500
    %v851 = vunpack.c.h.b16 %v500
    %v852 = vunpack.c.l.b16 %v501
    %v853 = vunpack.c.h.b16 %v501
    %v854 = vunpack.c.l.b16 %v502
    %v855 = vunpack.c.h.b16 %v502
    %v856 = vunpack.c.l.b16 %v503
    %v857 = vunpack.c.h.b16 %v503
    %v858 = vunpack.c.l.b16 %v504
    %v859 = vunpack.c.h.b16 %v504
    %v860 = vunpack.c.l.b16 %v505
    %v861 = vunpack.c.h.b16 %v505
    %v862 = vunpack.c.l.b16 %v506
    %v863 = vunpack.c.h.b16 %v506
    %v864 = vunpack.c.l.b16 %v507
    %v865 = vunpack.c.h.b16 %v507
    %v866 = vunpack.c.l.b16 %v508
    %v867 = vunpack.c.h.b16 %v508
    %v868 = vunpack.c.l.b16 %v509
    %v869 = vunpack.c.h.b16 %v509
    %v870 = vunpack.c.l.b16 %v510
    %v871 = vunpack.c.h.b16 %v510
    %v872 = vunpack.c.l.b16 %v511
    %v873 = vunpack.c.h.b16 %v511
    %v874 = vunpack.c.l.b16 %v512
    %v875 = vunpack.c.h.b16 %v512
    %v876 = vunpack.c.l.b16 %v513
    %v877 = vunpack.c.h.b16 %v513
    %v878 = vunpack.c.l.b16 %v514
    %v879 = vunpack.c.h.b16 %v514
    %v880 = vunpack.c.l.b16 %v515
    %v881 = vunpack.c.h.b16 %v515
    %v882 = vunpack.c.l.b16 %v516
    %v883 = vunpack.c.h.b16 %v516
    %v884 = vunpack.c.l.b16 %v517
    %v885 = vunpack.c.h.b16 %v517
    %v886 = vunpack.c.l.b16 %v518
    %v887 = vunpack.c.h.b16 %v518
    %v888 = vunpack.c.l.b16 %v519
    %v889 = vunpack.c.h.b16 %v519
    %v890 = vunpack.c.l.b16 %v520
    %v891 = vunpack.c.h.b16 %v520
    %v892 = vunpack.c.l.b16 %v521
    %v893 = vunpack.c.h.b16 %v521
    %v894 = vunpack.c.l.b16 %v522
    %v895 = vunpack.c.h.b16 %v522
    %v896 = vunpack.c.l.b16 %v523
    %v897 = vunpack.c.h.b16 %v523
    %v898 = vunpack.c.l.b16 %v524
    %v899 = vunpack.c.h.b16 %v524
    %v900 = vunpack.c.l.b16 %v525
    %v901 = vunpack.c.h.b16 %v525
    %v902 = vunpack.c.l.b16 %v526
    %v903 = vunpack.c.h.b16 %v526
    %v904 = vunpack.c.l.b16 %v527
    %v905 = vunpack.c.h.b16 %v527
    %v906 = vunpack.c.l.b16 %v528
    %v907 = vunpack.c.h.b16 %v528
    %v908 = vunpack.c.l.b16 %v529
    %v909 = vunpack.c.h.b16 %v529
    %v910 = vunpack.c.l.b16 %v530
    %v911 = vunpack.c.h.b16 %v530
    %v912 = vunpack.c.l.b16 %v531
    %v913 = vunpack.c.h.b16 %v531
    %v914 = vunpack.c.l.b16 %v532
    %v915 = vunpack.c.h.b16 %v532
    %v916 = vunpack.c.l.b16 %v533
    %v917 = vunpack.c.h.b16 %v533
    %v918 = vunpack.c.l.b16 %v534
    %v919 = vunpack.c.h.b16 %v534
    %v920 = vunpack.c.l.b16 %v535
    %v921 = vunpack.c.h.b16 %v535
    %v922 = vunpack.c.l.b16 %v536
    %v923 = vunpack.c.h.b16 %v536
    %v924 = vunpack.c.l.b16 %v537
    %v925 = vunpack.c.h.b16 %v537
    %v926 = vunpack.c.l.b16 %v538
    %v927 = vunpack.c.h.b16 %v538
    %v928 = vunpack.c.l.b16 %v539
    %v929 = vunpack.c.h.b16 %v539
    %v930 = vunpack.c.l.b16 %v540
    %v931 = vunpack.c.h.b16 %v540
    %v932 = vunpack.c.l.b16 %v541
    %v933 = vunpack.c.h.b16 %v541
    %v934 = vunpack.c.l.b16 %v542
    %v935 = vunpack.c.h.b16 %v542
    %v936 = vunpack.c.l.b16 %v543
    %v937 = vunpack.c.h.b16 %v543
    %v938 = vunpack.c.l.b16 %v544
    %v939 = vunpack.c.h.b16 %v544
    %v940 = vunpack.c.l.b16 %v545
    %v941 = vunpack.c.h.b16 %v545
    %v942 = vpack.c.b16 %v688, %v686
    %v943 = vpack.c.b16 %v689, %v687
    %v944 = vpack.c.b16 %v692, %v690
    %v945 = vpack.c.b16 %v693, %v691
    %v946 = vpack.c.b16 %v696, %v694
    %v947 = vpack.c.b16 %v697, %v695
    %v948 = vpack.c.b16 %v700, %v698
    %v949 = vpack.c.b16 %v701, %v699
    %v950 = vpack.c.b16 %v704, %v702
    %v951 = vpack.c.b16 %v705, %v703
    %v952 = vpack.c.b16 %v708, %v706
    %v953 = vpack.c.b16 %v709, %v707
    %v954 = vpack.c.b16 %v712, %v710
    %v955 = vpack.c.b16 %v713, %v711
    %v956 = vpack.c.b16 %v716, %v714
    %v957 = vpack.c.b16 %v717, %v715
    %v958 = vpack.c.b16 %v720, %v718
    %v959 = vpack.c.b16 %v721, %v719
    %v960 = vpack.c.b16 %v724, %v722
    %v961 = vpack.c.b16 %v725, %v723
    %v962 = vpack.c.b16 %v728, %v726
    %v963 = vpack.c.b16 %v729, %v727
    %v964 = vpack.c.b16 %v732, %v730
    %v965 = vpack.c.b16 %v733, %v731
    %v966 = vpack.c.b16 %v736, %v734
    %v967 = vpack.c.b16 %v737, %v735
    %v968 = vpack.c.b16 %v740, %v738
    %v969 = vpack.c.b16 %v741, %v739
    %v970 = vpack.c.b16 %v744, %v742
    %v971 = vpack.c.b16 %v745, %v743
    %v972 = vpack.c.b16 %v748, %v746
    %v973 = vpack.c.b16 %v749, %v747
    %v974 = vpack.c.b16 %v752, %v750
    %v975 = vpack.c.b16 %v753, %v751
    %v976 = vpack.c.b16 %v756, %v754
    %v977 = vpack.c.b16 %v757, %v755
    %v978 = vpack.c.b16 %v760, %v758
    %v979 = vpack.c.b16 %v761, %v759
    %v980 = vpack.c.b16 %v764, %v762
    %v981 = vpack.c.b16 %v765, %v763
    %v982 = vpack.c.b16 %v768, %v766
    %v983 = vpack.c.b16 %v769, %v767
    %v984 = vpack.c.b16 %v772, %v770
    %v985 = vpack.c.b16 %v773, %v771
    %v986 = vpack.c.b16 %v776, %v774
    %v987 = vpack.c.b16 %v777, %v775
    %v988 = vpack.c.b16 %v780, %v778
    %v989 = vpack.c.b16 %v781, %v779
    %v990 = vpack.c.b16 %v784, %v782
    %v991 = vpack.c.b16 %v785, %v783
    %v992 = vpack.c.b16 %v788, %v786
    %v993 = vpack.c.b16 %v789, %v787
    %v994 = vpack.c.b16 %v792, %v790
    %v995 = vpack.c.b16 %v793, %v791
    %v996 = vpack.c.b16 %v796, %v794
    %v997 = vpack.c.b16 %v797, %v795
    %v998 = vpack.c.b16 %v800, %v798
    %v999 = vpack.c.b16 %v801, %v799
    %v1000 = vpack.c.b16 %v804, %v802
    %v1001 = vpack.c.b16 %v805, %v803
    %v1002 = vpack.c.b16 %v808, %v806
    %v1003 = vpack.c.b16 %v809, %v807
    %v1004 = vpack.c.b16 %v812, %v810
    %v1005 = vpack.c.b16 %v813, %v811
    %v1006 = vpack.c.b16 %v816, %v814
    %v1007 = vpack.c.b16 %v817, %v815
    %v1008 = vpack.c.b16 %v820, %v818
    %v1009 = vpack.c.b16 %v821, %v819
    %v1010 = vpack.c.b16 %v824, %v822
    %v1011 = vpack.c.b16 %v825, %v823
    %v1012 = vpack.c.b16 %v828, %v826
    %v1013 = vpack.c.b16 %v829, %v827
    %v1014 = vpack.c.b16 %v832, %v830
    %v1015 = vpack.c.b16 %v833, %v831
    %v1016 = vpack.c.b16 %v836, %v834
    %v1017 = vpack.c.b16 %v837, %v835
    %v1018 = vpack.c.b16 %v840, %v838
    %v1019 = vpack.c.b16 %v841, %v839
    %v1020 = vpack.c.b16 %v844, %v842
    %v1021 = vpack.c.b16 %v845, %v843
    %v1022 = vpack.c.b16 %v848, %v846
    %v1023 = vpack.c.b16 %v849, %v847
    %v1024 = vpack.c.b16 %v852, %v850
    %v1025 = vpack.c.b16 %v853, %v851
    %v1026 = vpack.c.b16 %v856, %v854
    %v1027 = vpack.c.b16 %v857, %v855
    %v1028 = vpack.c.b16 %v860, %v858
    %v1029 = vpack.c.b16 %v861, %v859
    %v1030 = vpack.c.b16 %v864, %v862
    %v1031 = vpack.c.b16 %v865, %v863
    %v1032 = vpack.c.b16 %v868, %v866
    %v1033 = vpack.c.b16 %v869, %v867
    %v1034 = vpack.c.b16 %v872, %v870
    %v1035 = vpack.c.b16 %v873, %v871
    %v1036 = vpack.c.b16 %v876, %v874
    %v1037 = vpack.c.b16 %v877, %v875
    %v1038 = vpack.c.b16 %v880, %v878
    %v1039 = vpack.c.b16 %v881, %v879
    %v1040 = vpack.c.b16 %v884, %v882
    %v1041 = vpack.c.b16 %v885, %v883
    %v1042 = vpack.c.b16 %v888, %v886
    %v1043 = vpack.c.b16 %v889, %v887
    %v1044 = vpack.c.b16 %v892, %v890
    %v1045 = vpack.c.b16 %v893, %v891
    %v1046 = vpack.c.b16 %v896, %v894
    %v1047 = vpack.c.b16 %v897, %v895
    %v1048 = vpack.c.b16 %v900, %v898
    %v1049 = vpack.c.b16 %v901, %v899
    %v1050 = vpack.c.b16 %v904, %v902
    %v1051 = vpack.c.b16 %v905, %v903
    %v1052 = vpack.c.b16 %v908, %v906
    %v1053 = vpack.c.b16 %v909, %v907
    %v1054 = vpack.c.b16 %v912, %v910
    %v1055 = vpack.c.b16 %v913, %v911
    %v1056 = vpack.c.b16 %v916, %v914
    %v1057 = vpack.c.b16 %v917, %v915
    %v1058 = vpack.c.b16 %v920, %v918
    %v1059 = vpack.c.b16 %v921, %v919
    %v1060 = vpack.c.b16 %v924, %v922
    %v1061 = vpack.c.b16 %v925, %v923
    %v1062 = vpack.c.b16 %v928, %v926
    %v1063 = vpack.c.b16 %v929, %v927
    %v1064 = vpack.c.b16 %v932, %v930
    %v1065 = vpack.c.b16 %v933, %v931
    %v1066 = vpack.c.b16 %v936, %v934
    %v1067 = vpack.c.b16 %v937, %v935
    %v1068 = vpack.c.b16 %v940, %v938
    %v1069 = vpack.c.b16 %v941, %v939
    %1198 = vmatprep.subr.bf16.mxu0 %v943
    %1199 = vmatpush1.bf16.msra.mxu0 %v942
    %1200 = vmatprep.subr.bf16.mxu0 %v945
    %1201 = vmatpush1.bf16.msra.mxu0 %v944
    %1202 = vmatprep.subr.bf16.mxu0 %v947
    %1203 = vmatpush1.bf16.msra.mxu0 %v946
    %1204 = vmatprep.subr.bf16.mxu0 %v949
    %1205 = vmatpush1.bf16.msra.mxu0 %v948
    %1206 = vmatprep.subr.bf16.mxu0 %v951
    %1207 = vmatpush1.bf16.msra.mxu0 %v950
    %1208 = vmatprep.subr.bf16.mxu0 %v953
    %1209 = vmatpush1.bf16.msra.mxu0 %v952
    %1210 = vmatprep.subr.bf16.mxu0 %v955
    %1211 = vmatpush1.bf16.msra.mxu0 %v954
    %1212 = vmatprep.subr.bf16.mxu0 %v957
    %1213 = vmatpush1.bf16.msra.mxu0 %v956
    %1214 = vmatprep.subr.bf16.mxu0 %v959
    %1215 = vmatpush1.bf16.msra.mxu0 %v958
    %1216 = vmatprep.subr.bf16.mxu0 %v961
    %1217 = vmatpush1.bf16.msra.mxu0 %v960
    %1218 = vmatprep.subr.bf16.mxu0 %v963
    %1219 = vmatpush1.bf16.msra.mxu0 %v962
    %1220 = vmatprep.subr.bf16.mxu0 %v965
    %1221 = vmatpush1.bf16.msra.mxu0 %v964
    %1222 = vmatprep.subr.bf16.mxu0 %v967
    %1223 = vmatpush1.bf16.msra.mxu0 %v966
    %1224 = vmatprep.subr.bf16.mxu0 %v969
    %1225 = vmatpush1.bf16.msra.mxu0 %v968
    %1226 = vmatprep.subr.bf16.mxu0 %v971
    %1227 = vmatpush1.bf16.msra.mxu0 %v970
    %1228 = vmatprep.subr.bf16.mxu0 %v973
    %1229 = vmatpush1.bf16.msra.mxu0 %v972
    %1230 = vmatprep.mubr.bf16.mxu0 %v411
    %1231 = vmatmul.mubr.bf16.gmra.mrb[0].mxu0 %v410
    %v1232 = vpop.f32.mrb[0].mxu0
    %v1233 = vadd.f32 %v551, %v1232
    %v1234 = vpop.f32.mrb[0].mxu0
    %v1235 = vadd.f32 %v555, %v1234
    %v1236 = vpop.f32.mrb[0].mxu0
    %v1237 = vpop.f32.mrb[0].mxu0
    %1238 = vdwg.mxu0
    %1239 = vmatprep.subr.bf16.mxu0 %v975
    %1240 = vmatpush1.bf16.msra.mxu0 %v974
    %1241 = vmatprep.subr.bf16.mxu0 %v977
    %1242 = vmatpush1.bf16.msra.mxu0 %v976
    %1243 = vmatprep.subr.bf16.mxu0 %v979
    %1244 = vmatpush1.bf16.msra.mxu0 %v978
    %1245 = vmatprep.subr.bf16.mxu0 %v981
    %1246 = vmatpush1.bf16.msra.mxu0 %v980
    %1247 = vmatprep.subr.bf16.mxu0 %v983
    %1248 = vmatpush1.bf16.msra.mxu0 %v982
    %1249 = vmatprep.subr.bf16.mxu0 %v985
    %1250 = vmatpush1.bf16.msra.mxu0 %v984
    %1251 = vmatprep.subr.bf16.mxu0 %v987
    %1252 = vmatpush1.bf16.msra.mxu0 %v986
    %1253 = vmatprep.subr.bf16.mxu0 %v989
    %1254 = vmatpush1.bf16.msra.mxu0 %v988
    %1255 = vmatprep.subr.bf16.mxu0 %v991
    %1256 = vmatpush1.bf16.msra.mxu0 %v990
    %1257 = vmatprep.subr.bf16.mxu0 %v993
    %1258 = vmatpush1.bf16.msra.mxu0 %v992
    %1259 = vmatprep.subr.bf16.mxu0 %v995
    %1260 = vmatpush1.bf16.msra.mxu0 %v994
    %1261 = vmatprep.subr.bf16.mxu0 %v997
    %1262 = vmatpush1.bf16.msra.mxu0 %v996
    %1263 = vmatprep.subr.bf16.mxu0 %v999
    %1264 = vmatpush1.bf16.msra.mxu0 %v998
    %1265 = vmatprep.subr.bf16.mxu0 %v1001
    %1266 = vmatpush1.bf16.msra.mxu0 %v1000
    %1267 = vmatprep.subr.bf16.mxu0 %v1003
    %1268 = vmatpush1.bf16.msra.mxu0 %v1002
    %1269 = vmatprep.subr.bf16.mxu0 %v1005
    %1270 = vmatpush1.bf16.msra.mxu0 %v1004
    %1271 = vmatprep.mubr.bf16.mxu0 %v413
    %1272 = vmatmul.mubr.bf16.gmra.mrb[0].mxu0 %v412
    %v1273 = vpop.f32.mrb[0].mxu0
    %v1274 = vadd.f32 %v1233, %v1273
    %v1275 = vpop.f32.mrb[0].mxu0
    %v1276 = vadd.f32 %v1235, %v1275
    %v1277 = vpop.f32.mrb[0].mxu0
    %v1278 = vpop.f32.mrb[0].mxu0
    %1279 = vdwg.mxu0
    %1280 = vmatprep.subr.bf16.mxu0 %v1007
    %1281 = vmatpush1.bf16.msra.mxu0 %v1006
    %1282 = vmatprep.subr.bf16.mxu0 %v1009
    %1283 = vmatpush1.bf16.msra.mxu0 %v1008
    %1284 = vmatprep.subr.bf16.mxu0 %v1011
    %1285 = vmatpush1.bf16.msra.mxu0 %v1010
    %1286 = vmatprep.subr.bf16.mxu0 %v1013
    %1287 = vmatpush1.bf16.msra.mxu0 %v1012
    %1288 = vmatprep.subr.bf16.mxu0 %v1015
    %1289 = vmatpush1.bf16.msra.mxu0 %v1014
    %1290 = vmatprep.subr.bf16.mxu0 %v1017
    %1291 = vmatpush1.bf16.msra.mxu0 %v1016
    %1292 = vmatprep.subr.bf16.mxu0 %v1019
    %1293 = vmatpush1.bf16.msra.mxu0 %v1018
    %1294 = vmatprep.subr.bf16.mxu0 %v1021
    %1295 = vmatpush1.bf16.msra.mxu0 %v1020
    %1296 = vmatprep.subr.bf16.mxu0 %v1023
    %1297 = vmatpush1.bf16.msra.mxu0 %v1022
    %1298 = vmatprep.subr.bf16.mxu0 %v1025
    %1299 = vmatpush1.bf16.msra.mxu0 %v1024
    %1300 = vmatprep.subr.bf16.mxu0 %v1027
    %1301 = vmatpush1.bf16.msra.mxu0 %v1026
    %1302 = vmatprep.subr.bf16.mxu0 %v1029
    %1303 = vmatpush1.bf16.msra.mxu0 %v1028
    %1304 = vmatprep.subr.bf16.mxu0 %v1031
    %1305 = vmatpush1.bf16.msra.mxu0 %v1030
    %1306 = vmatprep.subr.bf16.mxu0 %v1033
    %1307 = vmatpush1.bf16.msra.mxu0 %v1032
    %1308 = vmatprep.subr.bf16.mxu0 %v1035
    %1309 = vmatpush1.bf16.msra.mxu0 %v1034
    %1310 = vmatprep.subr.bf16.mxu0 %v1037
    %1311 = vmatpush1.bf16.msra.mxu0 %v1036
    %1312 = vmatprep.mubr.bf16.mxu0 %v415
    %1313 = vmatmul.mubr.bf16.gmra.mrb[0].mxu0 %v414
    %v1314 = vpop.f32.mrb[0].mxu0
    %v1315 = vadd.f32 %v1274, %v1314
    %v1316 = vpop.f32.mrb[0].mxu0
    %v1317 = vadd.f32 %v1276, %v1316
    %v1318 = vpop.f32.mrb[0].mxu0
    %v1319 = vpop.f32.mrb[0].mxu0
    %1320 = vdwg.mxu0
    %1321 = vmatprep.subr.bf16.mxu0 %v1039
    %1322 = vmatpush1.bf16.msra.mxu0 %v1038
    %1323 = vmatprep.subr.bf16.mxu0 %v1041
    %1324 = vmatpush1.bf16.msra.mxu0 %v1040
    %1325 = vmatprep.subr.bf16.mxu0 %v1043
    %1326 = vmatpush1.bf16.msra.mxu0 %v1042
    %1327 = vmatprep.subr.bf16.mxu0 %v1045
    %1328 = vmatpush1.bf16.msra.mxu0 %v1044
    %1329 = vmatprep.subr.bf16.mxu0 %v1047
    %1330 = vmatpush1.bf16.msra.mxu0 %v1046
    %1331 = vmatprep.subr.bf16.mxu0 %v1049
    %1332 = vmatpush1.bf16.msra.mxu0 %v1048
    %1333 = vmatprep.subr.bf16.mxu0 %v1051
    %1334 = vmatpush1.bf16.msra.mxu0 %v1050
    %1335 = vmatprep.subr.bf16.mxu0 %v1053
    %1336 = vmatpush1.bf16.msra.mxu0 %v1052
    %1337 = vmatprep.subr.bf16.mxu0 %v1055
    %1338 = vmatpush1.bf16.msra.mxu0 %v1054
    %1339 = vmatprep.subr.bf16.mxu0 %v1057
    %1340 = vmatpush1.bf16.msra.mxu0 %v1056
    %1341 = vmatprep.subr.bf16.mxu0 %v1059
    %1342 = vmatpush1.bf16.msra.mxu0 %v1058
    %1343 = vmatprep.subr.bf16.mxu0 %v1061
    %1344 = vmatpush1.bf16.msra.mxu0 %v1060
    %1345 = vmatprep.subr.bf16.mxu0 %v1063
    %1346 = vmatpush1.bf16.msra.mxu0 %v1062
    %1347 = vmatprep.subr.bf16.mxu0 %v1065
    %1348 = vmatpush1.bf16.msra.mxu0 %v1064
    %1349 = vmatprep.subr.bf16.mxu0 %v1067
    %1350 = vmatpush1.bf16.msra.mxu0 %v1066
    %1351 = vmatprep.subr.bf16.mxu0 %v1069
    %1352 = vmatpush1.bf16.msra.mxu0 %v1068
    %1353 = vmatprep.mubr.bf16.mxu0 %v417
    %1354 = vmatmul.mubr.bf16.gmra.mrb[0].mxu0 %v416
    %v1355 = vpop.f32.mrb[0].mxu0
    %v1356 = vadd.f32 %v1315, %v1355
    %v1357 = vpop.f32.mrb[0].mxu0
    %v1358 = vadd.f32 %v1317, %v1357
    %v1359 = vpop.f32.mrb[0].mxu0
    %v1360 = vpop.f32.mrb[0].mxu0
    %1361 = vdwg.mxu0
    %v1362 = vmax.f32 %v1356, 0.0
    %v1363 = vmax.f32 %v1358, 0.0
    %v1364 = vpack.c.bf16 %v1362, %v1362
    %v1365 = vpack.c.bf16 %v1363, %v1363
    %v1366 = vld [vmem:[#allocation7] sm:$0xff]
    %v1367 = vld [vmem:[#allocation7 + $0x8] sm:$0xff]
    %v1368 = vld [vmem:[#allocation7 + $0x10] sm:$0xff]
    %v1369 = vld [vmem:[#allocation7 + $0x18] sm:$0xff]
    %v1370 = vld [vmem:[#allocation7 + $0x20] sm:$0xff]
    %v1371 = vld [vmem:[#allocation7 + $0x28] sm:$0xff]
    %v1372 = vld [vmem:[#allocation7 + $0x30] sm:$0xff]
    %v1373 = vld [vmem:[#allocation7 + $0x38] sm:$0xff]
    %v1374 = vld [vmem:[#allocation7 + $0x40] sm:$0xff]
    %v1375 = vld [vmem:[#allocation7 + $0x48] sm:$0xff]
    %v1376 = vld [vmem:[#allocation7 + $0x50] sm:$0xff]
    %v1377 = vld [vmem:[#allocation7 + $0x58] sm:$0xff]
    %v1378 = vld [vmem:[#allocation7 + $0x60] sm:$0xff]
    %v1379 = vld [vmem:[#allocation7 + $0x68] sm:$0xff]
    %v1380 = vld [vmem:[#allocation7 + $0x70] sm:$0xff]
    %v1381 = vld [vmem:[#allocation7 + $0x78] sm:$0xff]
    %v1382 = vld [vmem:[#allocation7 + $0x80] sm:$0xff]
    %v1383 = vld [vmem:[#allocation7 + $0x88] sm:$0xff]
    %v1384 = vld [vmem:[#allocation7 + $0x90] sm:$0xff]
    %v1385 = vld [vmem:[#allocation7 + $0x98] sm:$0xff]
    %v1386 = vld [vmem:[#allocation7 + $0xa0] sm:$0xff]
    %v1387 = vld [vmem:[#allocation7 + $0xa8] sm:$0xff]
    %v1388 = vld [vmem:[#allocation7 + $0xb0] sm:$0xff]
    %v1389 = vld [vmem:[#allocation7 + $0xb8] sm:$0xff]
    %v1390 = vld [vmem:[#allocation7 + $0xc0] sm:$0xff]
    %v1391 = vld [vmem:[#allocation7 + $0xc8] sm:$0xff]
    %v1392 = vld [vmem:[#allocation7 + $0xd0] sm:$0xff]
    %v1393 = vld [vmem:[#allocation7 + $0xd8] sm:$0xff]
    %v1394 = vld [vmem:[#allocation7 + $0xe0] sm:$0xff]
    %v1395 = vld [vmem:[#allocation7 + $0xe8] sm:$0xff]
    %v1396 = vld [vmem:[#allocation7 + $0xf0] sm:$0xff]
    %v1397 = vld [vmem:[#allocation7 + $0xf8] sm:$0xff]
    %v1398 = vld [vmem:[%s6] sm:$0x3]
    %v1400 = vlaneseq
    %v1401 = vshrl.u32 %v1400, 7
    %v1402 = vsub.s32 0, %v1401
    %v1403 = vrot.slane %v1398, %v1402
    %v1404 = vlaneseq
    %v1405 = vshrl.u32 %v1404, 7
    %v1406 = vsub.s32 1, %v1405
    %v1407 = vrot.slane %v1398, %v1406
    %v1442 = vunpack.c.l.b16 %v1366
    %v1443 = vunpack.c.h.b16 %v1366
    %v1444 = vunpack.c.l.b16 %v1367
    %v1445 = vunpack.c.h.b16 %v1367
    %v1446 = vunpack.c.l.b16 %v1368
    %v1447 = vunpack.c.h.b16 %v1368
    %v1448 = vunpack.c.l.b16 %v1369
    %v1449 = vunpack.c.h.b16 %v1369
    %v1450 = vunpack.c.l.b16 %v1370
    %v1451 = vunpack.c.h.b16 %v1370
    %v1452 = vunpack.c.l.b16 %v1371
    %v1453 = vunpack.c.h.b16 %v1371
    %v1454 = vunpack.c.l.b16 %v1372
    %v1455 = vunpack.c.h.b16 %v1372
    %v1456 = vunpack.c.l.b16 %v1373
    %v1457 = vunpack.c.h.b16 %v1373
    %v1458 = vunpack.c.l.b16 %v1374
    %v1459 = vunpack.c.h.b16 %v1374
    %v1460 = vunpack.c.l.b16 %v1375
    %v1461 = vunpack.c.h.b16 %v1375
    %v1462 = vunpack.c.l.b16 %v1376
    %v1463 = vunpack.c.h.b16 %v1376
    %v1464 = vunpack.c.l.b16 %v1377
    %v1465 = vunpack.c.h.b16 %v1377
    %v1466 = vunpack.c.l.b16 %v1378
    %v1467 = vunpack.c.h.b16 %v1378
    %v1468 = vunpack.c.l.b16 %v1379
    %v1469 = vunpack.c.h.b16 %v1379
    %v1470 = vunpack.c.l.b16 %v1380
    %v1471 = vunpack.c.h.b16 %v1380
    %v1472 = vunpack.c.l.b16 %v1381
    %v1473 = vunpack.c.h.b16 %v1381
    %v1474 = vunpack.c.l.b16 %v1382
    %v1475 = vunpack.c.h.b16 %v1382
    %v1476 = vunpack.c.l.b16 %v1383
    %v1477 = vunpack.c.h.b16 %v1383
    %v1478 = vunpack.c.l.b16 %v1384
    %v1479 = vunpack.c.h.b16 %v1384
    %v1480 = vunpack.c.l.b16 %v1385
    %v1481 = vunpack.c.h.b16 %v1385
    %v1482 = vunpack.c.l.b16 %v1386
    %v1483 = vunpack.c.h.b16 %v1386
    %v1484 = vunpack.c.l.b16 %v1387
    %v1485 = vunpack.c.h.b16 %v1387
    %v1486 = vunpack.c.l.b16 %v1388
    %v1487 = vunpack.c.h.b16 %v1388
    %v1488 = vunpack.c.l.b16 %v1389
    %v1489 = vunpack.c.h.b16 %v1389
    %v1490 = vunpack.c.l.b16 %v1390
    %v1491 = vunpack.c.h.b16 %v1390
    %v1492 = vunpack.c.l.b16 %v1391
    %v1493 = vunpack.c.h.b16 %v1391
    %v1494 = vunpack.c.l.b16 %v1392
    %v1495 = vunpack.c.h.b16 %v1392
    %v1496 = vunpack.c.l.b16 %v1393
    %v1497 = vunpack.c.h.b16 %v1393
    %v1498 = vunpack.c.l.b16 %v1394
    %v1499 = vunpack.c.h.b16 %v1394
    %v1500 = vunpack.c.l.b16 %v1395
    %v1501 = vunpack.c.h.b16 %v1395
    %v1502 = vunpack.c.l.b16 %v1396
    %v1503 = vunpack.c.h.b16 %v1396
    %v1504 = vunpack.c.l.b16 %v1397
    %v1505 = vunpack.c.h.b16 %v1397
    %v1506 = vpack.c.b16 %v1444, %v1442
    %v1507 = vpack.c.b16 %v1445, %v1443
    %v1508 = vpack.c.b16 %v1448, %v1446
    %v1509 = vpack.c.b16 %v1449, %v1447
    %v1510 = vpack.c.b16 %v1452, %v1450
    %v1511 = vpack.c.b16 %v1453, %v1451
    %v1512 = vpack.c.b16 %v1456, %v1454
    %v1513 = vpack.c.b16 %v1457, %v1455
    %v1514 = vpack.c.b16 %v1460, %v1458
    %v1515 = vpack.c.b16 %v1461, %v1459
    %v1516 = vpack.c.b16 %v1464, %v1462
    %v1517 = vpack.c.b16 %v1465, %v1463
    %v1518 = vpack.c.b16 %v1468, %v1466
    %v1519 = vpack.c.b16 %v1469, %v1467
    %v1520 = vpack.c.b16 %v1472, %v1470
    %v1521 = vpack.c.b16 %v1473, %v1471
    %v1522 = vpack.c.b16 %v1476, %v1474
    %v1523 = vpack.c.b16 %v1477, %v1475
    %v1524 = vpack.c.b16 %v1480, %v1478
    %v1525 = vpack.c.b16 %v1481, %v1479
    %v1526 = vpack.c.b16 %v1484, %v1482
    %v1527 = vpack.c.b16 %v1485, %v1483
    %v1528 = vpack.c.b16 %v1488, %v1486
    %v1529 = vpack.c.b16 %v1489, %v1487
    %v1530 = vpack.c.b16 %v1492, %v1490
    %v1531 = vpack.c.b16 %v1493, %v1491
    %v1532 = vpack.c.b16 %v1496, %v1494
    %v1533 = vpack.c.b16 %v1497, %v1495
    %v1534 = vpack.c.b16 %v1500, %v1498
    %v1535 = vpack.c.b16 %v1501, %v1499
    %v1536 = vpack.c.b16 %v1504, %v1502
    %v1537 = vpack.c.b16 %v1505, %v1503
    %1570 = vmatprep.subr.bf16.mxu0 %v1507
    %1571 = vmatpush1.bf16.msra.mxu0 %v1506
    %1572 = vmatprep.subr.bf16.mxu0 %v1509
    %1573 = vmatpush1.bf16.msra.mxu0 %v1508
    %1574 = vmatprep.subr.bf16.mxu0 %v1511
    %1575 = vmatpush1.bf16.msra.mxu0 %v1510
    %1576 = vmatprep.subr.bf16.mxu0 %v1513
    %1577 = vmatpush1.bf16.msra.mxu0 %v1512
    %1578 = vmatprep.subr.bf16.mxu0 %v1515
    %1579 = vmatpush1.bf16.msra.mxu0 %v1514
    %1580 = vmatprep.subr.bf16.mxu0 %v1517
    %1581 = vmatpush1.bf16.msra.mxu0 %v1516
    %1582 = vmatprep.subr.bf16.mxu0 %v1519
    %1583 = vmatpush1.bf16.msra.mxu0 %v1518
    %1584 = vmatprep.subr.bf16.mxu0 %v1521
    %1585 = vmatpush1.bf16.msra.mxu0 %v1520
    %1586 = vmatprep.subr.bf16.mxu0 %v1523
    %1587 = vmatpush1.bf16.msra.mxu0 %v1522
    %1588 = vmatprep.subr.bf16.mxu0 %v1525
    %1589 = vmatpush1.bf16.msra.mxu0 %v1524
    %1590 = vmatprep.subr.bf16.mxu0 %v1527
    %1591 = vmatpush1.bf16.msra.mxu0 %v1526
    %1592 = vmatprep.subr.bf16.mxu0 %v1529
    %1593 = vmatpush1.bf16.msra.mxu0 %v1528
    %1594 = vmatprep.subr.bf16.mxu0 %v1531
    %1595 = vmatpush1.bf16.msra.mxu0 %v1530
    %1596 = vmatprep.subr.bf16.mxu0 %v1533
    %1597 = vmatpush1.bf16.msra.mxu0 %v1532
    %1598 = vmatprep.subr.bf16.mxu0 %v1535
    %1599 = vmatpush1.bf16.msra.mxu0 %v1534
    %1600 = vmatprep.subr.bf16.mxu0 %v1537
    %1601 = vmatpush1.bf16.msra.mxu0 %v1536
    %1602 = vmatprep.mubr.bf16.mxu0 %v1365
    %1603 = vmatmul.mubr.bf16.gmra.mrb[0].mxu0 %v1364
    %v1604 = vpop.f32.mrb[0].mxu0
    %v1605 = vadd.f32 %v1403, %v1604
    %v1606 = vpop.f32.mrb[0].mxu0
    %v1607 = vadd.f32 %v1407, %v1606
    %v1608 = vpop.f32.mrb[0].mxu0
    %v1609 = vpop.f32.mrb[0].mxu0
    %1610 = vdwg.mxu0
    %v1611 = vmax.f32 %v1605, 0.0
    %v1612 = vmax.f32 %v1607, 0.0
    %v1613 = vpack.c.bf16 %v1611, %v1611
    %v1614 = vpack.c.bf16 %v1612, %v1612
    %v1615 = vld [vmem:[#allocation8] sm:$0xf]
    %v1616 = vld [vmem:[#allocation8 + $0x4] sm:$0xf]
    %v1617 = vld [vmem:[#allocation8 + $0x8] sm:$0xf]
    %v1618 = vld [vmem:[#allocation8 + $0xc] sm:$0xf]
    %v1619 = vld [vmem:[#allocation8 + $0x10] sm:$0xf]
    %v1620 = vld [vmem:[#allocation8 + $0x14] sm:$0xf]
    %v1621 = vld [vmem:[#allocation8 + $0x18] sm:$0xf]
    %v1622 = vld [vmem:[#allocation8 + $0x1c] sm:$0xf]
    %v1623 = vld [vmem:[#allocation8 + $0x20] sm:$0xf]
    %v1624 = vld [vmem:[#allocation8 + $0x24] sm:$0xf]
    %v1625 = vld [vmem:[#allocation8 + $0x28] sm:$0xf]
    %v1626 = vld [vmem:[#allocation8 + $0x2c] sm:$0xf]
    %v1627 = vld [vmem:[#allocation8 + $0x30] sm:$0xf]
    %v1628 = vld [vmem:[#allocation8 + $0x34] sm:$0xf]
    %v1629 = vld [vmem:[#allocation8 + $0x38] sm:$0xf]
    %v1630 = vld [vmem:[#allocation8 + $0x3c] sm:$0xf]
    %v1631 = vld [vmem:[#allocation8 + $0x40] sm:$0xf]
    %v1632 = vld [vmem:[#allocation8 + $0x44] sm:$0xf]
    %v1633 = vld [vmem:[#allocation8 + $0x48] sm:$0xf]
    %v1634 = vld [vmem:[#allocation8 + $0x4c] sm:$0xf]
    %v1635 = vld [vmem:[#allocation8 + $0x50] sm:$0xf]
    %v1636 = vld [vmem:[#allocation8 + $0x54] sm:$0xf]
    %v1637 = vld [vmem:[#allocation8 + $0x58] sm:$0xf]
    %v1638 = vld [vmem:[#allocation8 + $0x5c] sm:$0xf]
    %v1639 = vld [vmem:[#allocation8 + $0x60] sm:$0xf]
    %v1640 = vld [vmem:[#allocation8 + $0x64] sm:$0xf]
    %v1641 = vld [vmem:[#allocation8 + $0x68] sm:$0xf]
    %v1642 = vld [vmem:[#allocation8 + $0x6c] sm:$0xf]
    %v1643 = vld [vmem:[#allocation8 + $0x70] sm:$0xf]
    %v1644 = vld [vmem:[#allocation8 + $0x74] sm:$0xf]
    %v1645 = vld [vmem:[#allocation8 + $0x78] sm:$0xf]
    %v1646 = vld [vmem:[#allocation8 + $0x7c] sm:$0xf]
    %v1647 = vld [vmem:[%s8] sm:$0x1]
    %v1649 = vlaneseq
    %v1650 = vshrl.u32 %v1649, 7
    %v1651 = vsub.s32 0, %v1650
    %v1652 = vrot.slane %v1647, %v1651
    %v1686 = vunpack.c.l.b16 %v1615
    %v1687 = vunpack.c.l.b16 %v1616
    %v1688 = vunpack.c.l.b16 %v1617
    %v1689 = vunpack.c.l.b16 %v1618
    %v1690 = vunpack.c.l.b16 %v1619
    %v1691 = vunpack.c.l.b16 %v1620
    %v1692 = vunpack.c.l.b16 %v1621
    %v1693 = vunpack.c.l.b16 %v1622
    %v1694 = vunpack.c.l.b16 %v1623
    %v1695 = vunpack.c.l.b16 %v1624
    %v1696 = vunpack.c.l.b16 %v1625
    %v1697 = vunpack.c.l.b16 %v1626
    %v1698 = vunpack.c.l.b16 %v1627
    %v1699 = vunpack.c.l.b16 %v1628
    %v1700 = vunpack.c.l.b16 %v1629
    %v1701 = vunpack.c.l.b16 %v1630
    %v1702 = vunpack.c.l.b16 %v1631
    %v1703 = vunpack.c.l.b16 %v1632
    %v1704 = vunpack.c.l.b16 %v1633
    %v1705 = vunpack.c.l.b16 %v1634
    %v1706 = vunpack.c.l.b16 %v1635
    %v1707 = vunpack.c.l.b16 %v1636
    %v1708 = vunpack.c.l.b16 %v1637
    %v1709 = vunpack.c.l.b16 %v1638
    %v1710 = vunpack.c.l.b16 %v1639
    %v1711 = vunpack.c.l.b16 %v1640
    %v1712 = vunpack.c.l.b16 %v1641
    %v1713 = vunpack.c.l.b16 %v1642
    %v1714 = vunpack.c.l.b16 %v1643
    %v1715 = vunpack.c.l.b16 %v1644
    %v1716 = vunpack.c.l.b16 %v1645
    %v1717 = vunpack.c.l.b16 %v1646
    %v1718 = vpack.c.b16 %v1687, %v1686
    %v1719 = vpack.c.b16 %v1689, %v1688
    %v1720 = vpack.c.b16 %v1691, %v1690
    %v1721 = vpack.c.b16 %v1693, %v1692
    %v1722 = vpack.c.b16 %v1695, %v1694
    %v1723 = vpack.c.b16 %v1697, %v1696
    %v1724 = vpack.c.b16 %v1699, %v1698
    %v1725 = vpack.c.b16 %v1701, %v1700
    %v1726 = vpack.c.b16 %v1703, %v1702
    %v1727 = vpack.c.b16 %v1705, %v1704
    %v1728 = vpack.c.b16 %v1707, %v1706
    %v1729 = vpack.c.b16 %v1709, %v1708
    %v1730 = vpack.c.b16 %v1711, %v1710
    %v1731 = vpack.c.b16 %v1713, %v1712
    %v1732 = vpack.c.b16 %v1715, %v1714
    %v1733 = vpack.c.b16 %v1717, %v1716
    %1750 = vmatprep.subr.bf16.mxu0 0
    %1751 = vmatpush1.bf16.msra.mxu0 %v1718
    %1752 = vmatprep.subr.bf16.mxu0 0
    %1753 = vmatpush1.bf16.msra.mxu0 %v1719
    %1754 = vmatprep.subr.bf16.mxu0 0
    %1755 = vmatpush1.bf16.msra.mxu0 %v1720
    %1756 = vmatprep.subr.bf16.mxu0 0
    %1757 = vmatpush1.bf16.msra.mxu0 %v1721
    %1758 = vmatprep.subr.bf16.mxu0 0
    %1759 = vmatpush1.bf16.msra.mxu0 %v1722
    %1760 = vmatprep.subr.bf16.mxu0 0
    %1761 = vmatpush1.bf16.msra.mxu0 %v1723
    %1762 = vmatprep.subr.bf16.mxu0 0
    %1763 = vmatpush1.bf16.msra.mxu0 %v1724
    %1764 = vmatprep.subr.bf16.mxu0 0
    %1765 = vmatpush1.bf16.msra.mxu0 %v1725
    %1766 = vmatprep.subr.bf16.mxu0 0
    %1767 = vmatpush1.bf16.msra.mxu0 %v1726
    %1768 = vmatprep.subr.bf16.mxu0 0
    %1769 = vmatpush1.bf16.msra.mxu0 %v1727
    %1770 = vmatprep.subr.bf16.mxu0 0
    %1771 = vmatpush1.bf16.msra.mxu0 %v1728
    %1772 = vmatprep.subr.bf16.mxu0 0
    %1773 = vmatpush1.bf16.msra.mxu0 %v1729
    %1774 = vmatprep.subr.bf16.mxu0 0
    %1775 = vmatpush1.bf16.msra.mxu0 %v1730
    %1776 = vmatprep.subr.bf16.mxu0 0
    %1777 = vmatpush1.bf16.msra.mxu0 %v1731
    %1778 = vmatprep.subr.bf16.mxu0 0
    %1779 = vmatpush1.bf16.msra.mxu0 %v1732
    %1780 = vmatprep.subr.bf16.mxu0 0
    %1781 = vmatpush1.bf16.msra.mxu0 %v1733
    %1782 = vmatprep.mubr.bf16.mxu0 %v1614
    %1783 = vmatmul.mubr.bf16.gmra.mrb[0].mxu0 %v1613
    %v1784 = vpop.f32.mrb[0].mxu0
    %v1785 = vadd.f32 %v1652, %v1784
    %v1786 = vpop.f32.mrb[0].mxu0
    %v1787 = vpop.f32.mrb[0].mxu0
    %v1788 = vpop.f32.mrb[0].mxu0
    %1789 = vdwg.mxu0
    %v1790 = vmax.f32 %v1785, 0.0
    %v1791 = vpack.c.bf16 %v1790, %v1790
    %v1792 = vld [vmem:[%s9] sm:$0xf]
    %v1793 = vld [vmem:[%s9 + $0x4] sm:$0xf]
    %v1794 = vld [vmem:[%s9 + $0x8] sm:$0xf]
    %v1795 = vld [vmem:[%s9 + $0xc] sm:$0xf]
    %v1796 = vld [vmem:[%s9 + $0x10] sm:$0xf]
    %v1797 = vld [vmem:[%s9 + $0x14] sm:$0xf]
    %v1798 = vld [vmem:[%s9 + $0x18] sm:$0xf]
    %v1799 = vld [vmem:[%s9 + $0x1c] sm:$0xf]
    %v1800 = vld [vmem:[%s9 + $0x20] sm:$0xf]
    %v1801 = vld [vmem:[%s9 + $0x24] sm:$0xf]
    %v1802 = vld [vmem:[%s9 + $0x28] sm:$0xf]
    %v1803 = vld [vmem:[%s9 + $0x2c] sm:$0xf]
    %v1804 = vld [vmem:[%s9 + $0x30] sm:$0xf]
    %v1805 = vld [vmem:[%s9 + $0x34] sm:$0xf]
    %v1806 = vld [vmem:[%s9 + $0x38] sm:$0xf]
    %v1807 = vld [vmem:[%s9 + $0x3c] sm:$0xf]
    %v1808 = vld [vmem:[%s10] sm:$0x1]
    %v1810 = vlaneseq
    %v1811 = vshrl.u32 %v1810, 7
    %v1812 = vsub.s32 0, %v1811
    %v1813 = vrot.slane %v1808, %v1812
    %v1831 = vunpack.c.l.b16 %v1792
    %v1832 = vunpack.c.l.b16 %v1793
    %v1833 = vunpack.c.l.b16 %v1794
    %v1834 = vunpack.c.l.b16 %v1795
    %v1835 = vunpack.c.l.b16 %v1796
    %v1836 = vunpack.c.l.b16 %v1797
    %v1837 = vunpack.c.l.b16 %v1798
    %v1838 = vunpack.c.l.b16 %v1799
    %v1839 = vunpack.c.l.b16 %v1800
    %v1840 = vunpack.c.l.b16 %v1801
    %v1841 = vunpack.c.l.b16 %v1802
    %v1842 = vunpack.c.l.b16 %v1803
    %v1843 = vunpack.c.l.b16 %v1804
    %v1844 = vunpack.c.l.b16 %v1805
    %v1845 = vunpack.c.l.b16 %v1806
    %v1846 = vunpack.c.l.b16 %v1807
    %v1847 = vpack.c.b16 %v1832, %v1831
    %v1848 = vpack.c.b16 %v1834, %v1833
    %v1849 = vpack.c.b16 %v1836, %v1835
    %v1850 = vpack.c.b16 %v1838, %v1837
    %v1851 = vpack.c.b16 %v1840, %v1839
    %v1852 = vpack.c.b16 %v1842, %v1841
    %v1853 = vpack.c.b16 %v1844, %v1843
    %v1854 = vpack.c.b16 %v1846, %v1845
    %1863 = vmatprep.subr.bf16.mxu0 0
    %1864 = vmatpush1.bf16.msra.mxu0 %v1847
    %1865 = vmatprep.subr.bf16.mxu0 0
    %1866 = vmatpush1.bf16.msra.mxu0 %v1848
    %1867 = vmatprep.subr.bf16.mxu0 0
    %1868 = vmatpush1.bf16.msra.mxu0 %v1849
    %1869 = vmatprep.subr.bf16.mxu0 0
    %1870 = vmatpush1.bf16.msra.mxu0 %v1850
    %1871 = vmatprep.subr.bf16.mxu0 0
    %1872 = vmatpush1.bf16.msra.mxu0 %v1851
    %1873 = vmatprep.subr.bf16.mxu0 0
    %1874 = vmatpush1.bf16.msra.mxu0 %v1852
    %1875 = vmatprep.subr.bf16.mxu0 0
    %1876 = vmatpush1.bf16.msra.mxu0 %v1853
    %1877 = vmatprep.subr.bf16.mxu0 0
    %1878 = vmatpush1.bf16.msra.mxu0 %v1854
    %1879 = vmatprep.subr.bf16.mxu0 0
    %1880 = vmatpush1.bf16.msra.mxu0 0
    %1881 = vmatprep.subr.bf16.mxu0 0
    %1882 = vmatpush1.bf16.msra.mxu0 0
    %1883 = vmatprep.subr.bf16.mxu0 0
    %1884 = vmatpush1.bf16.msra.mxu0 0
    %1885 = vmatprep.subr.bf16.mxu0 0
    %1886 = vmatpush1.bf16.msra.mxu0 0
    %1887 = vmatprep.subr.bf16.mxu0 0
    %1888 = vmatpush1.bf16.msra.mxu0 0
    %1889 = vmatprep.subr.bf16.mxu0 0
    %1890 = vmatpush1.bf16.msra.mxu0 0
    %1891 = vmatprep.subr.bf16.mxu0 0
    %1892 = vmatpush1.bf16.msra.mxu0 0
    %1893 = vmatprep.subr.bf16.mxu0 0
    %1894 = vmatpush1.bf16.msra.mxu0 0
    %1895 = vmatprep.mubr.bf16.mxu0 0
    %1896 = vmatmul.mubr.bf16.gmra.mrb[0].mxu0 %v1791
    %v1897 = vpop.f32.mrb[0].mxu0
    %v1898 = vadd.f32 %v1813, %v1897
    %v1899 = vpop.f32.mrb[0].mxu0
    %v1900 = vpop.f32.mrb[0].mxu0
    %v1901 = vpop.f32.mrb[0].mxu0
    %1902 = vdwg.mxu0
    %vm1903 = vcmask 130048
    %1904 = vst.msk [vmem:[#allocation10] sm:$0xff] %vm1903, %v1898
    // Predicated region
    $region62: #{tpu_custom_call.1} parent=1 // pred_check
      _
    $region63: #{tpu_custom_call.1} parent=1 // pred_check_branch
      %1906 = sbr.rel (0) target = $region65
    $region64: #{tpu_custom_call.1} parent=1 // pred_region
      %s1908 = ssub.s32 128, 128
      %1909 = vsyncadd [#allocation4], %s1908
      %s1911 = sshll.u32 [#allocation10], 4
      %s1912 = int_to_ptr.vmem [resolvable:$true] %s1911
      %1914 = dma.vmem_to_hbm [thread:$0]  %s1912, 128, %s11, [#allocation4]
    $region65: #{tpu_custom_call.1} parent=1 // pred_fallthru
      _
    // Predicated region
    $region66: #{tpu_custom_call.1} parent=1 // pred_check
      _
    $region67: #{tpu_custom_call.1} parent=1 // pred_check_branch
      %1916 = sbr.rel (0) target = $region69
    $region68: #{tpu_custom_call.1} parent=1 // pred_region
      %1917 = dma.done [#allocation4], 128
    $region69: #{tpu_custom_call.1} parent=1 // pred_fallthru
      _
    %1918 = vsyncpa [#allocation3], 1
    %1919 = vsyncpa [#allocation6], 1
    %1920 = vsyncpa [#allocation9], 1
    %1921 = vsyncpa [#allocation4], 1

// kernel: tpu_custom_call.1
$region0: #{tpu_custom_call.1}
  #allocation0 [shape = 'u32[]', space=smem, size = 0x4, offset = 0x4, fixed_abs, tag = 'smem constant byte address 0x4 - core index']
  #allocation1 [shape = 'u32[144,128]{1,0:T(1,128)}', space=vmem, size = 0x12000, scoped, tag = 'internal scratch']
  %s0 = inlined_call_operand.vmem [shape: bf16[8,32], index: 0, kind: input, shape index: {}]
  %s1 = inlined_call_operand.hbm [shape: bf16[32,1024], index: 1, kind: input, shape index: {}]
  %s2 = inlined_call_operand.vmem [shape: f32[1,1024], index: 2, kind: input, shape index: {}]
  %s3 = inlined_call_operand.hbm [shape: bf16[1024,256], index: 3, kind: input, shape index: {}]
  %s4 = inlined_call_operand.vmem [shape: f32[1,256], index: 4, kind: input, shape index: {}]
  %s5 = inlined_call_operand.hbm [shape: bf16[256,256], index: 5, kind: input, shape index: {}]
  %s6 = inlined_call_operand.vmem [shape: f32[1,256], index: 6, kind: input, shape index: {}]
  %s7 = inlined_call_operand.hbm [shape: bf16[256,128], index: 7, kind: input, shape index: {}]
  %s8 = inlined_call_operand.vmem [shape: f32[1,128], index: 8, kind: input, shape index: {}]
  %s9 = inlined_call_operand.vmem [shape: bf16[128,16], index: 9, kind: input, shape index: {}]
  %s10 = inlined_call_operand.vmem [shape: f32[1,16], index: 10, kind: input, shape index: {}]
  %s11 = inlined_call_operand.hbm [shape: f32[8,16], index: 11, kind: output, shape index: {}]
  %s12 = sld [smem:[#allocation0]]
  $region70: #{tpu_custom_call.1} parent=0
    _
  %s14 = ssub.s32 1, %s12
  %s15 = scalar_select 0, %s14, %s12
  $region1: #{tpu_custom_call.1} parent=0
    #allocation2 [shape = 'u8[65536]{0}', space=vmem, size = 0x10000, scoped, tag = 'input window, operand 1, single buffered']
    #allocation3 [shape = 's32[1]{0}', space=sflag, size = 0x4, scoped, tag = 'scoped memory for tpu_custom_call.1']
    #allocation4 [shape = 's32[1]{0}', space=sflag, size = 0x4, scoped, tag = 'scoped memory for tpu_custom_call.1']
    #allocation5 [shape = 'u8[524288]{0}', space=vmem, size = 0x80000, scoped, tag = 'input window, operand 3, single buffered']
    #allocation6 [shape = 's32[1]{0}', space=sflag, size = 0x4, scoped, tag = 'scoped memory for tpu_custom_call.1']
    #allocation7 [shape = 'u8[131072]{0}', space=vmem, size = 0x20000, scoped, tag = 'input window, operand 5, single buffered']
    #allocation8 [shape = 'u8[65536]{0}', space=vmem, size = 0x10000, scoped, tag = 'input window, operand 7, single buffered']
    #allocation9 [shape = 's32[1]{0}', space=sflag, size = 0x4, scoped, tag = 'scoped memory for tpu_custom_call.1']
    #allocation10 [shape = 'u8[4096]{0}', space=vmem, size = 0x1000, scoped, tag = 'output window, operand 0, single buffered']
    %16 = vsyncpa [#allocation3], 0
    %17 = vsyncpa [#allocation6], 0
    %18 = vsyncpa [#allocation9], 0
    %19 = vsyncpa [#allocation4], 0
    // Predicated region
    $region2: #{tpu_custom_call.1} parent=1 // pred_check
      _
    $region3: #{tpu_custom_call.1} parent=1 // pred_check_branch
      %21 = sbr.rel (0) target = $region5
    $region4: #{tpu_custom_call.1} parent=1 // pred_region
      _
    $region5: #{tpu_custom_call.1} parent=1 // pred_fallthru
      _
    // Predicated region
    $region6: #{tpu_custom_call.1} parent=1 // pred_check
      _
    $region7: #{tpu_custom_call.1} parent=1 // pred_check_branch
      %23 = sbr.rel (0) target = $region9
    $region8: #{tpu_custom_call.1} parent=1 // pred_region
      %s25 = ssub.s32 2048, 2048
      %26 = vsyncadd [#allocation3], %s25
      %s27 = sshll.u32 [#allocation2], 4
      %s28 = int_to_ptr.vmem [resolvable:$true] %s27
      %33 = dma.hbm_to_vmem [thread:$0]  %s1, 2048, %s28, [#allocation3], 512, 512, 32
    $region9: #{tpu_custom_call.1} parent=1 // pred_fallthru
      _
    // Predicated region
    $region10: #{tpu_custom_call.1} parent=1 // pred_check
      _
    $region11: #{tpu_custom_call.1} parent=1 // pred_check_branch
      %35 = sbr.rel (0) target = $region13
    $region12: #{tpu_custom_call.1} parent=1 // pred_region
      _
    $region13: #{tpu_custom_call.1} parent=1 // pred_fallthru
      _
    // Predicated region
    $region14: #{tpu_custom_call.1} parent=1 // pred_check
      _
    $region15: #{tpu_custom_call.1} parent=1 // pred_check_branch
      %37 = sbr.rel (0) target = $region17
    $region16: #{tpu_custom_call.1} parent=1 // pred_region
      %s39 = ssub.s32 16384, 16384
      %40 = vsyncadd [#allocation6], %s39
      %s41 = sshll.u32 [#allocation5], 4
      %s42 = int_to_ptr.vmem [resolvable:$true] %s41
      %47 = dma.hbm_to_vmem [thread:$0]  %s3, 16384, %s42, [#allocation6], 128, 128, 8
    $region17: #{tpu_custom_call.1} parent=1 // pred_fallthru
      _
    // Predicated region
    $region18: #{tpu_custom_call.1} parent=1 // pred_check
      _
    $region19: #{tpu_custom_call.1} parent=1 // pred_check_branch
      %49 = sbr.rel (0) target = $region21
    $region20: #{tpu_custom_call.1} parent=1 // pred_region
      _
    $region21: #{tpu_custom_call.1} parent=1 // pred_fallthru
      _
    // Predicated region
    $region22: #{tpu_custom_call.1} parent=1 // pred_check
      _
    $region23: #{tpu_custom_call.1} parent=1 // pred_check_branch
      %51 = sbr.rel (0) target = $region25
    $region24: #{tpu_custom_call.1} parent=1 // pred_region
      %s53 = ssub.s32 4096, 4096
      %54 = vsyncadd [#allocation6], %s53
      %s55 = sshll.u32 [#allocation7], 4
      %s56 = int_to_ptr.vmem [resolvable:$true] %s55
      %61 = dma.hbm_to_vmem [thread:$0]  %s5, 4096, %s56, [#allocation6], 128, 128, 8
    $region25: #{tpu_custom_call.1} parent=1 // pred_fallthru
      _
    // Predicated region
    $region26: #{tpu_custom_call.1} parent=1 // pred_check
      _
    $region27: #{tpu_custom_call.1} parent=1 // pred_check_branch
      %63 = sbr.rel (0) target = $region29
    $region28: #{tpu_custom_call.1} parent=1 // pred_region
      _
    $region29: #{tpu_custom_call.1} parent=1 // pred_fallthru
      _
    // Predicated region
    $region30: #{tpu_custom_call.1} parent=1 // pred_check
      _
    $region31: #{tpu_custom_call.1} parent=1 // pred_check_branch
      %65 = sbr.rel (0) target = $region33
    $region32: #{tpu_custom_call.1} parent=1 // pred_region
      %s67 = ssub.s32 2048, 2048
      %68 = vsyncadd [#allocation9], %s67
      %s69 = sshll.u32 [#allocation8], 4
      %s70 = int_to_ptr.vmem [resolvable:$true] %s69
      %75 = dma.hbm_to_vmem [thread:$0]  %s7, 2048, %s70, [#allocation9], 64, 64, 4
    $region33: #{tpu_custom_call.1} parent=1 // pred_fallthru
      _
    // Predicated region
    $region34: #{tpu_custom_call.1} parent=1 // pred_check
      _
    $region35: #{tpu_custom_call.1} parent=1 // pred_check_branch
      %77 = sbr.rel (0) target = $region37
    $region36: #{tpu_custom_call.1} parent=1 // pred_region
      _
    $region37: #{tpu_custom_call.1} parent=1 // pred_fallthru
      _
    // Predicated region
    $region38: #{tpu_custom_call.1} parent=1 // pred_check
      _
    $region39: #{tpu_custom_call.1} parent=1 // pred_check_branch
      %79 = sbr.rel (0) target = $region41
    $region40: #{tpu_custom_call.1} parent=1 // pred_region
      _
    $region41: #{tpu_custom_call.1} parent=1 // pred_fallthru
      _
    // Predicated region
    $region42: #{tpu_custom_call.1} parent=1 // pred_check
      _
    $region43: #{tpu_custom_call.1} parent=1 // pred_check_branch
      %81 = sbr.rel (0) target = $region45
    $region44: #{tpu_custom_call.1} parent=1 // pred_region
      _
    $region45: #{tpu_custom_call.1} parent=1 // pred_fallthru
      _
    // Predicated region
    $region46: #{tpu_custom_call.1} parent=1 // pred_check
      _
    $region47: #{tpu_custom_call.1} parent=1 // pred_check_branch
      %83 = sbr.rel (0) target = $region49
    $region48: #{tpu_custom_call.1} parent=1 // pred_region
      %84 = dma.done [#allocation3], 2048
    $region49: #{tpu_custom_call.1} parent=1 // pred_fallthru
      _
    // Predicated region
    $region50: #{tpu_custom_call.1} parent=1 // pred_check
      _
    $region51: #{tpu_custom_call.1} parent=1 // pred_check_branch
      %86 = sbr.rel (0) target = $region53
    $region52: #{tpu_custom_call.1} parent=1 // pred_region
      %87 = dma.done [#allocation6], 16384
    $region53: #{tpu_custom_call.1} parent=1 // pred_fallthru
      _
    // Predicated region
    $region54: #{tpu_custom_call.1} parent=1 // pred_check
      _
    $region55: #{tpu_custom_call.1} parent=1 // pred_check_branch
      %89 = sbr.rel (0) target = $region57
    $region56: #{tpu_custom_call.1} parent=1 // pred_region
      %90 = dma.done [#allocation6], 4096
    $region57: #{tpu_custom_call.1} parent=1 // pred_fallthru
      _
    // Predicated region
    $region58: #{tpu_custom_call.1} parent=1 // pred_check
      _
    $region59: #{tpu_custom_call.1} parent=1 // pred_check_branch
      %92 = sbr.rel (0) target = $region61
    $region60: #{tpu_custom_call.1} parent=1 // pred_region
      %93 = dma.done [#allocation9], 2048
    $region61: #{tpu_custom_call.1} parent=1 // pred_fallthru
      _
    %v95 = vld [vmem:[%s0] sm:$0xf]
    %v96 = vld [vmem:[#allocation2] sm:$0xff]
    %v97 = vld [vmem:[#allocation2 + $0x8] sm:$0xff]
    %v98 = vld [vmem:[#allocation2 + $0x10] sm:$0xff]
    %v99 = vld [vmem:[#allocation2 + $0x18] sm:$0xff]
    %v100 = vld [vmem:[#allocation2 + $0x20] sm:$0xff]
    %v101 = vld [vmem:[#allocation2 + $0x28] sm:$0xff]
    %v102 = vld [vmem:[#allocation2 + $0x30] sm:$0xff]
    %v103 = vld [vmem:[#allocation2 + $0x38] sm:$0xff]
    %v104 = vld [vmem:[#allocation2 + $0x40] sm:$0xff]
    %v105 = vld [vmem:[#allocation2 + $0x48] sm:$0xff]
    %v106 = vld [vmem:[#allocation2 + $0x50] sm:$0xff]
    %v107 = vld [vmem:[#allocation2 + $0x58] sm:$0xff]
    %v108 = vld [vmem:[#allocation2 + $0x60] sm:$0xff]
    %v109 = vld [vmem:[#allocation2 + $0x68] sm:$0xff]
    %v110 = vld [vmem:[#allocation2 + $0x70] sm:$0xff]
    %v111 = vld [vmem:[#allocation2 + $0x78] sm:$0xff]
    %v112 = vld [vmem:[%s2] sm:$0xff]
    %v114 = vlaneseq
    %v115 = vshrl.u32 %v114, 7
    %v116 = vsub.s32 0, %v115
    %v117 = vrot.slane %v112, %v116
    %v118 = vlaneseq
    %v119 = vshrl.u32 %v118, 7
    %v120 = vsub.s32 1, %v119
    %v121 = vrot.slane %v112, %v120
    %v122 = vlaneseq
    %v123 = vshrl.u32 %v122, 7
    %v124 = vsub.s32 2, %v123
    %v125 = vrot.slane %v112, %v124
    %v126 = vlaneseq
    %v127 = vshrl.u32 %v126, 7
    %v128 = vsub.s32 3, %v127
    %v129 = vrot.slane %v112, %v128
    %v130 = vlaneseq
    %v131 = vshrl.u32 %v130, 7
    %v132 = vsub.s32 4, %v131
    %v133 = vrot.slane %v112, %v132
    %v134 = vlaneseq
    %v135 = vshrl.u32 %v134, 7
    %v136 = vsub.s32 5, %v135
    %v137 = vrot.slane %v112, %v136
    %v138 = vlaneseq
    %v139 = vshrl.u32 %v138, 7
    %v140 = vsub.s32 6, %v139
    %v141 = vrot.slane %v112, %v140
    %v142 = vlaneseq
    %v143 = vshrl.u32 %v142, 7
    %v144 = vsub.s32 7, %v143
    %v145 = vrot.slane %v112, %v144
    %v170 = vunpack.c.l.b16 %v96
    %v171 = vunpack.c.h.b16 %v96
    %v172 = vunpack.c.l.b16 %v97
    %v173 = vunpack.c.h.b16 %v97
    %v174 = vunpack.c.l.b16 %v98
    %v175 = vunpack.c.h.b16 %v98
    %v176 = vunpack.c.l.b16 %v99
    %v177 = vunpack.c.h.b16 %v99
    %v178 = vunpack.c.l.b16 %v100
    %v179 = vunpack.c.h.b16 %v100
    %v180 = vunpack.c.l.b16 %v101
    %v181 = vunpack.c.h.b16 %v101
    %v182 = vunpack.c.l.b16 %v102
    %v183 = vunpack.c.h.b16 %v102
    %v184 = vunpack.c.l.b16 %v103
    %v185 = vunpack.c.h.b16 %v103
    %v186 = vunpack.c.l.b16 %v104
    %v187 = vunpack.c.h.b16 %v104
    %v188 = vunpack.c.l.b16 %v105
    %v189 = vunpack.c.h.b16 %v105
    %v190 = vunpack.c.l.b16 %v106
    %v191 = vunpack.c.h.b16 %v106
    %v192 = vunpack.c.l.b16 %v107
    %v193 = vunpack.c.h.b16 %v107
    %v194 = vunpack.c.l.b16 %v108
    %v195 = vunpack.c.h.b16 %v108
    %v196 = vunpack.c.l.b16 %v109
    %v197 = vunpack.c.h.b16 %v109
    %v198 = vunpack.c.l.b16 %v110
    %v199 = vunpack.c.h.b16 %v110
    %v200 = vunpack.c.l.b16 %v111
    %v201 = vunpack.c.h.b16 %v111
    %v202 = vpack.c.b16 %v178, %v170
    %v203 = vpack.c.b16 %v179, %v171
    %v204 = vpack.c.b16 %v180, %v172
    %v205 = vpack.c.b16 %v181, %v173
    %v206 = vpack.c.b16 %v182, %v174
    %v207 = vpack.c.b16 %v183, %v175
    %v208 = vpack.c.b16 %v184, %v176
    %v209 = vpack.c.b16 %v185, %v177
    %v210 = vpack.c.b16 %v194, %v186
    %v211 = vpack.c.b16 %v195, %v187
    %v212 = vpack.c.b16 %v196, %v188
    %v213 = vpack.c.b16 %v197, %v189
    %v214 = vpack.c.b16 %v198, %v190
    %v215 = vpack.c.b16 %v199, %v191
    %v216 = vpack.c.b16 %v200, %v192
    %v217 = vpack.c.b16 %v201, %v193
    %vm234 = vcmask 261120
    %v236 = vsel %vm234, %v95, 0
    %238 = vmatprep.subr.bf16.mxu0 %v203
    %239 = vmatpush1.bf16.msra.mxu0 %v202
    %240 = vmatprep.subr.bf16.mxu0 %v211
    %241 = vmatpush1.bf16.msra.mxu0 %v210
    %242 = vmatprep.subr.bf16.mxu0 0
    %243 = vmatpush1.bf16.msra.mxu0 0
    %244 = vmatprep.subr.bf16.mxu0 0
    %245 = vmatpush1.bf16.msra.mxu0 0
    %246 = vmatprep.subr.bf16.mxu0 0
    %247 = vmatpush1.bf16.msra.mxu0 0
    %248 = vmatprep.subr.bf16.mxu0 0
    %249 = vmatpush1.bf16.msra.mxu0 0
    %250 = vmatprep.subr.bf16.mxu0 0
    %251 = vmatpush1.bf16.msra.mxu0 0
    %252 = vmatprep.subr.bf16.mxu0 0
    %253 = vmatpush1.bf16.msra.mxu0 0
    %254 = vmatprep.subr.bf16.mxu0 0
    %255 = vmatpush1.bf16.msra.mxu0 0
    %256 = vmatprep.subr.bf16.mxu0 0
    %257 = vmatpush1.bf16.msra.mxu0 0
    %258 = vmatprep.subr.bf16.mxu0 0
    %259 = vmatpush1.bf16.msra.mxu0 0
    %260 = vmatprep.subr.bf16.mxu0 0
    %261 = vmatpush1.bf16.msra.mxu0 0
    %262 = vmatprep.subr.bf16.mxu0 0
    %263 = vmatpush1.bf16.msra.mxu0 0
    %264 = vmatprep.subr.bf16.mxu0 0
    %265 = vmatpush1.bf16.msra.mxu0 0
    %266 = vmatprep.subr.bf16.mxu0 0
    %267 = vmatpush1.bf16.msra.mxu0 0
    %268 = vmatprep.subr.bf16.mxu0 0
    %269 = vmatpush1.bf16.msra.mxu0 0
    %270 = vmatprep.mubr.bf16.mxu0 0
    %271 = vmatmul.mubr.bf16.gmra.mrb[0].mxu0 %v236
    %v272 = vpop.f32.mrb[0].mxu0
    %v273 = vadd.f32 %v117, %v272
    %v274 = vpop.f32.mrb[0].mxu0
    %v275 = vadd.f32 %v121, %v274
    %v276 = vpop.f32.mrb[0].mxu0
    %v277 = vpop.f32.mrb[0].mxu0
    %278 = vdwg.mxu0
    %279 = vmatprep.subr.bf16.mxu0 %v205
    %280 = vmatpush1.bf16.msra.mxu0 %v204
    %281 = vmatprep.subr.bf16.mxu0 %v213
    %282 = vmatpush1.bf16.msra.mxu0 %v212
    %283 = vmatprep.subr.bf16.mxu0 0
    %284 = vmatpush1.bf16.msra.mxu0 0
    %285 = vmatprep.subr.bf16.mxu0 0
    %286 = vmatpush1.bf16.msra.mxu0 0
    %287 = vmatprep.subr.bf16.mxu0 0
    %288 = vmatpush1.bf16.msra.mxu0 0
    %289 = vmatprep.subr.bf16.mxu0 0
    %290 = vmatpush1.bf16.msra.mxu0 0
    %291 = vmatprep.subr.bf16.mxu0 0
    %292 = vmatpush1.bf16.msra.mxu0 0
    %293 = vmatprep.subr.bf16.mxu0 0
    %294 = vmatpush1.bf16.msra.mxu0 0
    %295 = vmatprep.subr.bf16.mxu0 0
    %296 = vmatpush1.bf16.msra.mxu0 0
    %297 = vmatprep.subr.bf16.mxu0 0
    %298 = vmatpush1.bf16.msra.mxu0 0
    %299 = vmatprep.subr.bf16.mxu0 0
    %300 = vmatpush1.bf16.msra.mxu0 0
    %301 = vmatprep.subr.bf16.mxu0 0
    %302 = vmatpush1.bf16.msra.mxu0 0
    %303 = vmatprep.subr.bf16.mxu0 0
    %304 = vmatpush1.bf16.msra.mxu0 0
    %305 = vmatprep.subr.bf16.mxu0 0
    %306 = vmatpush1.bf16.msra.mxu0 0
    %307 = vmatprep.subr.bf16.mxu0 0
    %308 = vmatpush1.bf16.msra.mxu0 0
    %309 = vmatprep.subr.bf16.mxu0 0
    %310 = vmatpush1.bf16.msra.mxu0 0
    %311 = vmatprep.mubr.bf16.mxu0 0
    %312 = vmatmul.mubr.bf16.gmra.mrb[0].mxu0 %v236
    %v313 = vpop.f32.mrb[0].mxu0
    %v314 = vadd.f32 %v125, %v313
    %v315 = vpop.f32.mrb[0].mxu0
    %v316 = vadd.f32 %v129, %v315
    %v317 = vpop.f32.mrb[0].mxu0
    %v318 = vpop.f32.mrb[0].mxu0
    %319 = vdwg.mxu0
    %320 = vmatprep.subr.bf16.mxu0 %v207
    %321 = vmatpush1.bf16.msra.mxu0 %v206
    %322 = vmatprep.subr.bf16.mxu0 %v215
    %323 = vmatpush1.bf16.msra.mxu0 %v214
    %324 = vmatprep.subr.bf16.mxu0 0
    %325 = vmatpush1.bf16.msra.mxu0 0
    %326 = vmatprep.subr.bf16.mxu0 0
    %327 = vmatpush1.bf16.msra.mxu0 0
    %328 = vmatprep.subr.bf16.mxu0 0
    %329 = vmatpush1.bf16.msra.mxu0 0
    %330 = vmatprep.subr.bf16.mxu0 0
    %331 = vmatpush1.bf16.msra.mxu0 0
    %332 = vmatprep.subr.bf16.mxu0 0
    %333 = vmatpush1.bf16.msra.mxu0 0
    %334 = vmatprep.subr.bf16.mxu0 0
    %335 = vmatpush1.bf16.msra.mxu0 0
    %336 = vmatprep.subr.bf16.mxu0 0
    %337 = vmatpush1.bf16.msra.mxu0 0
    %338 = vmatprep.subr.bf16.mxu0 0
    %339 = vmatpush1.bf16.msra.mxu0 0
    %340 = vmatprep.subr.bf16.mxu0 0
    %341 = vmatpush1.bf16.msra.mxu0 0
    %342 = vmatprep.subr.bf16.mxu0 0
    %343 = vmatpush1.bf16.msra.mxu0 0
    %344 = vmatprep.subr.bf16.mxu0 0
    %345 = vmatpush1.bf16.msra.mxu0 0
    %346 = vmatprep.subr.bf16.mxu0 0
    %347 = vmatpush1.bf16.msra.mxu0 0
    %348 = vmatprep.subr.bf16.mxu0 0
    %349 = vmatpush1.bf16.msra.mxu0 0
    %350 = vmatprep.subr.bf16.mxu0 0
    %351 = vmatpush1.bf16.msra.mxu0 0
    %352 = vmatprep.mubr.bf16.mxu0 0
    %353 = vmatmul.mubr.bf16.gmra.mrb[0].mxu0 %v236
    %v354 = vpop.f32.mrb[0].mxu0
    %v355 = vadd.f32 %v133, %v354
    %v356 = vpop.f32.mrb[0].mxu0
    %v357 = vadd.f32 %v137, %v356
    %v358 = vpop.f32.mrb[0].mxu0
    %v359 = vpop.f32.mrb[0].mxu0
    %360 = vdwg.mxu0
    %361 = vmatprep.subr.bf16.mxu0 %v209
    %362 = vmatpush1.bf16.msra.mxu0 %v208
    %363 = vmatprep.subr.bf16.mxu0 %v217
    %364 = vmatpush1.bf16.msra.mxu0 %v216
    %365 = vmatprep.subr.bf16.mxu0 0
    %366 = vmatpush1.bf16.msra.mxu0 0
    %367 = vmatprep.subr.bf16.mxu0 0
    %368 = vmatpush1.bf16.msra.mxu0 0
    %369 = vmatprep.subr.bf16.mxu0 0
    %370 = vmatpush1.bf16.msra.mxu0 0
    %371 = vmatprep.subr.bf16.mxu0 0
    %372 = vmatpush1.bf16.msra.mxu0 0
    %373 = vmatprep.subr.bf16.mxu0 0
    %374 = vmatpush1.bf16.msra.mxu0 0
    %375 = vmatprep.subr.bf16.mxu0 0
    %376 = vmatpush1.bf16.msra.mxu0 0
    %377 = vmatprep.subr.bf16.mxu0 0
    %378 = vmatpush1.bf16.msra.mxu0 0
    %379 = vmatprep.subr.bf16.mxu0 0
    %380 = vmatpush1.bf16.msra.mxu0 0
    %381 = vmatprep.subr.bf16.mxu0 0
    %382 = vmatpush1.bf16.msra.mxu0 0
    %383 = vmatprep.subr.bf16.mxu0 0
    %384 = vmatpush1.bf16.msra.mxu0 0
    %385 = vmatprep.subr.bf16.mxu0 0
    %386 = vmatpush1.bf16.msra.mxu0 0
    %387 = vmatprep.subr.bf16.mxu0 0
    %388 = vmatpush1.bf16.msra.mxu0 0
    %389 = vmatprep.subr.bf16.mxu0 0
    %390 = vmatpush1.bf16.msra.mxu0 0
    %391 = vmatprep.subr.bf16.mxu0 0
    %392 = vmatpush1.bf16.msra.mxu0 0
    %393 = vmatprep.mubr.bf16.mxu0 0
    %394 = vmatmul.mubr.bf16.gmra.mrb[0].mxu0 %v236
    %v395 = vpop.f32.mrb[0].mxu0
    %v396 = vadd.f32 %v141, %v395
    %v397 = vpop.f32.mrb[0].mxu0
    %v398 = vadd.f32 %v145, %v397
    %v399 = vpop.f32.mrb[0].mxu0
    %v400 = vpop.f32.mrb[0].mxu0
    %401 = vdwg.mxu0
    %v402 = vmax.f32 %v273, 0.0
    %v403 = vmax.f32 %v275, 0.0
    %v404 = vmax.f32 %v314, 0.0
    %v405 = vmax.f32 %v316, 0.0
    %v406 = vmax.f32 %v355, 0.0
    %v407 = vmax.f32 %v357, 0.0
    %v408 = vmax.f32 %v396, 0.0
    %v409 = vmax.f32 %v398, 0.0
    %v410 = vpack.c.bf16 %v402, %v402
    %v411 = vpack.c.bf16 %v403, %v403
    %v412 = vpack.c.bf16 %v404, %v404
    %v413 = vpack.c.bf16 %v405, %v405
    %v414 = vpack.c.bf16 %v406, %v406
    %v415 = vpack.c.bf16 %v407, %v407
    %v416 = vpack.c.bf16 %v408, %v408
    %v417 = vpack.c.bf16 %v409, %v409
    %v418 = vld [vmem:[#allocation5] sm:$0xff]
    %v419 = vld [vmem:[#allocation5 + $0x8] sm:$0xff]
    %v420 = vld [vmem:[#allocation5 + $0x10] sm:$0xff]
    %v421 = vld [vmem:[#allocation5 + $0x18] sm:$0xff]
    %v422 = vld [vmem:[#allocation5 + $0x20] sm:$0xff]
    %v423 = vld [vmem:[#allocation5 + $0x28] sm:$0xff]
    %v424 = vld [vmem:[#allocation5 + $0x30] sm:$0xff]
    %v425 = vld [vmem:[#allocation5 + $0x38] sm:$0xff]
    %v426 = vld [vmem:[#allocation5 + $0x40] sm:$0xff]
    %v427 = vld [vmem:[#allocation5 + $0x48] sm:$0xff]
    %v428 = vld [vmem:[#allocation5 + $0x50] sm:$0xff]
    %v429 = vld [vmem:[#allocation5 + $0x58] sm:$0xff]
    %v430 = vld [vmem:[#allocation5 + $0x60] sm:$0xff]
    %v431 = vld [vmem:[#allocation5 + $0x68] sm:$0xff]
    %v432 = vld [vmem:[#allocation5 + $0x70] sm:$0xff]
    %v433 = vld [vmem:[#allocation5 + $0x78] sm:$0xff]
    %v434 = vld [vmem:[#allocation5 + $0x80] sm:$0xff]
    %v435 = vld [vmem:[#allocation5 + $0x88] sm:$0xff]
    %v436 = vld [vmem:[#allocation5 + $0x90] sm:$0xff]
    %v437 = vld [vmem:[#allocation5 + $0x98] sm:$0xff]
    %v438 = vld [vmem:[#allocation5 + $0xa0] sm:$0xff]
    %v439 = vld [vmem:[#allocation5 + $0xa8] sm:$0xff]
    %v440 = vld [vmem:[#allocation5 + $0xb0] sm:$0xff]
    %v441 = vld [vmem:[#allocation5 + $0xb8] sm:$0xff]
    %v442 = vld [vmem:[#allocation5 + $0xc0] sm:$0xff]
    %v443 = vld [vmem:[#allocation5 + $0xc8] sm:$0xff]
    %v444 = vld [vmem:[#allocation5 + $0xd0] sm:$0xff]
    %v445 = vld [vmem:[#allocation5 + $0xd8] sm:$0xff]
    %v446 = vld [vmem:[#allocation5 + $0xe0] sm:$0xff]
    %v447 = vld [vmem:[#allocation5 + $0xe8] sm:$0xff]
    %v448 = vld [vmem:[#allocation5 + $0xf0] sm:$0xff]
    %v449 = vld [vmem:[#allocation5 + $0xf8] sm:$0xff]
    %v450 = vld [vmem:[#allocation5 + $0x100] sm:$0xff]
    %v451 = vld [vmem:[#allocation5 + $0x108] sm:$0xff]
    %v452 = vld [vmem:[#allocation5 + $0x110] sm:$0xff]
    %v453 = vld [vmem:[#allocation5 + $0x118] sm:$0xff]
    %v454 = vld [vmem:[#allocation5 + $0x120] sm:$0xff]
    %v455 = vld [vmem:[#allocation5 + $0x128] sm:$0xff]
    %v456 = vld [vmem:[#allocation5 + $0x130] sm:$0xff]
    %v457 = vld [vmem:[#allocation5 + $0x138] sm:$0xff]
    %v458 = vld [vmem:[#allocation5 + $0x140] sm:$0xff]
    %v459 = vld [vmem:[#allocation5 + $0x148] sm:$0xff]
    %v460 = vld [vmem:[#allocation5 + $0x150] sm:$0xff]
    %v461 = vld [vmem:[#allocation5 + $0x158] sm:$0xff]
    %v462 = vld [vmem:[#allocation5 + $0x160] sm:$0xff]
    %v463 = vld [vmem:[#allocation5 + $0x168] sm:$0xff]
    %v464 = vld [vmem:[#allocation5 + $0x170] sm:$0xff]
    %v465 = vld [vmem:[#allocation5 + $0x178] sm:$0xff]
    %v466 = vld [vmem:[#allocation5 + $0x180] sm:$0xff]
    %v467 = vld [vmem:[#allocation5 + $0x188] sm:$0xff]
    %v468 = vld [vmem:[#allocation5 + $0x190] sm:$0xff]
    %v469 = vld [vmem:[#allocation5 + $0x198] sm:$0xff]
    %v470 = vld [vmem:[#allocation5 + $0x1a0] sm:$0xff]
    %v471 = vld [vmem:[#allocation5 + $0x1a8] sm:$0xff]
    %v472 = vld [vmem:[#allocation5 + $0x1b0] sm:$0xff]
    %v473 = vld [vmem:[#allocation5 + $0x1b8] sm:$0xff]
    %v474 = vld [vmem:[#allocation5 + $0x1c0] sm:$0xff]
    %v475 = vld [vmem:[#allocation5 + $0x1c8] sm:$0xff]
    %v476 = vld [vmem:[#allocation5 + $0x1d0] sm:$0xff]
    %v477 = vld [vmem:[#allocation5 + $0x1d8] sm:$0xff]
    %v478 = vld [vmem:[#allocation5 + $0x1e0] sm:$0xff]
    %v479 = vld [vmem:[#allocation5 + $0x1e8] sm:$0xff]
    %v480 = vld [vmem:[#allocation5 + $0x1f0] sm:$0xff]
    %v481 = vld [vmem:[#allocation5 + $0x1f8] sm:$0xff]
    %v482 = vld [vmem:[#allocation5 + $0x200] sm:$0xff]
    %v483 = vld [vmem:[#allocation5 + $0x208] sm:$0xff]
    %v484 = vld [vmem:[#allocation5 + $0x210] sm:$0xff]
    %v485 = vld [vmem:[#allocation5 + $0x218] sm:$0xff]
    %v486 = vld [vmem:[#allocation5 + $0x220] sm:$0xff]
    %v487 = vld [vmem:[#allocation5 + $0x228] sm:$0xff]
    %v488 = vld [vmem:[#allocation5 + $0x230] sm:$0xff]
    %v489 = vld [vmem:[#allocation5 + $0x238] sm:$0xff]
    %v490 = vld [vmem:[#allocation5 + $0x240] sm:$0xff]
    %v491 = vld [vmem:[#allocation5 + $0x248] sm:$0xff]
    %v492 = vld [vmem:[#allocation5 + $0x250] sm:$0xff]
    %v493 = vld [vmem:[#allocation5 + $0x258] sm:$0xff]
    %v494 = vld [vmem:[#allocation5 + $0x260] sm:$0xff]
    %v495 = vld [vmem:[#allocation5 + $0x268] sm:$0xff]
    %v496 = vld [vmem:[#allocation5 + $0x270] sm:$0xff]
    %v497 = vld [vmem:[#allocation5 + $0x278] sm:$0xff]
    %v498 = vld [vmem:[#allocation5 + $0x280] sm:$0xff]
    %v499 = vld [vmem:[#allocation5 + $0x288] sm:$0xff]
    %v500 = vld [vmem:[#allocation5 + $0x290] sm:$0xff]
    %v501 = vld [vmem:[#allocation5 + $0x298] sm:$0xff]
    %v502 = vld [vmem:[#allocation5 + $0x2a0] sm:$0xff]
    %v503 = vld [vmem:[#allocation5 + $0x2a8] sm:$0xff]
    %v504 = vld [vmem:[#allocation5 + $0x2b0] sm:$0xff]
    %v505 = vld [vmem:[#allocation5 + $0x2b8] sm:$0xff]
    %v506 = vld [vmem:[#allocation5 + $0x2c0] sm:$0xff]
    %v507 = vld [vmem:[#allocation5 + $0x2c8] sm:$0xff]
    %v508 = vld [vmem:[#allocation5 + $0x2d0] sm:$0xff]
    %v509 = vld [vmem:[#allocation5 + $0x2d8] sm:$0xff]
    %v510 = vld [vmem:[#allocation5 + $0x2e0] sm:$0xff]
    %v511 = vld [vmem:[#allocation5 + $0x2e8] sm:$0xff]
    %v512 = vld [vmem:[#allocation5 + $0x2f0] sm:$0xff]
    %v513 = vld [vmem:[#allocation5 + $0x2f8] sm:$0xff]
    %v514 = vld [vmem:[#allocation5 + $0x300] sm:$0xff]
    %v515 = vld [vmem:[#allocation5 + $0x308] sm:$0xff]
    %v516 = vld [vmem:[#allocation5 + $0x310] sm:$0xff]
    %v517 = vld [vmem:[#allocation5 + $0x318] sm:$0xff]
    %v518 = vld [vmem:[#allocation5 + $0x320] sm:$0xff]
    %v519 = vld [vmem:[#allocation5 + $0x328] sm:$0xff]
    %v520 = vld [vmem:[#allocation5 + $0x330] sm:$0xff]
    %v521 = vld [vmem:[#allocation5 + $0x338] sm:$0xff]
    %v522 = vld [vmem:[#allocation5 + $0x340] sm:$0xff]
    %v523 = vld [vmem:[#allocation5 + $0x348] sm:$0xff]
    %v524 = vld [vmem:[#allocation5 + $0x350] sm:$0xff]
    %v525 = vld [vmem:[#allocation5 + $0x358] sm:$0xff]
    %v526 = vld [vmem:[#allocation5 + $0x360] sm:$0xff]
    %v527 = vld [vmem:[#allocation5 + $0x368] sm:$0xff]
    %v528 = vld [vmem:[#allocation5 + $0x370] sm:$0xff]
    %v529 = vld [vmem:[#allocation5 + $0x378] sm:$0xff]
    %v530 = vld [vmem:[#allocation5 + $0x380] sm:$0xff]
    %v531 = vld [vmem:[#allocation5 + $0x388] sm:$0xff]
    %v532 = vld [vmem:[#allocation5 + $0x390] sm:$0xff]
    %v533 = vld [vmem:[#allocation5 + $0x398] sm:$0xff]
    %v534 = vld [vmem:[#allocation5 + $0x3a0] sm:$0xff]
    %v535 = vld [vmem:[#allocation5 + $0x3a8] sm:$0xff]
    %v536 = vld [vmem:[#allocation5 + $0x3b0] sm:$0xff]
    %v537 = vld [vmem:[#allocation5 + $0x3b8] sm:$0xff]
    %v538 = vld [vmem:[#allocation5 + $0x3c0] sm:$0xff]
    %v539 = vld [vmem:[#allocation5 + $0x3c8] sm:$0xff]
    %v540 = vld [vmem:[#allocation5 + $0x3d0] sm:$0xff]
    %v541 = vld [vmem:[#allocation5 + $0x3d8] sm:$0xff]
    %v542 = vld [vmem:[#allocation5 + $0x3e0] sm:$0xff]
    %v543 = vld [vmem:[#allocation5 + $0x3e8] sm:$0xff]
    %v544 = vld [vmem:[#allocation5 + $0x3f0] sm:$0xff]
    %v545 = vld [vmem:[#allocation5 + $0x3f8] sm:$0xff]
    %v546 = vld [vmem:[%s4] sm:$0x3]
    %v548 = vlaneseq
    %v549 = vshrl.u32 %v548, 7
    %v550 = vsub.s32 0, %v549
    %v551 = vrot.slane %v546, %v550
    %v552 = vlaneseq
    %v553 = vshrl.u32 %v552, 7
    %v554 = vsub.s32 1, %v553
    %v555 = vrot.slane %v546, %v554
    %v686 = vunpack.c.l.b16 %v418
    %v687 = vunpack.c.h.b16 %v418
    %v688 = vunpack.c.l.b16 %v419
    %v689 = vunpack.c.h.b16 %v419
    %v690 = vunpack.c.l.b16 %v420
    %v691 = vunpack.c.h.b16 %v420
    %v692 = vunpack.c.l.b16 %v421
    %v693 = vunpack.c.h.b16 %v421
    %v694 = vunpack.c.l.b16 %v422
    %v695 = vunpack.c.h.b16 %v422
    %v696 = vunpack.c.l.b16 %v423
    %v697 = vunpack.c.h.b16 %v423
    %v698 = vunpack.c.l.b16 %v424
    %v699 = vunpack.c.h.b16 %v424
    %v700 = vunpack.c.l.b16 %v425
    %v701 = vunpack.c.h.b16 %v425
    %v702 = vunpack.c.l.b16 %v426
    %v703 = vunpack.c.h.b16 %v426
    %v704 = vunpack.c.l.b16 %v427
    %v705 = vunpack.c.h.b16 %v427
    %v706 = vunpack.c.l.b16 %v428
    %v707 = vunpack.c.h.b16 %v428
    %v708 = vunpack.c.l.b16 %v429
    %v709 = vunpack.c.h.b16 %v429
    %v710 = vunpack.c.l.b16 %v430
    %v711 = vunpack.c.h.b16 %v430
    %v712 = vunpack.c.l.b16 %v431
    %v713 = vunpack.c.h.b16 %v431
    %v714 = vunpack.c.l.b16 %v432
    %v715 = vunpack.c.h.b16 %v432
    %v716 = vunpack.c.l.b16 %v433
    %v717 = vunpack.c.h.b16 %v433
    %v718 = vunpack.c.l.b16 %v434
    %v719 = vunpack.c.h.b16 %v434
    %v720 = vunpack.c.l.b16 %v435
    %v721 = vunpack.c.h.b16 %v435
    %v722 = vunpack.c.l.b16 %v436
    %v723 = vunpack.c.h.b16 %v436
    %v724 = vunpack.c.l.b16 %v437
    %v725 = vunpack.c.h.b16 %v437
    %v726 = vunpack.c.l.b16 %v438
    %v727 = vunpack.c.h.b16 %v438
    %v728 = vunpack.c.l.b16 %v439
    %v729 = vunpack.c.h.b16 %v439
    %v730 = vunpack.c.l.b16 %v440
    %v731 = vunpack.c.h.b16 %v440
    %v732 = vunpack.c.l.b16 %v441
    %v733 = vunpack.c.h.b16 %v441
    %v734 = vunpack.c.l.b16 %v442
    %v735 = vunpack.c.h.b16 %v442
    %v736 = vunpack.c.l.b16 %v443
    %v737 = vunpack.c.h.b16 %v443
    %v738 = vunpack.c.l.b16 %v444
    %v739 = vunpack.c.h.b16 %v444
    %v740 = vunpack.c.l.b16 %v445
    %v741 = vunpack.c.h.b16 %v445
    %v742 = vunpack.c.l.b16 %v446
    %v743 = vunpack.c.h.b16 %v446
    %v744 = vunpack.c.l.b16 %v447
    %v745 = vunpack.c.h.b16 %v447
    %v746 = vunpack.c.l.b16 %v448
    %v747 = vunpack.c.h.b16 %v448
    %v748 = vunpack.c.l.b16 %v449
    %v749 = vunpack.c.h.b16 %v449
    %v750 = vunpack.c.l.b16 %v450
    %v751 = vunpack.c.h.b16 %v450
    %v752 = vunpack.c.l.b16 %v451
    %v753 = vunpack.c.h.b16 %v451
    %v754 = vunpack.c.l.b16 %v452
    %v755 = vunpack.c.h.b16 %v452
    %v756 = vunpack.c.l.b16 %v453
    %v757 = vunpack.c.h.b16 %v453
    %v758 = vunpack.c.l.b16 %v454
    %v759 = vunpack.c.h.b16 %v454
    %v760 = vunpack.c.l.b16 %v455
    %v761 = vunpack.c.h.b16 %v455
    %v762 = vunpack.c.l.b16 %v456
    %v763 = vunpack.c.h.b16 %v456
    %v764 = vunpack.c.l.b16 %v457
    %v765 = vunpack.c.h.b16 %v457
    %v766 = vunpack.c.l.b16 %v458
    %v767 = vunpack.c.h.b16 %v458
    %v768 = vunpack.c.l.b16 %v459
    %v769 = vunpack.c.h.b16 %v459
    %v770 = vunpack.c.l.b16 %v460
    %v771 = vunpack.c.h.b16 %v460
    %v772 = vunpack.c.l.b16 %v461
    %v773 = vunpack.c.h.b16 %v461
    %v774 = vunpack.c.l.b16 %v462
    %v775 = vunpack.c.h.b16 %v462
    %v776 = vunpack.c.l.b16 %v463
    %v777 = vunpack.c.h.b16 %v463
    %v778 = vunpack.c.l.b16 %v464
    %v779 = vunpack.c.h.b16 %v464
    %v780 = vunpack.c.l.b16 %v465
    %v781 = vunpack.c.h.b16 %v465
    %v782 = vunpack.c.l.b16 %v466
    %v783 = vunpack.c.h.b16 %v466
    %v784 = vunpack.c.l.b16 %v467
    %v785 = vunpack.c.h.b16 %v467
    %v786 = vunpack.c.l.b16 %v468
    %v787 = vunpack.c.h.b16 %v468
    %v788 = vunpack.c.l.b16 %v469
    %v789 = vunpack.c.h.b16 %v469
    %v790 = vunpack.c.l.b16 %v470
    %v791 = vunpack.c.h.b16 %v470
    %v792 = vunpack.c.l.b16 %v471
    %v793 = vunpack.c.h.b16 %v471
    %v794 = vunpack.c.l.b16 %v472
    %v795 = vunpack.c.h.b16 %v472
    %v796 = vunpack.c.l.b16 %v473
    %v797 = vunpack.c.h.b16 %v473
    %v798 = vunpack.c.l.b16 %v474
    %v799 = vunpack.c.h.b16 %v474
    %v800 = vunpack.c.l.b16 %v475
    %v801 = vunpack.c.h.b16 %v475
    %v802 = vunpack.c.l.b16 %v476
    %v803 = vunpack.c.h.b16 %v476
    %v804 = vunpack.c.l.b16 %v477
    %v805 = vunpack.c.h.b16 %v477
    %v806 = vunpack.c.l.b16 %v478
    %v807 = vunpack.c.h.b16 %v478
    %v808 = vunpack.c.l.b16 %v479
    %v809 = vunpack.c.h.b16 %v479
    %v810 = vunpack.c.l.b16 %v480
    %v811 = vunpack.c.h.b16 %v480
    %v812 = vunpack.c.l.b16 %v481
    %v813 = vunpack.c.h.b16 %v481
    %v814 = vunpack.c.l.b16 %v482
    %v815 = vunpack.c.h.b16 %v482
    %v816 = vunpack.c.l.b16 %v483
    %v817 = vunpack.c.h.b16 %v483
    %v818 = vunpack.c.l.b16 %v484
    %v819 = vunpack.c.h.b16 %v484
    %v820 = vunpack.c.l.b16 %v485
    %v821 = vunpack.c.h.b16 %v485
    %v822 = vunpack.c.l.b16 %v486
    %v823 = vunpack.c.h.b16 %v486
    %v824 = vunpack.c.l.b16 %v487
    %v825 = vunpack.c.h.b16 %v487
    %v826 = vunpack.c.l.b16 %v488
    %v827 = vunpack.c.h.b16 %v488
    %v828 = vunpack.c.l.b16 %v489
    %v829 = vunpack.c.h.b16 %v489
    %v830 = vunpack.c.l.b16 %v490
    %v831 = vunpack.c.h.b16 %v490
    %v832 = vunpack.c.l.b16 %v491
    %v833 = vunpack.c.h.b16 %v491
    %v834 = vunpack.c.l.b16 %v492
    %v835 = vunpack.c.h.b16 %v492
    %v836 = vunpack.c.l.b16 %v493
    %v837 = vunpack.c.h.b16 %v493
    %v838 = vunpack.c.l.b16 %v494
    %v839 = vunpack.c.h.b16 %v494
    %v840 = vunpack.c.l.b16 %v495
    %v841 = vunpack.c.h.b16 %v495
    %v842 = vunpack.c.l.b16 %v496
    %v843 = vunpack.c.h.b16 %v496
    %v844 = vunpack.c.l.b16 %v497
    %v845 = vunpack.c.h.b16 %v497
    %v846 = vunpack.c.l.b16 %v498
    %v847 = vunpack.c.h.b16 %v498
    %v848 = vunpack.c.l.b16 %v499
    %v849 = vunpack.c.h.b16 %v499
    %v850 = vunpack.c.l.b16 %v500
    %v851 = vunpack.c.h.b16 %v500
    %v852 = vunpack.c.l.b16 %v501
    %v853 = vunpack.c.h.b16 %v501
    %v854 = vunpack.c.l.b16 %v502
    %v855 = vunpack.c.h.b16 %v502
    %v856 = vunpack.c.l.b16 %v503
    %v857 = vunpack.c.h.b16 %v503
    %v858 = vunpack.c.l.b16 %v504
    %v859 = vunpack.c.h.b16 %v504
    %v860 = vunpack.c.l.b16 %v505
    %v861 = vunpack.c.h.b16 %v505
    %v862 = vunpack.c.l.b16 %v506
    %v863 = vunpack.c.h.b16 %v506
    %v864 = vunpack.c.l.b16 %v507
    %v865 = vunpack.c.h.b16 %v507
    %v866 = vunpack.c.l.b16 %v508
    %v867 = vunpack.c.h.b16 %v508
    %v868 = vunpack.c.l.b16 %v509
    %v869 = vunpack.c.h.b16 %v509
    %v870 = vunpack.c.l.b16 %v510
    %v871 = vunpack.c.h.b16 %v510
    %v872 = vunpack.c.l.b16 %v511
    %v873 = vunpack.c.h.b16 %v511
    %v874 = vunpack.c.l.b16 %v512
    %v875 = vunpack.c.h.b16 %v512
    %v876 = vunpack.c.l.b16 %v513
    %v877 = vunpack.c.h.b16 %v513
    %v878 = vunpack.c.l.b16 %v514
    %v879 = vunpack.c.h.b16 %v514
    %v880 = vunpack.c.l.b16 %v515
    %v881 = vunpack.c.h.b16 %v515
    %v882 = vunpack.c.l.b16 %v516
    %v883 = vunpack.c.h.b16 %v516
    %v884 = vunpack.c.l.b16 %v517
    %v885 = vunpack.c.h.b16 %v517
    %v886 = vunpack.c.l.b16 %v518
    %v887 = vunpack.c.h.b16 %v518
    %v888 = vunpack.c.l.b16 %v519
    %v889 = vunpack.c.h.b16 %v519
    %v890 = vunpack.c.l.b16 %v520
    %v891 = vunpack.c.h.b16 %v520
    %v892 = vunpack.c.l.b16 %v521
    %v893 = vunpack.c.h.b16 %v521
    %v894 = vunpack.c.l.b16 %v522
    %v895 = vunpack.c.h.b16 %v522
    %v896 = vunpack.c.l.b16 %v523
    %v897 = vunpack.c.h.b16 %v523
    %v898 = vunpack.c.l.b16 %v524
    %v899 = vunpack.c.h.b16 %v524
    %v900 = vunpack.c.l.b16 %v525
    %v901 = vunpack.c.h.b16 %v525
    %v902 = vunpack.c.l.b16 %v526
    %v903 = vunpack.c.h.b16 %v526
    %v904 = vunpack.c.l.b16 %v527
    %v905 = vunpack.c.h.b16 %v527
    %v906 = vunpack.c.l.b16 %v528
    %v907 = vunpack.c.h.b16 %v528
    %v908 = vunpack.c.l.b16 %v529
    %v909 = vunpack.c.h.b16 %v529
    %v910 = vunpack.c.l.b16 %v530
    %v911 = vunpack.c.h.b16 %v530
    %v912 = vunpack.c.l.b16 %v531
    %v913 = vunpack.c.h.b16 %v531
    %v914 = vunpack.c.l.b16 %v532
    %v915 = vunpack.c.h.b16 %v532
    %v916 = vunpack.c.l.b16 %v533
    %v917 = vunpack.c.h.b16 %v533
    %v918 = vunpack.c.l.b16 %v534
    %v919 = vunpack.c.h.b16 %v534
    %v920 = vunpack.c.l.b16 %v535
    %v921 = vunpack.c.h.b16 %v535
    %v922 = vunpack.c.l.b16 %v536
    %v923 = vunpack.c.h.b16 %v536
    %v924 = vunpack.c.l.b16 %v537
    %v925 = vunpack.c.h.b16 %v537
    %v926 = vunpack.c.l.b16 %v538
    %v927 = vunpack.c.h.b16 %v538
    %v928 = vunpack.c.l.b16 %v539
    %v929 = vunpack.c.h.b16 %v539
    %v930 = vunpack.c.l.b16 %v540
    %v931 = vunpack.c.h.b16 %v540
    %v932 = vunpack.c.l.b16 %v541
    %v933 = vunpack.c.h.b16 %v541
    %v934 = vunpack.c.l.b16 %v542
    %v935 = vunpack.c.h.b16 %v542
    %v936 = vunpack.c.l.b16 %v543
    %v937 = vunpack.c.h.b16 %v543
    %v938 = vunpack.c.l.b16 %v544
    %v939 = vunpack.c.h.b16 %v544
    %v940 = vunpack.c.l.b16 %v545
    %v941 = vunpack.c.h.b16 %v545
    %v942 = vpack.c.b16 %v688, %v686
    %v943 = vpack.c.b16 %v689, %v687
    %v944 = vpack.c.b16 %v692, %v690
    %v945 = vpack.c.b16 %v693, %v691
    %v946 = vpack.c.b16 %v696, %v694
    %v947 = vpack.c.b16 %v697, %v695
    %v948 = vpack.c.b16 %v700, %v698
    %v949 = vpack.c.b16 %v701, %v699
    %v950 = vpack.c.b16 %v704, %v702
    %v951 = vpack.c.b16 %v705, %v703
    %v952 = vpack.c.b16 %v708, %v706
    %v953 = vpack.c.b16 %v709, %v707
    %v954 = vpack.c.b16 %v712, %v710
    %v955 = vpack.c.b16 %v713, %v711
    %v956 = vpack.c.b16 %v716, %v714
    %v957 = vpack.c.b16 %v717, %v715
    %v958 = vpack.c.b16 %v720, %v718
    %v959 = vpack.c.b16 %v721, %v719
    %v960 = vpack.c.b16 %v724, %v722
    %v961 = vpack.c.b16 %v725, %v723
    %v962 = vpack.c.b16 %v728, %v726
    %v963 = vpack.c.b16 %v729, %v727
    %v964 = vpack.c.b16 %v732, %v730
    %v965 = vpack.c.b16 %v733, %v731
    %v966 = vpack.c.b16 %v736, %v734
    %v967 = vpack.c.b16 %v737, %v735
    %v968 = vpack.c.b16 %v740, %v738
    %v969 = vpack.c.b16 %v741, %v739
    %v970 = vpack.c.b16 %v744, %v742
    %v971 = vpack.c.b16 %v745, %v743
    %v972 = vpack.c.b16 %v748, %v746
    %v973 = vpack.c.b16 %v749, %v747
    %v974 = vpack.c.b16 %v752, %v750
    %v975 = vpack.c.b16 %v753, %v751
    %v976 = vpack.c.b16 %v756, %v754
    %v977 = vpack.c.b16 %v757, %v755
    %v978 = vpack.c.b16 %v760, %v758
    %v979 = vpack.c.b16 %v761, %v759
    %v980 = vpack.c.b16 %v764, %v762
    %v981 = vpack.c.b16 %v765, %v763
    %v982 = vpack.c.b16 %v768, %v766
    %v983 = vpack.c.b16 %v769, %v767
    %v984 = vpack.c.b16 %v772, %v770
    %v985 = vpack.c.b16 %v773, %v771
    %v986 = vpack.c.b16 %v776, %v774
    %v987 = vpack.c.b16 %v777, %v775
    %v988 = vpack.c.b16 %v780, %v778
    %v989 = vpack.c.b16 %v781, %v779
    %v990 = vpack.c.b16 %v784, %v782
    %v991 = vpack.c.b16 %v785, %v783
    %v992 = vpack.c.b16 %v788, %v786
    %v993 = vpack.c.b16 %v789, %v787
    %v994 = vpack.c.b16 %v792, %v790
    %v995 = vpack.c.b16 %v793, %v791
    %v996 = vpack.c.b16 %v796, %v794
    %v997 = vpack.c.b16 %v797, %v795
    %v998 = vpack.c.b16 %v800, %v798
    %v999 = vpack.c.b16 %v801, %v799
    %v1000 = vpack.c.b16 %v804, %v802
    %v1001 = vpack.c.b16 %v805, %v803
    %v1002 = vpack.c.b16 %v808, %v806
    %v1003 = vpack.c.b16 %v809, %v807
    %v1004 = vpack.c.b16 %v812, %v810
    %v1005 = vpack.c.b16 %v813, %v811
    %v1006 = vpack.c.b16 %v816, %v814
    %v1007 = vpack.c.b16 %v817, %v815
    %v1008 = vpack.c.b16 %v820, %v818
    %v1009 = vpack.c.b16 %v821, %v819
    %v1010 = vpack.c.b16 %v824, %v822
    %v1011 = vpack.c.b16 %v825, %v823
    %v1012 = vpack.c.b16 %v828, %v826
    %v1013 = vpack.c.b16 %v829, %v827
    %v1014 = vpack.c.b16 %v832, %v830
    %v1015 = vpack.c.b16 %v833, %v831
    %v1016 = vpack.c.b16 %v836, %v834
    %v1017 = vpack.c.b16 %v837, %v835
    %v1018 = vpack.c.b16 %v840, %v838
    %v1019 = vpack.c.b16 %v841, %v839
    %v1020 = vpack.c.b16 %v844, %v842
    %v1021 = vpack.c.b16 %v845, %v843
    %v1022 = vpack.c.b16 %v848, %v846
    %v1023 = vpack.c.b16 %v849, %v847
    %v1024 = vpack.c.b16 %v852, %v850
    %v1025 = vpack.c.b16 %v853, %v851
    %v1026 = vpack.c.b16 %v856, %v854
    %v1027 = vpack.c.b16 %v857, %v855
    %v1028 = vpack.c.b16 %v860, %v858
    %v1029 = vpack.c.b16 %v861, %v859
    %v1030 = vpack.c.b16 %v864, %v862
    %v1031 = vpack.c.b16 %v865, %v863
    %v1032 = vpack.c.b16 %v868, %v866
    %v1033 = vpack.c.b16 %v869, %v867
    %v1034 = vpack.c.b16 %v872, %v870
    %v1035 = vpack.c.b16 %v873, %v871
    %v1036 = vpack.c.b16 %v876, %v874
    %v1037 = vpack.c.b16 %v877, %v875
    %v1038 = vpack.c.b16 %v880, %v878
    %v1039 = vpack.c.b16 %v881, %v879
    %v1040 = vpack.c.b16 %v884, %v882
    %v1041 = vpack.c.b16 %v885, %v883
    %v1042 = vpack.c.b16 %v888, %v886
    %v1043 = vpack.c.b16 %v889, %v887
    %v1044 = vpack.c.b16 %v892, %v890
    %v1045 = vpack.c.b16 %v893, %v891
    %v1046 = vpack.c.b16 %v896, %v894
    %v1047 = vpack.c.b16 %v897, %v895
    %v1048 = vpack.c.b16 %v900, %v898
    %v1049 = vpack.c.b16 %v901, %v899
    %v1050 = vpack.c.b16 %v904, %v902
    %v1051 = vpack.c.b16 %v905, %v903
    %v1052 = vpack.c.b16 %v908, %v906
    %v1053 = vpack.c.b16 %v909, %v907
    %v1054 = vpack.c.b16 %v912, %v910
    %v1055 = vpack.c.b16 %v913, %v911
    %v1056 = vpack.c.b16 %v916, %v914
    %v1057 = vpack.c.b16 %v917, %v915
    %v1058 = vpack.c.b16 %v920, %v918
    %v1059 = vpack.c.b16 %v921, %v919
    %v1060 = vpack.c.b16 %v924, %v922
    %v1061 = vpack.c.b16 %v925, %v923
    %v1062 = vpack.c.b16 %v928, %v926
    %v1063 = vpack.c.b16 %v929, %v927
    %v1064 = vpack.c.b16 %v932, %v930
    %v1065 = vpack.c.b16 %v933, %v931
    %v1066 = vpack.c.b16 %v936, %v934
    %v1067 = vpack.c.b16 %v937, %v935
    %v1068 = vpack.c.b16 %v940, %v938
    %v1069 = vpack.c.b16 %v941, %v939
    %1198 = vmatprep.subr.bf16.mxu0 %v943
    %1199 = vmatpush1.bf16.msra.mxu0 %v942
    %1200 = vmatprep.subr.bf16.mxu0 %v945
    %1201 = vmatpush1.bf16.msra.mxu0 %v944
    %1202 = vmatprep.subr.bf16.mxu0 %v947
    %1203 = vmatpush1.bf16.msra.mxu0 %v946
    %1204 = vmatprep.subr.bf16.mxu0 %v949
    %1205 = vmatpush1.bf16.msra.mxu0 %v948
    %1206 = vmatprep.subr.bf16.mxu0 %v951
    %1207 = vmatpush1.bf16.msra.mxu0 %v950
    %1208 = vmatprep.subr.bf16.mxu0 %v953
    %1209 = vmatpush1.bf16.msra.mxu0 %v952
    %1210 = vmatprep.subr.bf16.mxu0 %v955
    %1211 = vmatpush1.bf16.msra.mxu0 %v954
    %1212 = vmatprep.subr.bf16.mxu0 %v957
    %1213 = vmatpush1.bf16.msra.mxu0 %v956
    %1214 = vmatprep.subr.bf16.mxu0 %v959
    %1215 = vmatpush1.bf16.msra.mxu0 %v958
    %1216 = vmatprep.subr.bf16.mxu0 %v961
    %1217 = vmatpush1.bf16.msra.mxu0 %v960
    %1218 = vmatprep.subr.bf16.mxu0 %v963
    %1219 = vmatpush1.bf16.msra.mxu0 %v962
    %1220 = vmatprep.subr.bf16.mxu0 %v965
    %1221 = vmatpush1.bf16.msra.mxu0 %v964
    %1222 = vmatprep.subr.bf16.mxu0 %v967
    %1223 = vmatpush1.bf16.msra.mxu0 %v966
    %1224 = vmatprep.subr.bf16.mxu0 %v969
    %1225 = vmatpush1.bf16.msra.mxu0 %v968
    %1226 = vmatprep.subr.bf16.mxu0 %v971
    %1227 = vmatpush1.bf16.msra.mxu0 %v970
    %1228 = vmatprep.subr.bf16.mxu0 %v973
    %1229 = vmatpush1.bf16.msra.mxu0 %v972
    %1230 = vmatprep.mubr.bf16.mxu0 %v411
    %1231 = vmatmul.mubr.bf16.gmra.mrb[0].mxu0 %v410
    %v1232 = vpop.f32.mrb[0].mxu0
    %v1233 = vadd.f32 %v551, %v1232
    %v1234 = vpop.f32.mrb[0].mxu0
    %v1235 = vadd.f32 %v555, %v1234
    %v1236 = vpop.f32.mrb[0].mxu0
    %v1237 = vpop.f32.mrb[0].mxu0
    %1238 = vdwg.mxu0
    %1239 = vmatprep.subr.bf16.mxu0 %v975
    %1240 = vmatpush1.bf16.msra.mxu0 %v974
    %1241 = vmatprep.subr.bf16.mxu0 %v977
    %1242 = vmatpush1.bf16.msra.mxu0 %v976
    %1243 = vmatprep.subr.bf16.mxu0 %v979
    %1244 = vmatpush1.bf16.msra.mxu0 %v978
    %1245 = vmatprep.subr.bf16.mxu0 %v981
    %1246 = vmatpush1.bf16.msra.mxu0 %v980
    %1247 = vmatprep.subr.bf16.mxu0 %v983
    %1248 = vmatpush1.bf16.msra.mxu0 %v982
    %1249 = vmatprep.subr.bf16.mxu0 %v985
    %1250 = vmatpush1.bf16.msra.mxu0 %v984
    %1251 = vmatprep.subr.bf16.mxu0 %v987
    %1252 = vmatpush1.bf16.msra.mxu0 %v986
    %1253 = vmatprep.subr.bf16.mxu0 %v989
    %1254 = vmatpush1.bf16.msra.mxu0 %v988
    %1255 = vmatprep.subr.bf16.mxu0 %v991
    %1256 = vmatpush1.bf16.msra.mxu0 %v990
    %1257 = vmatprep.subr.bf16.mxu0 %v993
    %1258 = vmatpush1.bf16.msra.mxu0 %v992
    %1259 = vmatprep.subr.bf16.mxu0 %v995
    %1260 = vmatpush1.bf16.msra.mxu0 %v994
    %1261 = vmatprep.subr.bf16.mxu0 %v997
    %1262 = vmatpush1.bf16.msra.mxu0 %v996
    %1263 = vmatprep.subr.bf16.mxu0 %v999
    %1264 = vmatpush1.bf16.msra.mxu0 %v998
    %1265 = vmatprep.subr.bf16.mxu0 %v1001
    %1266 = vmatpush1.bf16.msra.mxu0 %v1000
    %1267 = vmatprep.subr.bf16.mxu0 %v1003
    %1268 = vmatpush1.bf16.msra.mxu0 %v1002
    %1269 = vmatprep.subr.bf16.mxu0 %v1005
    %1270 = vmatpush1.bf16.msra.mxu0 %v1004
    %1271 = vmatprep.mubr.bf16.mxu0 %v413
    %1272 = vmatmul.mubr.bf16.gmra.mrb[0].mxu0 %v412
    %v1273 = vpop.f32.mrb[0].mxu0
    %v1274 = vadd.f32 %v1233, %v1273
    %v1275 = vpop.f32.mrb[0].mxu0
    %v1276 = vadd.f32 %v1235, %v1275
    %v1277 = vpop.f32.mrb[0].mxu0
    %v1278 = vpop.f32.mrb[0].mxu0
    %1279 = vdwg.mxu0
    %1280 = vmatprep.subr.bf16.mxu0 %v1007
    %1281 = vmatpush1.bf16.msra.mxu0 %v1006
    %1282 = vmatprep.subr.bf16.mxu0 %v1009
    %1283 = vmatpush1.bf16.msra.mxu0 %v1008
    %1284 = vmatprep.subr.bf16.mxu0 %v1011
    %1285 = vmatpush1.bf16.msra.mxu0 %v1010
    %1286 = vmatprep.subr.bf16.mxu0 %v1013
    %1287 = vmatpush1.bf16.msra.mxu0 %v1012
    %1288 = vmatprep.subr.bf16.mxu0 %v1015
    %1289 = vmatpush1.bf16.msra.mxu0 %v1014
    %1290 = vmatprep.subr.bf16.mxu0 %v1017
    %1291 = vmatpush1.bf16.msra.mxu0 %v1016
    %1292 = vmatprep.subr.bf16.mxu0 %v1019
    %1293 = vmatpush1.bf16.msra.mxu0 %v1018
    %1294 = vmatprep.subr.bf16.mxu0 %v1021
    %1295 = vmatpush1.bf16.msra.mxu0 %v1020
    %1296 = vmatprep.subr.bf16.mxu0 %v1023
    %1297 = vmatpush1.bf16.msra.mxu0 %v1022
    %1298 = vmatprep.subr.bf16.mxu0 %v1025
    %1299 = vmatpush1.bf16.msra.mxu0 %v1024
    %1300 = vmatprep.subr.bf16.mxu0 %v1027
    %1301 = vmatpush1.bf16.msra.mxu0 %v1026
    %1302 = vmatprep.subr.bf16.mxu0 %v1029
    %1303 = vmatpush1.bf16.msra.mxu0 %v1028
    %1304 = vmatprep.subr.bf16.mxu0 %v1031
    %1305 = vmatpush1.bf16.msra.mxu0 %v1030
    %1306 = vmatprep.subr.bf16.mxu0 %v1033
    %1307 = vmatpush1.bf16.msra.mxu0 %v1032
    %1308 = vmatprep.subr.bf16.mxu0 %v1035
    %1309 = vmatpush1.bf16.msra.mxu0 %v1034
    %1310 = vmatprep.subr.bf16.mxu0 %v1037
    %1311 = vmatpush1.bf16.msra.mxu0 %v1036
    %1312 = vmatprep.mubr.bf16.mxu0 %v415
    %1313 = vmatmul.mubr.bf16.gmra.mrb[0].mxu0 %v414
    %v1314 = vpop.f32.mrb[0].mxu0
    %v1315 = vadd.f32 %v1274, %v1314
    %v1316 = vpop.f32.mrb[0].mxu0
    %v1317 = vadd.f32 %v1276, %v1316
    %v1318 = vpop.f32.mrb[0].mxu0
    %v1319 = vpop.f32.mrb[0].mxu0
    %1320 = vdwg.mxu0
    %1321 = vmatprep.subr.bf16.mxu0 %v1039
    %1322 = vmatpush1.bf16.msra.mxu0 %v1038
    %1323 = vmatprep.subr.bf16.mxu0 %v1041
    %1324 = vmatpush1.bf16.msra.mxu0 %v1040
    %1325 = vmatprep.subr.bf16.mxu0 %v1043
    %1326 = vmatpush1.bf16.msra.mxu0 %v1042
    %1327 = vmatprep.subr.bf16.mxu0 %v1045
    %1328 = vmatpush1.bf16.msra.mxu0 %v1044
    %1329 = vmatprep.subr.bf16.mxu0 %v1047
    %1330 = vmatpush1.bf16.msra.mxu0 %v1046
    %1331 = vmatprep.subr.bf16.mxu0 %v1049
    %1332 = vmatpush1.bf16.msra.mxu0 %v1048
    %1333 = vmatprep.subr.bf16.mxu0 %v1051
    %1334 = vmatpush1.bf16.msra.mxu0 %v1050
    %1335 = vmatprep.subr.bf16.mxu0 %v1053
    %1336 = vmatpush1.bf16.msra.mxu0 %v1052
    %1337 = vmatprep.subr.bf16.mxu0 %v1055
    %1338 = vmatpush1.bf16.msra.mxu0 %v1054
    %1339 = vmatprep.subr.bf16.mxu0 %v1057
    %1340 = vmatpush1.bf16.msra.mxu0 %v1056
    %1341 = vmatprep.subr.bf16.mxu0 %v1059
    %1342 = vmatpush1.bf16.msra.mxu0 %v1058
    %1343 = vmatprep.subr.bf16.mxu0 %v1061
    %1344 = vmatpush1.bf16.msra.mxu0 %v1060
    %1345 = vmatprep.subr.bf16.mxu0 %v1063
    %1346 = vmatpush1.bf16.msra.mxu0 %v1062
    %1347 = vmatprep.subr.bf16.mxu0 %v1065
    %1348 = vmatpush1.bf16.msra.mxu0 %v1064
    %1349 = vmatprep.subr.bf16.mxu0 %v1067
    %1350 = vmatpush1.bf16.msra.mxu0 %v1066
    %1351 = vmatprep.subr.bf16.mxu0 %v1069
    %1352 = vmatpush1.bf16.msra.mxu0 %v1068
    %1353 = vmatprep.mubr.bf16.mxu0 %v417
    %1354 = vmatmul.mubr.bf16.gmra.mrb[0].mxu0 %v416
    %v1355 = vpop.f32.mrb[0].mxu0
    %v1356 = vadd.f32 %v1315, %v1355
    %v1357 = vpop.f32.mrb[0].mxu0
    %v1358 = vadd.f32 %v1317, %v1357
    %v1359 = vpop.f32.mrb[0].mxu0
    %v1360 = vpop.f32.mrb[0].mxu0
    %1361 = vdwg.mxu0
    %v1362 = vmax.f32 %v1356, 0.0
    %v1363 = vmax.f32 %v1358, 0.0
    %v1364 = vpack.c.bf16 %v1362, %v1362
    %v1365 = vpack.c.bf16 %v1363, %v1363
    %v1366 = vld [vmem:[#allocation7] sm:$0xff]
    %v1367 = vld [vmem:[#allocation7 + $0x8] sm:$0xff]
    %v1368 = vld [vmem:[#allocation7 + $0x10] sm:$0xff]
    %v1369 = vld [vmem:[#allocation7 + $0x18] sm:$0xff]
    %v1370 = vld [vmem:[#allocation7 + $0x20] sm:$0xff]
    %v1371 = vld [vmem:[#allocation7 + $0x28] sm:$0xff]
    %v1372 = vld [vmem:[#allocation7 + $0x30] sm:$0xff]
    %v1373 = vld [vmem:[#allocation7 + $0x38] sm:$0xff]
    %v1374 = vld [vmem:[#allocation7 + $0x40] sm:$0xff]
    %v1375 = vld [vmem:[#allocation7 + $0x48] sm:$0xff]
    %v1376 = vld [vmem:[#allocation7 + $0x50] sm:$0xff]
    %v1377 = vld [vmem:[#allocation7 + $0x58] sm:$0xff]
    %v1378 = vld [vmem:[#allocation7 + $0x60] sm:$0xff]
    %v1379 = vld [vmem:[#allocation7 + $0x68] sm:$0xff]
    %v1380 = vld [vmem:[#allocation7 + $0x70] sm:$0xff]
    %v1381 = vld [vmem:[#allocation7 + $0x78] sm:$0xff]
    %v1382 = vld [vmem:[#allocation7 + $0x80] sm:$0xff]
    %v1383 = vld [vmem:[#allocation7 + $0x88] sm:$0xff]
    %v1384 = vld [vmem:[#allocation7 + $0x90] sm:$0xff]
    %v1385 = vld [vmem:[#allocation7 + $0x98] sm:$0xff]
    %v1386 = vld [vmem:[#allocation7 + $0xa0] sm:$0xff]
    %v1387 = vld [vmem:[#allocation7 + $0xa8] sm:$0xff]
    %v1388 = vld [vmem:[#allocation7 + $0xb0] sm:$0xff]
    %v1389 = vld [vmem:[#allocation7 + $0xb8] sm:$0xff]
    %v1390 = vld [vmem:[#allocation7 + $0xc0] sm:$0xff]
    %v1391 = vld [vmem:[#allocation7 + $0xc8] sm:$0xff]
    %v1392 = vld [vmem:[#allocation7 + $0xd0] sm:$0xff]
    %v1393 = vld [vmem:[#allocation7 + $0xd8] sm:$0xff]
    %v1394 = vld [vmem:[#allocation7 + $0xe0] sm:$0xff]
    %v1395 = vld [vmem:[#allocation7 + $0xe8] sm:$0xff]
    %v1396 = vld [vmem:[#allocation7 + $0xf0] sm:$0xff]
    %v1397 = vld [vmem:[#allocation7 + $0xf8] sm:$0xff]
    %v1398 = vld [vmem:[%s6] sm:$0x3]
    %v1400 = vlaneseq
    %v1401 = vshrl.u32 %v1400, 7
    %v1402 = vsub.s32 0, %v1401
    %v1403 = vrot.slane %v1398, %v1402
    %v1404 = vlaneseq
    %v1405 = vshrl.u32 %v1404, 7
    %v1406 = vsub.s32 1, %v1405
    %v1407 = vrot.slane %v1398, %v1406
    %v1442 = vunpack.c.l.b16 %v1366
    %v1443 = vunpack.c.h.b16 %v1366
    %v1444 = vunpack.c.l.b16 %v1367
    %v1445 = vunpack.c.h.b16 %v1367
    %v1446 = vunpack.c.l.b16 %v1368
    %v1447 = vunpack.c.h.b16 %v1368
    %v1448 = vunpack.c.l.b16 %v1369
    %v1449 = vunpack.c.h.b16 %v1369
    %v1450 = vunpack.c.l.b16 %v1370
    %v1451 = vunpack.c.h.b16 %v1370
    %v1452 = vunpack.c.l.b16 %v1371
    %v1453 = vunpack.c.h.b16 %v1371
    %v1454 = vunpack.c.l.b16 %v1372
    %v1455 = vunpack.c.h.b16 %v1372
    %v1456 = vunpack.c.l.b16 %v1373
    %v1457 = vunpack.c.h.b16 %v1373
    %v1458 = vunpack.c.l.b16 %v1374
    %v1459 = vunpack.c.h.b16 %v1374
    %v1460 = vunpack.c.l.b16 %v1375
    %v1461 = vunpack.c.h.b16 %v1375
    %v1462 = vunpack.c.l.b16 %v1376
    %v1463 = vunpack.c.h.b16 %v1376
    %v1464 = vunpack.c.l.b16 %v1377
    %v1465 = vunpack.c.h.b16 %v1377
    %v1466 = vunpack.c.l.b16 %v1378
    %v1467 = vunpack.c.h.b16 %v1378
    %v1468 = vunpack.c.l.b16 %v1379
    %v1469 = vunpack.c.h.b16 %v1379
    %v1470 = vunpack.c.l.b16 %v1380
    %v1471 = vunpack.c.h.b16 %v1380
    %v1472 = vunpack.c.l.b16 %v1381
    %v1473 = vunpack.c.h.b16 %v1381
    %v1474 = vunpack.c.l.b16 %v1382
    %v1475 = vunpack.c.h.b16 %v1382
    %v1476 = vunpack.c.l.b16 %v1383
    %v1477 = vunpack.c.h.b16 %v1383
    %v1478 = vunpack.c.l.b16 %v1384
    %v1479 = vunpack.c.h.b16 %v1384
    %v1480 = vunpack.c.l.b16 %v1385
    %v1481 = vunpack.c.h.b16 %v1385
    %v1482 = vunpack.c.l.b16 %v1386
    %v1483 = vunpack.c.h.b16 %v1386
    %v1484 = vunpack.c.l.b16 %v1387
    %v1485 = vunpack.c.h.b16 %v1387
    %v1486 = vunpack.c.l.b16 %v1388
    %v1487 = vunpack.c.h.b16 %v1388
    %v1488 = vunpack.c.l.b16 %v1389
    %v1489 = vunpack.c.h.b16 %v1389
    %v1490 = vunpack.c.l.b16 %v1390
    %v1491 = vunpack.c.h.b16 %v1390
    %v1492 = vunpack.c.l.b16 %v1391
    %v1493 = vunpack.c.h.b16 %v1391
    %v1494 = vunpack.c.l.b16 %v1392
    %v1495 = vunpack.c.h.b16 %v1392
    %v1496 = vunpack.c.l.b16 %v1393
    %v1497 = vunpack.c.h.b16 %v1393
    %v1498 = vunpack.c.l.b16 %v1394
    %v1499 = vunpack.c.h.b16 %v1394
    %v1500 = vunpack.c.l.b16 %v1395
    %v1501 = vunpack.c.h.b16 %v1395
    %v1502 = vunpack.c.l.b16 %v1396
    %v1503 = vunpack.c.h.b16 %v1396
    %v1504 = vunpack.c.l.b16 %v1397
    %v1505 = vunpack.c.h.b16 %v1397
    %v1506 = vpack.c.b16 %v1444, %v1442
    %v1507 = vpack.c.b16 %v1445, %v1443
    %v1508 = vpack.c.b16 %v1448, %v1446
    %v1509 = vpack.c.b16 %v1449, %v1447
    %v1510 = vpack.c.b16 %v1452, %v1450
    %v1511 = vpack.c.b16 %v1453, %v1451
    %v1512 = vpack.c.b16 %v1456, %v1454
    %v1513 = vpack.c.b16 %v1457, %v1455
    %v1514 = vpack.c.b16 %v1460, %v1458
    %v1515 = vpack.c.b16 %v1461, %v1459
    %v1516 = vpack.c.b16 %v1464, %v1462
    %v1517 = vpack.c.b16 %v1465, %v1463
    %v1518 = vpack.c.b16 %v1468, %v1466
    %v1519 = vpack.c.b16 %v1469, %v1467
    %v1520 = vpack.c.b16 %v1472, %v1470
    %v1521 = vpack.c.b16 %v1473, %v1471
    %v1522 = vpack.c.b16 %v1476, %v1474
    %v1523 = vpack.c.b16 %v1477, %v1475
    %v1524 = vpack.c.b16 %v1480, %v1478
    %v1525 = vpack.c.b16 %v1481, %v1479
    %v1526 = vpack.c.b16 %v1484, %v1482
    %v1527 = vpack.c.b16 %v1485, %v1483
    %v1528 = vpack.c.b16 %v1488, %v1486
    %v1529 = vpack.c.b16 %v1489, %v1487
    %v1530 = vpack.c.b16 %v1492, %v1490
    %v1531 = vpack.c.b16 %v1493, %v1491
    %v1532 = vpack.c.b16 %v1496, %v1494
    %v1533 = vpack.c.b16 %v1497, %v1495
    %v1534 = vpack.c.b16 %v1500, %v1498
    %v1535 = vpack.c.b16 %v1501, %v1499
    %v1536 = vpack.c.b16 %v1504, %v1502
    %v1537 = vpack.c.b16 %v1505, %v1503
    %1570 = vmatprep.subr.bf16.mxu0 %v1507
    %1571 = vmatpush1.bf16.msra.mxu0 %v1506
    %1572 = vmatprep.subr.bf16.mxu0 %v1509
    %1573 = vmatpush1.bf16.msra.mxu0 %v1508
    %1574 = vmatprep.subr.bf16.mxu0 %v1511
    %1575 = vmatpush1.bf16.msra.mxu0 %v1510
    %1576 = vmatprep.subr.bf16.mxu0 %v1513
    %1577 = vmatpush1.bf16.msra.mxu0 %v1512
    %1578 = vmatprep.subr.bf16.mxu0 %v1515
    %1579 = vmatpush1.bf16.msra.mxu0 %v1514
    %1580 = vmatprep.subr.bf16.mxu0 %v1517
    %1581 = vmatpush1.bf16.msra.mxu0 %v1516
    %1582 = vmatprep.subr.bf16.mxu0 %v1519
    %1583 = vmatpush1.bf16.msra.mxu0 %v1518
    %1584 = vmatprep.subr.bf16.mxu0 %v1521
    %1585 = vmatpush1.bf16.msra.mxu0 %v1520
    %1586 = vmatprep.subr.bf16.mxu0 %v1523
    %1587 = vmatpush1.bf16.msra.mxu0 %v1522
    %1588 = vmatprep.subr.bf16.mxu0 %v1525
    %1589 = vmatpush1.bf16.msra.mxu0 %v1524
    %1590 = vmatprep.subr.bf16.mxu0 %v1527
    %1591 = vmatpush1.bf16.msra.mxu0 %v1526
    %1592 = vmatprep.subr.bf16.mxu0 %v1529
    %1593 = vmatpush1.bf16.msra.mxu0 %v1528
    %1594 = vmatprep.subr.bf16.mxu0 %v1531
    %1595 = vmatpush1.bf16.msra.mxu0 %v1530
    %1596 = vmatprep.subr.bf16.mxu0 %v1533
    %1597 = vmatpush1.bf16.msra.mxu0 %v1532
    %1598 = vmatprep.subr.bf16.mxu0 %v1535
    %1599 = vmatpush1.bf16.msra.mxu0 %v1534
    %1600 = vmatprep.subr.bf16.mxu0 %v1537
    %1601 = vmatpush1.bf16.msra.mxu0 %v1536
    %1602 = vmatprep.mubr.bf16.mxu0 %v1365
    %1603 = vmatmul.mubr.bf16.gmra.mrb[0].mxu0 %v1364
    %v1604 = vpop.f32.mrb[0].mxu0
    %v1605 = vadd.f32 %v1403, %v1604
    %v1606 = vpop.f32.mrb[0].mxu0
    %v1607 = vadd.f32 %v1407, %v1606
    %v1608 = vpop.f32.mrb[0].mxu0
    %v1609 = vpop.f32.mrb[0].mxu0
    %1610 = vdwg.mxu0
    %v1611 = vmax.f32 %v1605, 0.0
    %v1612 = vmax.f32 %v1607, 0.0
    %v1613 = vpack.c.bf16 %v1611, %v1611
    %v1614 = vpack.c.bf16 %v1612, %v1612
    %v1615 = vld [vmem:[#allocation8] sm:$0xf]
    %v1616 = vld [vmem:[#allocation8 + $0x4] sm:$0xf]
    %v1617 = vld [vmem:[#allocation8 + $0x8] sm:$0xf]
    %v1618 = vld [vmem:[#allocation8 + $0xc] sm:$0xf]
    %v1619 = vld [vmem:[#allocation8 + $0x10] sm:$0xf]
    %v1620 = vld [vmem:[#allocation8 + $0x14] sm:$0xf]
    %v1621 = vld [vmem:[#allocation8 + $0x18] sm:$0xf]
    %v1622 = vld [vmem:[#allocation8 + $0x1c] sm:$0xf]
    %v1623 = vld [vmem:[#allocation8 + $0x20] sm:$0xf]
    %v1624 = vld [vmem:[#allocation8 + $0x24] sm:$0xf]
    %v1625 = vld [vmem:[#allocation8 + $0x28] sm:$0xf]
    %v1626 = vld [vmem:[#allocation8 + $0x2c] sm:$0xf]
    %v1627 = vld [vmem:[#allocation8 + $0x30] sm:$0xf]
    %v1628 = vld [vmem:[#allocation8 + $0x34] sm:$0xf]
    %v1629 = vld [vmem:[#allocation8 + $0x38] sm:$0xf]
    %v1630 = vld [vmem:[#allocation8 + $0x3c] sm:$0xf]
    %v1631 = vld [vmem:[#allocation8 + $0x40] sm:$0xf]
    %v1632 = vld [vmem:[#allocation8 + $0x44] sm:$0xf]
    %v1633 = vld [vmem:[#allocation8 + $0x48] sm:$0xf]
    %v1634 = vld [vmem:[#allocation8 + $0x4c] sm:$0xf]
    %v1635 = vld [vmem:[#allocation8 + $0x50] sm:$0xf]
    %v1636 = vld [vmem:[#allocation8 + $0x54] sm:$0xf]
    %v1637 = vld [vmem:[#allocation8 + $0x58] sm:$0xf]
    %v1638 = vld [vmem:[#allocation8 + $0x5c] sm:$0xf]
    %v1639 = vld [vmem:[#allocation8 + $0x60] sm:$0xf]
    %v1640 = vld [vmem:[#allocation8 + $0x64] sm:$0xf]
    %v1641 = vld [vmem:[#allocation8 + $0x68] sm:$0xf]
    %v1642 = vld [vmem:[#allocation8 + $0x6c] sm:$0xf]
    %v1643 = vld [vmem:[#allocation8 + $0x70] sm:$0xf]
    %v1644 = vld [vmem:[#allocation8 + $0x74] sm:$0xf]
    %v1645 = vld [vmem:[#allocation8 + $0x78] sm:$0xf]
    %v1646 = vld [vmem:[#allocation8 + $0x7c] sm:$0xf]
    %v1647 = vld [vmem:[%s8] sm:$0x1]
    %v1649 = vlaneseq
    %v1650 = vshrl.u32 %v1649, 7
    %v1651 = vsub.s32 0, %v1650
    %v1652 = vrot.slane %v1647, %v1651
    %v1686 = vunpack.c.l.b16 %v1615
    %v1687 = vunpack.c.l.b16 %v1616
    %v1688 = vunpack.c.l.b16 %v1617
    %v1689 = vunpack.c.l.b16 %v1618
    %v1690 = vunpack.c.l.b16 %v1619
    %v1691 = vunpack.c.l.b16 %v1620
    %v1692 = vunpack.c.l.b16 %v1621
    %v1693 = vunpack.c.l.b16 %v1622
    %v1694 = vunpack.c.l.b16 %v1623
    %v1695 = vunpack.c.l.b16 %v1624
    %v1696 = vunpack.c.l.b16 %v1625
    %v1697 = vunpack.c.l.b16 %v1626
    %v1698 = vunpack.c.l.b16 %v1627
    %v1699 = vunpack.c.l.b16 %v1628
    %v1700 = vunpack.c.l.b16 %v1629
    %v1701 = vunpack.c.l.b16 %v1630
    %v1702 = vunpack.c.l.b16 %v1631
    %v1703 = vunpack.c.l.b16 %v1632
    %v1704 = vunpack.c.l.b16 %v1633
    %v1705 = vunpack.c.l.b16 %v1634
    %v1706 = vunpack.c.l.b16 %v1635
    %v1707 = vunpack.c.l.b16 %v1636
    %v1708 = vunpack.c.l.b16 %v1637
    %v1709 = vunpack.c.l.b16 %v1638
    %v1710 = vunpack.c.l.b16 %v1639
    %v1711 = vunpack.c.l.b16 %v1640
    %v1712 = vunpack.c.l.b16 %v1641
    %v1713 = vunpack.c.l.b16 %v1642
    %v1714 = vunpack.c.l.b16 %v1643
    %v1715 = vunpack.c.l.b16 %v1644
    %v1716 = vunpack.c.l.b16 %v1645
    %v1717 = vunpack.c.l.b16 %v1646
    %v1718 = vpack.c.b16 %v1687, %v1686
    %v1719 = vpack.c.b16 %v1689, %v1688
    %v1720 = vpack.c.b16 %v1691, %v1690
    %v1721 = vpack.c.b16 %v1693, %v1692
    %v1722 = vpack.c.b16 %v1695, %v1694
    %v1723 = vpack.c.b16 %v1697, %v1696
    %v1724 = vpack.c.b16 %v1699, %v1698
    %v1725 = vpack.c.b16 %v1701, %v1700
    %v1726 = vpack.c.b16 %v1703, %v1702
    %v1727 = vpack.c.b16 %v1705, %v1704
    %v1728 = vpack.c.b16 %v1707, %v1706
    %v1729 = vpack.c.b16 %v1709, %v1708
    %v1730 = vpack.c.b16 %v1711, %v1710
    %v1731 = vpack.c.b16 %v1713, %v1712
    %v1732 = vpack.c.b16 %v1715, %v1714
    %v1733 = vpack.c.b16 %v1717, %v1716
    %1750 = vmatprep.subr.bf16.mxu0 0
    %1751 = vmatpush1.bf16.msra.mxu0 %v1718
    %1752 = vmatprep.subr.bf16.mxu0 0
    %1753 = vmatpush1.bf16.msra.mxu0 %v1719
    %1754 = vmatprep.subr.bf16.mxu0 0
    %1755 = vmatpush1.bf16.msra.mxu0 %v1720
    %1756 = vmatprep.subr.bf16.mxu0 0
    %1757 = vmatpush1.bf16.msra.mxu0 %v1721
    %1758 = vmatprep.subr.bf16.mxu0 0
    %1759 = vmatpush1.bf16.msra.mxu0 %v1722
    %1760 = vmatprep.subr.bf16.mxu0 0
    %1761 = vmatpush1.bf16.msra.mxu0 %v1723
    %1762 = vmatprep.subr.bf16.mxu0 0
    %1763 = vmatpush1.bf16.msra.mxu0 %v1724
    %1764 = vmatprep.subr.bf16.mxu0 0
    %1765 = vmatpush1.bf16.msra.mxu0 %v1725
    %1766 = vmatprep.subr.bf16.mxu0 0
    %1767 = vmatpush1.bf16.msra.mxu0 %v1726
    %1768 = vmatprep.subr.bf16.mxu0 0
    %1769 = vmatpush1.bf16.msra.mxu0 %v1727
    %1770 = vmatprep.subr.bf16.mxu0 0
    %1771 = vmatpush1.bf16.msra.mxu0 %v1728
    %1772 = vmatprep.subr.bf16.mxu0 0
    %1773 = vmatpush1.bf16.msra.mxu0 %v1729
    %1774 = vmatprep.subr.bf16.mxu0 0
    %1775 = vmatpush1.bf16.msra.mxu0 %v1730
    %1776 = vmatprep.subr.bf16.mxu0 0
    %1777 = vmatpush1.bf16.msra.mxu0 %v1731
    %1778 = vmatprep.subr.bf16.mxu0 0
    %1779 = vmatpush1.bf16.msra.mxu0 %v1732
    %1780 = vmatprep.subr.bf16.mxu0 0
    %1781 = vmatpush1.bf16.msra.mxu0 %v1733
    %1782 = vmatprep.mubr.bf16.mxu0 %v1614
    %1783 = vmatmul.mubr.bf16.gmra.mrb[0].mxu0 %v1613
    %v1784 = vpop.f32.mrb[0].mxu0
    %v1785 = vadd.f32 %v1652, %v1784
    %v1786 = vpop.f32.mrb[0].mxu0
    %v1787 = vpop.f32.mrb[0].mxu0
    %v1788 = vpop.f32.mrb[0].mxu0
    %1789 = vdwg.mxu0
    %v1790 = vmax.f32 %v1785, 0.0
    %v1791 = vpack.c.bf16 %v1790, %v1790
    %v1792 = vld [vmem:[%s9] sm:$0xf]
    %v1793 = vld [vmem:[%s9 + $0x4] sm:$0xf]
    %v1794 = vld [vmem:[%s9 + $0x8] sm:$0xf]
    %v1795 = vld [vmem:[%s9 + $0xc] sm:$0xf]
    %v1796 = vld [vmem:[%s9 + $0x10] sm:$0xf]
    %v1797 = vld [vmem:[%s9 + $0x14] sm:$0xf]
    %v1798 = vld [vmem:[%s9 + $0x18] sm:$0xf]
    %v1799 = vld [vmem:[%s9 + $0x1c] sm:$0xf]
    %v1800 = vld [vmem:[%s9 + $0x20] sm:$0xf]
    %v1801 = vld [vmem:[%s9 + $0x24] sm:$0xf]
    %v1802 = vld [vmem:[%s9 + $0x28] sm:$0xf]
    %v1803 = vld [vmem:[%s9 + $0x2c] sm:$0xf]
    %v1804 = vld [vmem:[%s9 + $0x30] sm:$0xf]
    %v1805 = vld [vmem:[%s9 + $0x34] sm:$0xf]
    %v1806 = vld [vmem:[%s9 + $0x38] sm:$0xf]
    %v1807 = vld [vmem:[%s9 + $0x3c] sm:$0xf]
    %v1808 = vld [vmem:[%s10] sm:$0x1]
    %v1810 = vlaneseq
    %v1811 = vshrl.u32 %v1810, 7
    %v1812 = vsub.s32 0, %v1811
    %v1813 = vrot.slane %v1808, %v1812
    %v1831 = vunpack.c.l.b16 %v1792
    %v1832 = vunpack.c.l.b16 %v1793
    %v1833 = vunpack.c.l.b16 %v1794
    %v1834 = vunpack.c.l.b16 %v1795
    %v1835 = vunpack.c.l.b16 %v1796
    %v1836 = vunpack.c.l.b16 %v1797
    %v1837 = vunpack.c.l.b16 %v1798
    %v1838 = vunpack.c.l.b16 %v1799
    %v1839 = vunpack.c.l.b16 %v1800
    %v1840 = vunpack.c.l.b16 %v1801
    %v1841 = vunpack.c.l.b16 %v1802
    %v1842 = vunpack.c.l.b16 %v1803
    %v1843 = vunpack.c.l.b16 %v1804
    %v1844 = vunpack.c.l.b16 %v1805
    %v1845 = vunpack.c.l.b16 %v1806
    %v1846 = vunpack.c.l.b16 %v1807
    %v1847 = vpack.c.b16 %v1832, %v1831
    %v1848 = vpack.c.b16 %v1834, %v1833
    %v1849 = vpack.c.b16 %v1836, %v1835
    %v1850 = vpack.c.b16 %v1838, %v1837
    %v1851 = vpack.c.b16 %v1840, %v1839
    %v1852 = vpack.c.b16 %v1842, %v1841
    %v1853 = vpack.c.b16 %v1844, %v1843
    %v1854 = vpack.c.b16 %v1846, %v1845
    %1863 = vmatprep.subr.bf16.mxu0 0
    %1864 = vmatpush1.bf16.msra.mxu0 %v1847
    %1865 = vmatprep.subr.bf16.mxu0 0
    %1866 = vmatpush1.bf16.msra.mxu0 %v1848
    %1867 = vmatprep.subr.bf16.mxu0 0
    %1868 = vmatpush1.bf16.msra.mxu0 %v1849
    %1869 = vmatprep.subr.bf16.mxu0 0
    %1870 = vmatpush1.bf16.msra.mxu0 %v1850
    %1871 = vmatprep.subr.bf16.mxu0 0
    %1872 = vmatpush1.bf16.msra.mxu0 %v1851
    %1873 = vmatprep.subr.bf16.mxu0 0
    %1874 = vmatpush1.bf16.msra.mxu0 %v1852
    %1875 = vmatprep.subr.bf16.mxu0 0
    %1876 = vmatpush1.bf16.msra.mxu0 %v1853
    %1877 = vmatprep.subr.bf16.mxu0 0
    %1878 = vmatpush1.bf16.msra.mxu0 %v1854
    %1879 = vmatprep.subr.bf16.mxu0 0
    %1880 = vmatpush1.bf16.msra.mxu0 0
    %1881 = vmatprep.subr.bf16.mxu0 0
    %1882 = vmatpush1.bf16.msra.mxu0 0
    %1883 = vmatprep.subr.bf16.mxu0 0
    %1884 = vmatpush1.bf16.msra.mxu0 0
    %1885 = vmatprep.subr.bf16.mxu0 0
    %1886 = vmatpush1.bf16.msra.mxu0 0
    %1887 = vmatprep.subr.bf16.mxu0 0
    %1888 = vmatpush1.bf16.msra.mxu0 0
    %1889 = vmatprep.subr.bf16.mxu0 0
    %1890 = vmatpush1.bf16.msra.mxu0 0
    %1891 = vmatprep.subr.bf16.mxu0 0
    %1892 = vmatpush1.bf16.msra.mxu0 0
    %1893 = vmatprep.subr.bf16.mxu0 0
    %1894 = vmatpush1.bf16.msra.mxu0 0
    %1895 = vmatprep.mubr.bf16.mxu0 0
    %1896 = vmatmul.mubr.bf16.gmra.mrb[0].mxu0 %v1791
    %v1897 = vpop.f32.mrb[0].mxu0
    %v1898 = vadd.f32 %v1813, %v1897
    %v1899 = vpop.f32.mrb[0].mxu0
    %v1900 = vpop.f32.mrb[0].mxu0
    %v1901 = vpop.f32.mrb[0].mxu0
    %1902 = vdwg.mxu0
    %vm1903 = vcmask 130048
    %1904 = vst.msk [vmem:[#allocation10] sm:$0xff] %vm1903, %v1898
    // Predicated region
    $region62: #{tpu_custom_call.1} parent=1 // pred_check
      _
    $region63: #{tpu_custom_call.1} parent=1 // pred_check_branch
      %1906 = sbr.rel (0) target = $region65
    $region64: #{tpu_custom_call.1} parent=1 // pred_region
      %s1908 = ssub.s32 128, 128
      %1909 = vsyncadd [#allocation4], %s1908
      %s1911 = sshll.u32 [#allocation10], 4
      %s1912 = int_to_ptr.vmem [resolvable:$true] %s1911
      %1914 = dma.vmem_to_hbm [thread:$0]  %s1912, 128, %s11, [#allocation4]
    $region65: #{tpu_custom_call.1} parent=1 // pred_fallthru
      _
    // Predicated region
    $region66: #{tpu_custom_call.1} parent=1 // pred_check
      _
    $region67: #{tpu_custom_call.1} parent=1 // pred_check_branch
      %1916 = sbr.rel (0) target = $region69
    $region68: #{tpu_custom_call.1} parent=1 // pred_region
      %1917 = dma.done [#allocation4], 128
    $region69: #{tpu_custom_call.1} parent=1 // pred_fallthru
      _
    %1918 = vsyncpa [#allocation3], 1
    %1919 = vsyncpa [#allocation6], 1
    %1920 = vsyncpa [#allocation9], 1
    %1921 = vsyncpa [#allocation4], 1

</llo_original>
